<compile_context>
chip_gen: v5e
topology: v5e:2x2
jax: 0.10.0
libtpu: 0.0.40
codegen_flags: <defaults>
</compile_context>

<pallas_src>
import math

import jax
import jax.numpy as jnp
from jax import lax
from jax.experimental import pallas as pl
from jax.experimental.pallas import tpu as pltpu

# ---- module hyper-parameters (nn defaults) ----------------------------------
D_INNER = 32                         # d_inner
D_STATE = 16                         # d_state
DT_RANK = math.ceil(D_INNER / 16)    # 'auto' -> 2


# --------------------------- Pallas kernel -----------------------------------
def _ssm_scan_kernel(x_ref, wx_ref, bx_ref, wdt_ref, bdt_ref, a_ref, d_ref,
                     y_ref, hid_ref):
    """Full selective scan in one invocation.

    x_ref   : (S*B, D) time-major flattened input (row t*B + b)
    a_ref   : (D, N)   A = -exp(A_log)   (constant in forward)
    y_ref   : (B, D)   y of the LAST timestep (what SSM.forward returns)
    hid_ref : (S, B, D*N) per-step hidden states, lane-dense
    """
    S, Bb, DN = hid_ref.shape
    SB, D = x_ref.shape
    N = DN // D
    R = wdt_ref.shape[0]

    x2 = x_ref[...]                                              # (S*B, D)
    A = a_ref[...]                                               # (D, N)

    # ---- hoisted projections: one batched matmul each for ALL timesteps -----
    xp = jnp.dot(x2, wx_ref[...],
                 preferred_element_type=jnp.float32) + bx_ref[...]   # (S*B, R+2N)
    Bm = xp[:, :N]                                               # (S*B, N)
    dt_low = xp[:, N:N + R]                                      # (S*B, R)
    Cm = xp[:, N + R:]                                           # (S*B, N)
    dt = jnp.dot(dt_low, wdt_ref[...],
                 preferred_element_type=jnp.float32) + bdt_ref[...]  # (S*B, D)

    # ---- precompute per-step elementwise operands, lane-dense (S*B, D*N) ----
    # dA[t,b,d,n] = dt[t,b,d] * A[d,n]
    dA = (dt[:, :, None] * A[None, :, :]).reshape(SB, DN)
    # x * dB = x[t,b,d] * dt[t,b,d] * B[t,b,n]  ->  (x*dt) (x) B
    inj = ((dt * x2)[:, :, None] * Bm[:, None, :]).reshape(SB, DN)

    # ---- serial recurrence: pure VPU elementwise on a (B, D*N) state --------
    hidden = jnp.zeros((Bb, DN), jnp.float32)
    for t in range(S):                       # S is small & static -> unrolled
        lo = t * Bb
        hidden = hidden * dA[lo:lo + Bb, :] + inj[lo:lo + Bb, :]
        # torch's mask/detach step is a numerical no-op in the forward pass.
        hidden = jnp.clip(hidden, -1.0e6, 1.0e6)
        hid_ref[t] = hidden                  # unmasked lane-dense (B, 512) store

    # ---- y of the LAST timestep only (SSM.forward returns only that y) ------
    lo = (S - 1) * Bb
    c_last = Cm[lo:lo + Bb, :]               # (B, N)
    x_last = x2[lo:lo + Bb, :]               # (B, D)
    y = jnp.sum(hidden.reshape(Bb, D, N) * c_last[:, None, :], axis=-1) \
        + d_ref[...] * x_last
    y_ref[...] = y


# --------------------------- jit-compiled wrapper -----------------------------
@jax.jit
def ssm_forward(x, params):
    """x: (B, S, d_inner) float32 -> (y_last (B, D), hidden_previos (B, S, D, N))."""
    Bb, S, D = x.shape
    N = params["A"].shape[1]
    # time-major flatten in glue (cheap XLA transpose; rows are t*B + b)
    x_flat = jnp.transpose(x, (1, 0, 2)).reshape(S * Bb, D)

    vmem = pl.BlockSpec(memory_space=pltpu.MemorySpace.VMEM)
    y, hid = pl.pallas_call(
        _ssm_scan_kernel,
        out_shape=(jax.ShapeDtypeStruct((Bb, D), jnp.float32),
                   jax.ShapeDtypeStruct((S, Bb, D * N), jnp.float32)),
        in_specs=[vmem] * 7,
        out_specs=(vmem, vmem),
    )(x_flat, params["wx"], params["bx"], params["wdt"], params["bdt"],
      params["A"], params["D"])

    hidden_previos = hid.reshape(S, Bb, D, N).transpose(1, 0, 2, 3)
    return y, hidden_previos


# --------------------------- parameters (torch-style init) -------------------
def _linear_init(key, fan_in, fan_out):
    bound = 1.0 / math.sqrt(fan_in)
    kw, kb = jax.random.split(key)
    w = jax.random.uniform(kw, (fan_in, fan_out), jnp.float32, -bound, bound)
    b = jax.random.uniform(kb, (1, fan_out), jnp.float32, -bound, bound)
    return w, b


def init_params(key):
    k_x, k_dt = jax.random.split(key)
    wx, bx = _linear_init(k_x, D_INNER, DT_RANK + 2 * D_STATE)     # x_proj
    wdt, bdt = _linear_init(k_dt, DT_RANK, D_INNER)                # dt_proj
    a_log = jnp.log(jnp.broadcast_to(
        jnp.arange(1, D_STATE + 1, dtype=jnp.float32), (D_INNER, D_STATE)))
    A = -jnp.exp(a_log)              # constant in forward; folded outside kernel
    Dp = jnp.ones((1, D_INNER), jnp.float32)
    return dict(wx=wx, bx=bx, wdt=wdt, bdt=bdt, A=A, D=Dp)


# --------------------------- pure-JAX reference ------------------------------
def ssm_reference(x, p):
    Bb, S, D = x.shape
    N, R = D_STATE, DT_RANK
    hp = lax.Precision.HIGHEST
    hidden = jnp.zeros((Bb, D, N), jnp.float32)
    hid_all = []
    y = jnp.zeros((Bb, D), jnp.float32)
    for i in range(S):
        xt = x[:, i, :]
        xp = jnp.dot(xt, p["wx"], precision=hp) + p["bx"]
        Bm = xp[:, :N]
        dtl = xp[:, N:N + R]
        Cm = xp[:, N + R:]
        dt = jnp.dot(dtl, p["wdt"], precision=hp) + p["bdt"]
        dA = dt[:, :, None] * p["A"][None, :, :]
        dB = dt[:, :, None] * Bm[:, None, :]
        hidden = hidden * dA + xt[:, :, None] * dB
        hidden = jnp.clip(hidden, -1.0e6, 1.0e6)
        y = jnp.sum(hidden * Cm[:, None, :], axis=-1) + p["D"] * xt
        hid_all.append(hidden)
    return y, jnp.stack(hid_all, axis=1)


# --------------------------- main ---------------------------------------------
if __name__ == "__main__":
    key = jax.random.PRNGKey(0)
    k_x, k_p = jax.random.split(key)
    params = init_params(k_p)

    batch, seq = 2, 8
    x = jax.random.normal(k_x, (batch, seq, D_INNER), jnp.float32)

    y, hid = ssm_forward(x, params)
    y, hid = jax.block_until_ready((y, hid))

    assert y.shape == (batch, D_INNER), y.shape
    assert hid.shape == (batch, seq, D_INNER, D_STATE), hid.shape
    assert bool(jnp.all(jnp.isfinite(y))) and bool(jnp.all(jnp.isfinite(hid)))

    # verify against a pure-JAX reference of the torch forward
    y_ref, hid_ref = ssm_reference(x, params)

    def max_err(a, b):
        return float(jnp.max(jnp.abs(a - b) / (jnp.abs(b) + 1.0)))

    assert max_err(y, y_ref) < 2e-2, max_err(y, y_ref)
    assert max_err(hid, hid_ref) < 2e-2, max_err(hid, hid_ref)

    print("KERNEL_OK")
</pallas_src>

<mosaic_0001>
module attributes {stable_mosaic.version = 11 : i64} {
  func.func @_ssm_scan_kernel(%arg0: memref<16x32xf32, #tpu.memory_space<vmem>>, %arg1: memref<32x34xf32, #tpu.memory_space<vmem>>, %arg2: memref<1x34xf32, #tpu.memory_space<vmem>>, %arg3: memref<2x32xf32, #tpu.memory_space<vmem>>, %arg4: memref<1x32xf32, #tpu.memory_space<vmem>>, %arg5: memref<32x16xf32, #tpu.memory_space<vmem>>, %arg6: memref<1x32xf32, #tpu.memory_space<vmem>>, %arg7: memref<2x32xf32, #tpu.memory_space<vmem>>, %arg8: memref<8x2x512xf32, #tpu.memory_space<vmem>>) attributes {dimension_semantics = [], scalar_prefetch = 0 : i64, scratch_operands = 0 : i64, tpu.core_type = #tpu.core_type<tc>} {
    %c0 = arith.constant 0 : index
    %c0_0 = arith.constant 0 : index
    %0 = vector.load %arg0[%c0, %c0_0] : memref<16x32xf32, #tpu.memory_space<vmem>>, vector<16x32xf32>
    %c0_1 = arith.constant 0 : index
    %c0_2 = arith.constant 0 : index
    %1 = vector.load %arg5[%c0_1, %c0_2] : memref<32x16xf32, #tpu.memory_space<vmem>>, vector<32x16xf32>
    %c0_3 = arith.constant 0 : index
    %c0_4 = arith.constant 0 : index
    %2 = vector.load %arg1[%c0_3, %c0_4] : memref<32x34xf32, #tpu.memory_space<vmem>>, vector<32x34xf32>
    %cst = arith.constant dense<0.000000e+00> : vector<16x34xf32>
    %3 = tpu.matmul %0, %2, %cst {dimension_numbers = #tpu.dot_dimension_numbers<[1], [0], [0], [1], [0, 0, 1, 1], [], []>} : vector<16x32xf32>, vector<32x34xf32>, vector<16x34xf32> -> vector<16x34xf32>
    %c0_5 = arith.constant 0 : index
    %c0_6 = arith.constant 0 : index
    %4 = vector.load %arg2[%c0_5, %c0_6] : memref<1x34xf32, #tpu.memory_space<vmem>>, vector<1x34xf32>
    %5 = vector.broadcast %4 : vector<1x34xf32> to vector<16x34xf32>
    %6 = arith.addf %3, %5 : vector<16x34xf32>
    %7 = vector.extract_strided_slice %6 {offsets = [0, 0], sizes = [16, 16], strides = [1, 1]} : vector<16x34xf32> to vector<16x16xf32>
    %8 = vector.extract_strided_slice %6 {offsets = [0, 16], sizes = [16, 2], strides = [1, 1]} : vector<16x34xf32> to vector<16x2xf32>
    %9 = vector.extract_strided_slice %6 {offsets = [0, 18], sizes = [16, 16], strides = [1, 1]} : vector<16x34xf32> to vector<16x16xf32>
    %c0_7 = arith.constant 0 : index
    %c0_8 = arith.constant 0 : index
    %10 = vector.load %arg3[%c0_7, %c0_8] : memref<2x32xf32, #tpu.memory_space<vmem>>, vector<2x32xf32>
    %cst_9 = arith.constant dense<0.000000e+00> : vector<16x32xf32>
    %11 = tpu.matmul %8, %10, %cst_9 {dimension_numbers = #tpu.dot_dimension_numbers<[1], [0], [0], [1], [0, 0, 1, 1], [], []>} : vector<16x2xf32>, vector<2x32xf32>, vector<16x32xf32> -> vector<16x32xf32>
    %c0_10 = arith.constant 0 : index
    %c0_11 = arith.constant 0 : index
    %12 = vector.load %arg4[%c0_10, %c0_11] : memref<1x32xf32, #tpu.memory_space<vmem>>, vector<1x32xf32>
    %13 = vector.broadcast %12 : vector<1x32xf32> to vector<16x32xf32>
    %14 = arith.addf %11, %13 : vector<16x32xf32>
    %15 = vector.shape_cast %14 : vector<16x32xf32> to vector<16x32x1xf32>
    %16 = vector.shape_cast %1 : vector<32x16xf32> to vector<1x32x16xf32>
    %17 = vector.broadcast %15 : vector<16x32x1xf32> to vector<16x32x16xf32>
    %18 = vector.broadcast %16 : vector<1x32x16xf32> to vector<16x32x16xf32>
    %19 = arith.mulf %17, %18 : vector<16x32x16xf32>
    %20 = vector.shape_cast %19 : vector<16x32x16xf32> to vector<16x512xf32>
    %21 = arith.mulf %14, %0 : vector<16x32xf32>
    %22 = vector.shape_cast %21 : vector<16x32xf32> to vector<16x32x1xf32>
    %23 = vector.shape_cast %7 : vector<16x16xf32> to vector<16x1x16xf32>
    %24 = vector.broadcast %22 : vector<16x32x1xf32> to vector<16x32x16xf32>
    %25 = vector.broadcast %23 : vector<16x1x16xf32> to vector<16x32x16xf32>
    %26 = arith.mulf %24, %25 : vector<16x32x16xf32>
    %27 = vector.shape_cast %26 : vector<16x32x16xf32> to vector<16x512xf32>
    %cst_12 = arith.constant 0.000000e+00 : f32
    %28 = vector.broadcast %cst_12 : f32 to vector<2x512xf32>
    %29 = vector.extract_strided_slice %20 {offsets = [0, 0], sizes = [2, 512], strides = [1, 1]} : vector<16x512xf32> to vector<2x512xf32>
    %30 = arith.mulf %28, %29 : vector<2x512xf32>
    %31 = vector.extract_strided_slice %27 {offsets = [0, 0], sizes = [2, 512], strides = [1, 1]} : vector<16x512xf32> to vector<2x512xf32>
    %32 = arith.addf %30, %31 : vector<2x512xf32>
    %cst_13 = arith.constant -1.000000e+06 : f32
    %cst_14 = arith.constant 1.000000e+06 : f32
    %33 = vector.broadcast %cst_13 : f32 to vector<2x512xf32>
    %34 = arith.maximumf %33, %32 : vector<2x512xf32>
    %35 = vector.broadcast %cst_14 : f32 to vector<2x512xf32>
    %36 = arith.minimumf %35, %34 : vector<2x512xf32>
    %c0_15 = arith.constant 0 : index
    %c0_16 = arith.constant 0 : index
    %c0_17 = arith.constant 0 : index
    %37 = vector.load %arg8[%c0_15, %c0_16, %c0_17] : memref<8x2x512xf32, #tpu.memory_space<vmem>>, vector<1x2x512xf32>
    %38 = vector.shape_cast %37 : vector<1x2x512xf32> to vector<2x512xf32>
    %39 = vector.shape_cast %36 : vector<2x512xf32> to vector<1x2x512xf32>
    tpu.vector_store %arg8[%c0_15, %c0_16, %c0_17], %39 {strides = array<i32>} : memref<8x2x512xf32, #tpu.memory_space<vmem>>, vector<1x2x512xf32>,
    %40 = vector.extract_strided_slice %20 {offsets = [2, 0], sizes = [2, 512], strides = [1, 1]} : vector<16x512xf32> to vector<2x512xf32>
    %41 = arith.mulf %36, %40 : vector<2x512xf32>
    %42 = vector.extract_strided_slice %27 {offsets = [2, 0], sizes = [2, 512], strides = [1, 1]} : vector<16x512xf32> to vector<2x512xf32>
    %43 = arith.addf %41, %42 : vector<2x512xf32>
    %cst_18 = arith.constant -1.000000e+06 : f32
    %cst_19 = arith.constant 1.000000e+06 : f32
    %44 = vector.broadcast %cst_18 : f32 to vector<2x512xf32>
    %45 = arith.maximumf %44, %43 : vector<2x512xf32>
    %46 = vector.broadcast %cst_19 : f32 to vector<2x512xf32>
    %47 = arith.minimumf %46, %45 : vector<2x512xf32>
    %c1 = arith.constant 1 : index
    %c0_20 = arith.constant 0 : index
    %c0_21 = arith.constant 0 : index
    %48 = vector.load %arg8[%c1, %c0_20, %c0_21] : memref<8x2x512xf32, #tpu.memory_space<vmem>>, vector<1x2x512xf32>
    %49 = vector.shape_cast %48 : vector<1x2x512xf32> to vector<2x512xf32>
    %50 = vector.shape_cast %47 : vector<2x512xf32> to vector<1x2x512xf32>
    tpu.vector_store %arg8[%c1, %c0_20, %c0_21], %50 {strides = array<i32>} : memref<8x2x512xf32, #tpu.memory_space<vmem>>, vector<1x2x512xf32>,
    %51 = vector.extract_strided_slice %20 {offsets = [4, 0], sizes = [2, 512], strides = [1, 1]} : vector<16x512xf32> to vector<2x512xf32>
    %52 = arith.mulf %47, %51 : vector<2x512xf32>
    %53 = vector.extract_strided_slice %27 {offsets = [4, 0], sizes = [2, 512], strides = [1, 1]} : vector<16x512xf32> to vector<2x512xf32>
    %54 = arith.addf %52, %53 : vector<2x512xf32>
    %cst_22 = arith.constant -1.000000e+06 : f32
    %cst_23 = arith.constant 1.000000e+06 : f32
    %55 = vector.broadcast %cst_22 : f32 to vector<2x512xf32>
    %56 = arith.maximumf %55, %54 : vector<2x512xf32>
    %57 = vector.broadcast %cst_23 : f32 to vector<2x512xf32>
    %58 = arith.minimumf %57, %56 : vector<2x512xf32>
    %c2 = arith.constant 2 : index
    %c0_24 = arith.constant 0 : index
    %c0_25 = arith.constant 0 : index
    %59 = vector.load %arg8[%c2, %c0_24, %c0_25] : memref<8x2x512xf32, #tpu.memory_space<vmem>>, vector<1x2x512xf32>
    %60 = vector.shape_cast %59 : vector<1x2x512xf32> to vector<2x512xf32>
    %61 = vector.shape_cast %58 : vector<2x512xf32> to vector<1x2x512xf32>
    tpu.vector_store %arg8[%c2, %c0_24, %c0_25], %61 {strides = array<i32>} : memref<8x2x512xf32, #tpu.memory_space<vmem>>, vector<1x2x512xf32>,
    %62 = vector.extract_strided_slice %20 {offsets = [6, 0], sizes = [2, 512], strides = [1, 1]} : vector<16x512xf32> to vector<2x512xf32>
    %63 = arith.mulf %58, %62 : vector<2x512xf32>
    %64 = vector.extract_strided_slice %27 {offsets = [6, 0], sizes = [2, 512], strides = [1, 1]} : vector<16x512xf32> to vector<2x512xf32>
    %65 = arith.addf %63, %64 : vector<2x512xf32>
    %cst_26 = arith.constant -1.000000e+06 : f32
    %cst_27 = arith.constant 1.000000e+06 : f32
    %66 = vector.broadcast %cst_26 : f32 to vector<2x512xf32>
    %67 = arith.maximumf %66, %65 : vector<2x512xf32>
    %68 = vector.broadcast %cst_27 : f32 to vector<2x512xf32>
    %69 = arith.minimumf %68, %67 : vector<2x512xf32>
    %c3 = arith.constant 3 : index
    %c0_28 = arith.constant 0 : index
    %c0_29 = arith.constant 0 : index
    %70 = vector.load %arg8[%c3, %c0_28, %c0_29] : memref<8x2x512xf32, #tpu.memory_space<vmem>>, vector<1x2x512xf32>
    %71 = vector.shape_cast %70 : vector<1x2x512xf32> to vector<2x512xf32>
    %72 = vector.shape_cast %69 : vector<2x512xf32> to vector<1x2x512xf32>
    tpu.vector_store %arg8[%c3, %c0_28, %c0_29], %72 {strides = array<i32>} : memref<8x2x512xf32, #tpu.memory_space<vmem>>, vector<1x2x512xf32>,
    %73 = vector.extract_strided_slice %20 {offsets = [8, 0], sizes = [2, 512], strides = [1, 1]} : vector<16x512xf32> to vector<2x512xf32>
    %74 = arith.mulf %69, %73 : vector<2x512xf32>
    %75 = vector.extract_strided_slice %27 {offsets = [8, 0], sizes = [2, 512], strides = [1, 1]} : vector<16x512xf32> to vector<2x512xf32>
    %76 = arith.addf %74, %75 : vector<2x512xf32>
    %cst_30 = arith.constant -1.000000e+06 : f32
    %cst_31 = arith.constant 1.000000e+06 : f32
    %77 = vector.broadcast %cst_30 : f32 to vector<2x512xf32>
    %78 = arith.maximumf %77, %76 : vector<2x512xf32>
    %79 = vector.broadcast %cst_31 : f32 to vector<2x512xf32>
    %80 = arith.minimumf %79, %78 : vector<2x512xf32>
    %c4 = arith.constant 4 : index
    %c0_32 = arith.constant 0 : index
    %c0_33 = arith.constant 0 : index
    %81 = vector.load %arg8[%c4, %c0_32, %c0_33] : memref<8x2x512xf32, #tpu.memory_space<vmem>>, vector<1x2x512xf32>
    %82 = vector.shape_cast %81 : vector<1x2x512xf32> to vector<2x512xf32>
    %83 = vector.shape_cast %80 : vector<2x512xf32> to vector<1x2x512xf32>
    tpu.vector_store %arg8[%c4, %c0_32, %c0_33], %83 {strides = array<i32>} : memref<8x2x512xf32, #tpu.memory_space<vmem>>, vector<1x2x512xf32>,
    %84 = vector.extract_strided_slice %20 {offsets = [10, 0], sizes = [2, 512], strides = [1, 1]} : vector<16x512xf32> to vector<2x512xf32>
    %85 = arith.mulf %80, %84 : vector<2x512xf32>
    %86 = vector.extract_strided_slice %27 {offsets = [10, 0], sizes = [2, 512], strides = [1, 1]} : vector<16x512xf32> to vector<2x512xf32>
    %87 = arith.addf %85, %86 : vector<2x512xf32>
    %cst_34 = arith.constant -1.000000e+06 : f32
    %cst_35 = arith.constant 1.000000e+06 : f32
    %88 = vector.broadcast %cst_34 : f32 to vector<2x512xf32>
    %89 = arith.maximumf %88, %87 : vector<2x512xf32>
    %90 = vector.broadcast %cst_35 : f32 to vector<2x512xf32>
    %91 = arith.minimumf %90, %89 : vector<2x512xf32>
    %c5 = arith.constant 5 : index
    %c0_36 = arith.constant 0 : index
    %c0_37 = arith.constant 0 : index
    %92 = vector.load %arg8[%c5, %c0_36, %c0_37] : memref<8x2x512xf32, #tpu.memory_space<vmem>>, vector<1x2x512xf32>
    %93 = vector.shape_cast %92 : vector<1x2x512xf32> to vector<2x512xf32>
    %94 = vector.shape_cast %91 : vector<2x512xf32> to vector<1x2x512xf32>
    tpu.vector_store %arg8[%c5, %c0_36, %c0_37], %94 {strides = array<i32>} : memref<8x2x512xf32, #tpu.memory_space<vmem>>, vector<1x2x512xf32>,
    %95 = vector.extract_strided_slice %20 {offsets = [12, 0], sizes = [2, 512], strides = [1, 1]} : vector<16x512xf32> to vector<2x512xf32>
    %96 = arith.mulf %91, %95 : vector<2x512xf32>
    %97 = vector.extract_strided_slice %27 {offsets = [12, 0], sizes = [2, 512], strides = [1, 1]} : vector<16x512xf32> to vector<2x512xf32>
    %98 = arith.addf %96, %97 : vector<2x512xf32>
    %cst_38 = arith.constant -1.000000e+06 : f32
    %cst_39 = arith.constant 1.000000e+06 : f32
    %99 = vector.broadcast %cst_38 : f32 to vector<2x512xf32>
    %100 = arith.maximumf %99, %98 : vector<2x512xf32>
    %101 = vector.broadcast %cst_39 : f32 to vector<2x512xf32>
    %102 = arith.minimumf %101, %100 : vector<2x512xf32>
    %c6 = arith.constant 6 : index
    %c0_40 = arith.constant 0 : index
    %c0_41 = arith.constant 0 : index
    %103 = vector.load %arg8[%c6, %c0_40, %c0_41] : memref<8x2x512xf32, #tpu.memory_space<vmem>>, vector<1x2x512xf32>
    %104 = vector.shape_cast %103 : vector<1x2x512xf32> to vector<2x512xf32>
    %105 = vector.shape_cast %102 : vector<2x512xf32> to vector<1x2x512xf32>
    tpu.vector_store %arg8[%c6, %c0_40, %c0_41], %105 {strides = array<i32>} : memref<8x2x512xf32, #tpu.memory_space<vmem>>, vector<1x2x512xf32>,
    %106 = vector.extract_strided_slice %20 {offsets = [14, 0], sizes = [2, 512], strides = [1, 1]} : vector<16x512xf32> to vector<2x512xf32>
    %107 = arith.mulf %102, %106 : vector<2x512xf32>
    %108 = vector.extract_strided_slice %27 {offsets = [14, 0], sizes = [2, 512], strides = [1, 1]} : vector<16x512xf32> to vector<2x512xf32>
    %109 = arith.addf %107, %108 : vector<2x512xf32>
    %cst_42 = arith.constant -1.000000e+06 : f32
    %cst_43 = arith.constant 1.000000e+06 : f32
    %110 = vector.broadcast %cst_42 : f32 to vector<2x512xf32>
    %111 = arith.maximumf %110, %109 : vector<2x512xf32>
    %112 = vector.broadcast %cst_43 : f32 to vector<2x512xf32>
    %113 = arith.minimumf %112, %111 : vector<2x512xf32>
    %c7 = arith.constant 7 : index
    %c0_44 = arith.constant 0 : index
    %c0_45 = arith.constant 0 : index
    %114 = vector.load %arg8[%c7, %c0_44, %c0_45] : memref<8x2x512xf32, #tpu.memory_space<vmem>>, vector<1x2x512xf32>
    %115 = vector.shape_cast %114 : vector<1x2x512xf32> to vector<2x512xf32>
    %116 = vector.shape_cast %113 : vector<2x512xf32> to vector<1x2x512xf32>
    tpu.vector_store %arg8[%c7, %c0_44, %c0_45], %116 {strides = array<i32>} : memref<8x2x512xf32, #tpu.memory_space<vmem>>, vector<1x2x512xf32>,
    %117 = vector.extract_strided_slice %9 {offsets = [14, 0], sizes = [2, 16], strides = [1, 1]} : vector<16x16xf32> to vector<2x16xf32>
    %118 = vector.extract_strided_slice %0 {offsets = [14, 0], sizes = [2, 32], strides = [1, 1]} : vector<16x32xf32> to vector<2x32xf32>
    %119 = vector.shape_cast %113 : vector<2x512xf32> to vector<2x32x16xf32>
    %120 = vector.shape_cast %117 : vector<2x16xf32> to vector<2x1x16xf32>
    %121 = vector.broadcast %120 : vector<2x1x16xf32> to vector<2x32x16xf32>
    %122 = arith.mulf %119, %121 : vector<2x32x16xf32>
    %cst_46 = arith.constant dense<0.000000e+00> : vector<2x32xf32>
    %123 = vector.multi_reduction <add>, %122, %cst_46 [2] : vector<2x32x16xf32> to vector<2x32xf32>
    %c0_47 = arith.constant 0 : index
    %c0_48 = arith.constant 0 : index
    %124 = vector.load %arg6[%c0_47, %c0_48] : memref<1x32xf32, #tpu.memory_space<vmem>>, vector<1x32xf32>
    %125 = vector.broadcast %124 : vector<1x32xf32> to vector<2x32xf32>
    %126 = arith.mulf %125, %118 : vector<2x32xf32>
    %127 = arith.addf %123, %126 : vector<2x32xf32>
    %c0_49 = arith.constant 0 : index
    %c0_50 = arith.constant 0 : index
    %128 = vector.load %arg7[%c0_49, %c0_50] : memref<2x32xf32, #tpu.memory_space<vmem>>, vector<2x32xf32>
    tpu.vector_store %arg7[%c0_49, %c0_50], %127 {strides = array<i32>} : memref<2x32xf32, #tpu.memory_space<vmem>>, vector<2x32xf32>,
    return
  }
}

</mosaic_0001>

<llo_original>
// kernel: ssm_forward.1
$region0: #{ssm_forward.1}
  #allocation0 [shape = 'u32[]', space=smem, size = 0x4, offset = 0x4, fixed_abs, tag = 'smem constant byte address 0x4 - core index']
  #allocation1 [shape = 'u32[72,128]{1,0:T(1,128)}', space=vmem, size = 0x9000, scoped, tag = 'internal scratch']
  %s0 = inlined_call_operand.vmem [shape: f32[16,32], index: 0, kind: input, shape index: {}]
  %s1 = inlined_call_operand.vmem [shape: f32[32,34], index: 1, kind: input, shape index: {}]
  %s2 = inlined_call_operand.vmem [shape: f32[1,34], index: 2, kind: input, shape index: {}]
  %s3 = inlined_call_operand.vmem [shape: f32[2,32], index: 3, kind: input, shape index: {}]
  %s4 = inlined_call_operand.vmem [shape: f32[1,32], index: 4, kind: input, shape index: {}]
  %s5 = inlined_call_operand.vmem [shape: f32[32,16], index: 5, kind: input, shape index: {}]
  %s6 = inlined_call_operand.vmem [shape: f32[1,32], index: 6, kind: input, shape index: {}]
  %s7 = inlined_call_operand.hbm [shape: f32[2,32], index: 7, kind: output, shape index: {0}]
  %s8 = inlined_call_operand.vmem [shape: f32[8,2,512], index: 8, kind: output, shape index: {1}]
  %9 = xla_tuple %s7, %s8
  %s10 = sld [smem:[#allocation0]]
  $region46: #{ssm_forward.1} parent=0
    _
  %s12 = ssub.s32 1, %s10
  %s13 = scalar_select 0, %s12, %s10
  $region1: #{ssm_forward.1} parent=0
    #allocation2 [shape = 'u8[1024]{0}', space=vmem, size = 0x400, scoped, tag = 'output window, operand 0, single buffered']
    #allocation3 [shape = 's32[1]{0}', space=sflag, size = 0x4, scoped, tag = 'scoped memory for ssm_forward.1']
    %14 = vsyncpa [#allocation3], 0
    // Predicated region
    $region2: #{ssm_forward.1} parent=1 // pred_check
      _
    $region3: #{ssm_forward.1} parent=1 // pred_check_branch
      %16 = sbr.rel (0) target = $region5
    $region4: #{ssm_forward.1} parent=1 // pred_region
      _
    $region5: #{ssm_forward.1} parent=1 // pred_fallthru
      _
    // Predicated region
    $region6: #{ssm_forward.1} parent=1 // pred_check
      _
    $region7: #{ssm_forward.1} parent=1 // pred_check_branch
      %18 = sbr.rel (0) target = $region9
    $region8: #{ssm_forward.1} parent=1 // pred_region
      _
    $region9: #{ssm_forward.1} parent=1 // pred_fallthru
      _
    // Predicated region
    $region10: #{ssm_forward.1} parent=1 // pred_check
      _
    $region11: #{ssm_forward.1} parent=1 // pred_check_branch
      %20 = sbr.rel (0) target = $region13
    $region12: #{ssm_forward.1} parent=1 // pred_region
      _
    $region13: #{ssm_forward.1} parent=1 // pred_fallthru
      _
    // Predicated region
    $region14: #{ssm_forward.1} parent=1 // pred_check
      _
    $region15: #{ssm_forward.1} parent=1 // pred_check_branch
      %22 = sbr.rel (0) target = $region17
    $region16: #{ssm_forward.1} parent=1 // pred_region
      _
    $region17: #{ssm_forward.1} parent=1 // pred_fallthru
      _
    // Predicated region
    $region18: #{ssm_forward.1} parent=1 // pred_check
      _
    $region19: #{ssm_forward.1} parent=1 // pred_check_branch
      %24 = sbr.rel (0) target = $region21
    $region20: #{ssm_forward.1} parent=1 // pred_region
      _
    $region21: #{ssm_forward.1} parent=1 // pred_fallthru
      _
    // Predicated region
    $region22: #{ssm_forward.1} parent=1 // pred_check
      _
    $region23: #{ssm_forward.1} parent=1 // pred_check_branch
      %26 = sbr.rel (0) target = $region25
    $region24: #{ssm_forward.1} parent=1 // pred_region
      _
    $region25: #{ssm_forward.1} parent=1 // pred_fallthru
      _
    // Predicated region
    $region26: #{ssm_forward.1} parent=1 // pred_check
      _
    $region27: #{ssm_forward.1} parent=1 // pred_check_branch
      %28 = sbr.rel (0) target = $region29
    $region28: #{ssm_forward.1} parent=1 // pred_region
      _
    $region29: #{ssm_forward.1} parent=1 // pred_fallthru
      _
    %v29 = vld [vmem:[%s0] sm:$0xff]
    %v30 = vld [vmem:[%s0 + $0x8] sm:$0xff]
    %v31 = vld [vmem:[%s5] sm:$0xff]
    %v32 = vld [vmem:[%s5 + $0x8] sm:$0xff]
    %v33 = vld [vmem:[%s5 + $0x10] sm:$0xff]
    %v34 = vld [vmem:[%s5 + $0x18] sm:$0xff]
    %v35 = vld [vmem:[%s1] sm:$0xff]
    %v36 = vld [vmem:[%s1 + $0x8] sm:$0xff]
    %v37 = vld [vmem:[%s1 + $0x10] sm:$0xff]
    %v38 = vld [vmem:[%s1 + $0x18] sm:$0xff]
    %v39 = vld [vmem:[%s2] sm:$0x1]
    %v41 = vperm.slane %v39, 0
    %vm43 = vcmask 261120
    %v45 = vsel %vm43, %v29, 0
    %v48 = vsel %vm43, %v30, 0
    %50 = vmatpush.msra.mxu0 0.0
    %51 = vmatpush.msra.mxu0 0.0
    %52 = vmatpush.msra.mxu0 0.0
    %53 = vmatpush.msra.mxu0 0.0
    %54 = vmatpush.msra.mxu0 0.0
    %55 = vmatpush.msra.mxu0 0.0
    %56 = vmatpush.msra.mxu0 0.0
    %57 = vmatpush.msra.mxu0 0.0
    %58 = vmatpush.msra.mxu0 0.0
    %59 = vmatpush.msra.mxu0 0.0
    %60 = vmatpush.msra.mxu0 0.0
    %61 = vmatpush.msra.mxu0 0.0
    %62 = vmatpush.msra.mxu0 %v38
    %63 = vmatpush.msra.mxu0 %v37
    %64 = vmatpush.msra.mxu0 %v36
    %65 = vmatpush.msra.mxu0 %v35
    %66 = vmatmul.f32.gmra.mxu0 %v45
    %v67 = vpop.f32.mrf.mxu0
    %v68 = vadd.f32 %v41, %v67
    %69 = vmatmul.f32.gmra.mxu0 %v48
    %v70 = vpop.f32.mrf.mxu0
    %v71 = vadd.f32 %v41, %v70
    %72 = vdwg.mxu0
    %v73 = vld [vmem:[%s3] sm:$0x3]
    %v74 = vld [vmem:[%s4] sm:$0x1]
    %v76 = vperm.slane %v74, 0
    %80 = vrot.lane.b32.xlu0 %v68, 112
    %v81 = vpop.permute.xlu0 %80
    %82 = vrot.lane.b32.xlu0 %v71, 112
    %v83 = vpop.permute.xlu0 %82
    %vm84 = vcmask 15360
    %v85 = vsel %vm84, %v81, 0
    %v87 = vsel %vm84, %v83, 0
    %vm89 = vcmask 1041408
    %v91 = vsel %vm89, %v73, 0
    %93 = vmatpush.msra.mxu0 0.0
    %94 = vmatpush.msra.mxu0 0.0
    %95 = vmatpush.msra.mxu0 0.0
    %96 = vmatpush.msra.mxu0 0.0
    %97 = vmatpush.msra.mxu0 0.0
    %98 = vmatpush.msra.mxu0 0.0
    %99 = vmatpush.msra.mxu0 0.0
    %100 = vmatpush.msra.mxu0 0.0
    %101 = vmatpush.msra.mxu0 0.0
    %102 = vmatpush.msra.mxu0 0.0
    %103 = vmatpush.msra.mxu0 0.0
    %104 = vmatpush.msra.mxu0 0.0
    %105 = vmatpush.msra.mxu0 0.0
    %106 = vmatpush.msra.mxu0 0.0
    %107 = vmatpush.msra.mxu0 0.0
    %108 = vmatpush.msra.mxu0 %v91
    %109 = vmatmul.f32.gmra.mxu0 %v85
    %v110 = vpop.f32.mrf.mxu0
    %v111 = vadd.f32 %v76, %v110
    %112 = vmatmul.f32.gmra.mxu0 %v87
    %v113 = vpop.f32.mrf.mxu0
    %v114 = vadd.f32 %v76, %v113
    %115 = vdwg.mxu0
    %v116 = vperm.slane %v111, 0
    %v117 = vlaneseq
    %v118 = vshrl.u32 %v117, 7
    %120 = vset.pattern.permute.xlu0 %v118
    %121 = vperm.xlu0 %120, %v116
    %v122 = vpop.permute.xlu0 %121
    %v123 = vlaneseq
    %v124 = vshrl.u32 %v123, 7
    %v125 = vadd.s32 %v124, 8
    %126 = vset.pattern.permute.xlu0 %v125
    %127 = vperm.xlu0 %126, %v116
    %v128 = vpop.permute.xlu0 %127
    %v129 = vlaneseq
    %v130 = vshrl.u32 %v129, 7
    %v131 = vadd.s32 %v130, 16
    %132 = vset.pattern.permute.xlu0 %v131
    %133 = vperm.xlu0 %132, %v116
    %v134 = vpop.permute.xlu0 %133
    %v135 = vlaneseq
    %v136 = vshrl.u32 %v135, 7
    %v137 = vadd.s32 %v136, 24
    %138 = vset.pattern.permute.xlu0 %v137
    %139 = vperm.xlu0 %138, %v116
    %v140 = vpop.permute.xlu0 %139
    %v141 = vperm.slane %v111, 1
    %v142 = vlaneseq
    %v143 = vshrl.u32 %v142, 7
    %145 = vset.pattern.permute.xlu0 %v143
    %146 = vperm.xlu0 %145, %v141
    %v147 = vpop.permute.xlu0 %146
    %v148 = vlaneseq
    %v149 = vshrl.u32 %v148, 7
    %v150 = vadd.s32 %v149, 8
    %151 = vset.pattern.permute.xlu0 %v150
    %152 = vperm.xlu0 %151, %v141
    %v153 = vpop.permute.xlu0 %152
    %v154 = vlaneseq
    %v155 = vshrl.u32 %v154, 7
    %v156 = vadd.s32 %v155, 16
    %157 = vset.pattern.permute.xlu0 %v156
    %158 = vperm.xlu0 %157, %v141
    %v159 = vpop.permute.xlu0 %158
    %v160 = vlaneseq
    %v161 = vshrl.u32 %v160, 7
    %v162 = vadd.s32 %v161, 24
    %163 = vset.pattern.permute.xlu0 %v162
    %164 = vperm.xlu0 %163, %v141
    %v165 = vpop.permute.xlu0 %164
    %v166 = vperm.slane %v111, 2
    %v167 = vlaneseq
    %v168 = vshrl.u32 %v167, 7
    %170 = vset.pattern.permute.xlu0 %v168
    %171 = vperm.xlu0 %170, %v166
    %v172 = vpop.permute.xlu0 %171
    %v173 = vlaneseq
    %v174 = vshrl.u32 %v173, 7
    %v175 = vadd.s32 %v174, 8
    %176 = vset.pattern.permute.xlu0 %v175
    %177 = vperm.xlu0 %176, %v166
    %v178 = vpop.permute.xlu0 %177
    %v179 = vlaneseq
    %v180 = vshrl.u32 %v179, 7
    %v181 = vadd.s32 %v180, 16
    %182 = vset.pattern.permute.xlu0 %v181
    %183 = vperm.xlu0 %182, %v166
    %v184 = vpop.permute.xlu0 %183
    %v185 = vlaneseq
    %v186 = vshrl.u32 %v185, 7
    %v187 = vadd.s32 %v186, 24
    %188 = vset.pattern.permute.xlu0 %v187
    %189 = vperm.xlu0 %188, %v166
    %v190 = vpop.permute.xlu0 %189
    %v191 = vperm.slane %v111, 3
    %v192 = vlaneseq
    %v193 = vshrl.u32 %v192, 7
    %195 = vset.pattern.permute.xlu0 %v193
    %196 = vperm.xlu0 %195, %v191
    %v197 = vpop.permute.xlu0 %196
    %v198 = vlaneseq
    %v199 = vshrl.u32 %v198, 7
    %v200 = vadd.s32 %v199, 8
    %201 = vset.pattern.permute.xlu0 %v200
    %202 = vperm.xlu0 %201, %v191
    %v203 = vpop.permute.xlu0 %202
    %v204 = vlaneseq
    %v205 = vshrl.u32 %v204, 7
    %v206 = vadd.s32 %v205, 16
    %207 = vset.pattern.permute.xlu0 %v206
    %208 = vperm.xlu0 %207, %v191
    %v209 = vpop.permute.xlu0 %208
    %v210 = vlaneseq
    %v211 = vshrl.u32 %v210, 7
    %v212 = vadd.s32 %v211, 24
    %213 = vset.pattern.permute.xlu0 %v212
    %214 = vperm.xlu0 %213, %v191
    %v215 = vpop.permute.xlu0 %214
    %v216 = vperm.slane %v111, 4
    %v217 = vlaneseq
    %v218 = vshrl.u32 %v217, 7
    %220 = vset.pattern.permute.xlu0 %v218
    %221 = vperm.xlu0 %220, %v216
    %v222 = vpop.permute.xlu0 %221
    %v223 = vlaneseq
    %v224 = vshrl.u32 %v223, 7
    %v225 = vadd.s32 %v224, 8
    %226 = vset.pattern.permute.xlu0 %v225
    %227 = vperm.xlu0 %226, %v216
    %v228 = vpop.permute.xlu0 %227
    %v229 = vlaneseq
    %v230 = vshrl.u32 %v229, 7
    %v231 = vadd.s32 %v230, 16
    %232 = vset.pattern.permute.xlu0 %v231
    %233 = vperm.xlu0 %232, %v216
    %v234 = vpop.permute.xlu0 %233
    %v235 = vlaneseq
    %v236 = vshrl.u32 %v235, 7
    %v237 = vadd.s32 %v236, 24
    %238 = vset.pattern.permute.xlu0 %v237
    %239 = vperm.xlu0 %238, %v216
    %v240 = vpop.permute.xlu0 %239
    %v241 = vperm.slane %v111, 5
    %v242 = vlaneseq
    %v243 = vshrl.u32 %v242, 7
    %245 = vset.pattern.permute.xlu0 %v243
    %246 = vperm.xlu0 %245, %v241
    %v247 = vpop.permute.xlu0 %246
    %v248 = vlaneseq
    %v249 = vshrl.u32 %v248, 7
    %v250 = vadd.s32 %v249, 8
    %251 = vset.pattern.permute.xlu0 %v250
    %252 = vperm.xlu0 %251, %v241
    %v253 = vpop.permute.xlu0 %252
    %v254 = vlaneseq
    %v255 = vshrl.u32 %v254, 7
    %v256 = vadd.s32 %v255, 16
    %257 = vset.pattern.permute.xlu0 %v256
    %258 = vperm.xlu0 %257, %v241
    %v259 = vpop.permute.xlu0 %258
    %v260 = vlaneseq
    %v261 = vshrl.u32 %v260, 7
    %v262 = vadd.s32 %v261, 24
    %263 = vset.pattern.permute.xlu0 %v262
    %264 = vperm.xlu0 %263, %v241
    %v265 = vpop.permute.xlu0 %264
    %v266 = vperm.slane %v111, 6
    %v267 = vlaneseq
    %v268 = vshrl.u32 %v267, 7
    %270 = vset.pattern.permute.xlu0 %v268
    %271 = vperm.xlu0 %270, %v266
    %v272 = vpop.permute.xlu0 %271
    %v273 = vlaneseq
    %v274 = vshrl.u32 %v273, 7
    %v275 = vadd.s32 %v274, 8
    %276 = vset.pattern.permute.xlu0 %v275
    %277 = vperm.xlu0 %276, %v266
    %v278 = vpop.permute.xlu0 %277
    %v279 = vlaneseq
    %v280 = vshrl.u32 %v279, 7
    %v281 = vadd.s32 %v280, 16
    %282 = vset.pattern.permute.xlu0 %v281
    %283 = vperm.xlu0 %282, %v266
    %v284 = vpop.permute.xlu0 %283
    %v285 = vlaneseq
    %v286 = vshrl.u32 %v285, 7
    %v287 = vadd.s32 %v286, 24
    %288 = vset.pattern.permute.xlu0 %v287
    %289 = vperm.xlu0 %288, %v266
    %v290 = vpop.permute.xlu0 %289
    %v291 = vperm.slane %v111, 7
    %v292 = vlaneseq
    %v293 = vshrl.u32 %v292, 7
    %295 = vset.pattern.permute.xlu0 %v293
    %296 = vperm.xlu0 %295, %v291
    %v297 = vpop.permute.xlu0 %296
    %v298 = vlaneseq
    %v299 = vshrl.u32 %v298, 7
    %v300 = vadd.s32 %v299, 8
    %301 = vset.pattern.permute.xlu0 %v300
    %302 = vperm.xlu0 %301, %v291
    %v303 = vpop.permute.xlu0 %302
    %v304 = vlaneseq
    %v305 = vshrl.u32 %v304, 7
    %v306 = vadd.s32 %v305, 16
    %307 = vset.pattern.permute.xlu0 %v306
    %308 = vperm.xlu0 %307, %v291
    %v309 = vpop.permute.xlu0 %308
    %v310 = vlaneseq
    %v311 = vshrl.u32 %v310, 7
    %v312 = vadd.s32 %v311, 24
    %313 = vset.pattern.permute.xlu0 %v312
    %314 = vperm.xlu0 %313, %v291
    %v315 = vpop.permute.xlu0 %314
    %v316 = vperm.slane %v114, 0
    %v317 = vlaneseq
    %v318 = vshrl.u32 %v317, 7
    %320 = vset.pattern.permute.xlu0 %v318
    %321 = vperm.xlu0 %320, %v316
    %v322 = vpop.permute.xlu0 %321
    %v323 = vlaneseq
    %v324 = vshrl.u32 %v323, 7
    %v325 = vadd.s32 %v324, 8
    %326 = vset.pattern.permute.xlu0 %v325
    %327 = vperm.xlu0 %326, %v316
    %v328 = vpop.permute.xlu0 %327
    %v329 = vlaneseq
    %v330 = vshrl.u32 %v329, 7
    %v331 = vadd.s32 %v330, 16
    %332 = vset.pattern.permute.xlu0 %v331
    %333 = vperm.xlu0 %332, %v316
    %v334 = vpop.permute.xlu0 %333
    %v335 = vlaneseq
    %v336 = vshrl.u32 %v335, 7
    %v337 = vadd.s32 %v336, 24
    %338 = vset.pattern.permute.xlu0 %v337
    %339 = vperm.xlu0 %338, %v316
    %v340 = vpop.permute.xlu0 %339
    %v341 = vperm.slane %v114, 1
    %v342 = vlaneseq
    %v343 = vshrl.u32 %v342, 7
    %345 = vset.pattern.permute.xlu0 %v343
    %346 = vperm.xlu0 %345, %v341
    %v347 = vpop.permute.xlu0 %346
    %v348 = vlaneseq
    %v349 = vshrl.u32 %v348, 7
    %v350 = vadd.s32 %v349, 8
    %351 = vset.pattern.permute.xlu0 %v350
    %352 = vperm.xlu0 %351, %v341
    %v353 = vpop.permute.xlu0 %352
    %v354 = vlaneseq
    %v355 = vshrl.u32 %v354, 7
    %v356 = vadd.s32 %v355, 16
    %357 = vset.pattern.permute.xlu0 %v356
    %358 = vperm.xlu0 %357, %v341
    %v359 = vpop.permute.xlu0 %358
    %v360 = vlaneseq
    %v361 = vshrl.u32 %v360, 7
    %v362 = vadd.s32 %v361, 24
    %363 = vset.pattern.permute.xlu0 %v362
    %364 = vperm.xlu0 %363, %v341
    %v365 = vpop.permute.xlu0 %364
    %v366 = vperm.slane %v114, 2
    %v367 = vlaneseq
    %v368 = vshrl.u32 %v367, 7
    %370 = vset.pattern.permute.xlu0 %v368
    %371 = vperm.xlu0 %370, %v366
    %v372 = vpop.permute.xlu0 %371
    %v373 = vlaneseq
    %v374 = vshrl.u32 %v373, 7
    %v375 = vadd.s32 %v374, 8
    %376 = vset.pattern.permute.xlu0 %v375
    %377 = vperm.xlu0 %376, %v366
    %v378 = vpop.permute.xlu0 %377
    %v379 = vlaneseq
    %v380 = vshrl.u32 %v379, 7
    %v381 = vadd.s32 %v380, 16
    %382 = vset.pattern.permute.xlu0 %v381
    %383 = vperm.xlu0 %382, %v366
    %v384 = vpop.permute.xlu0 %383
    %v385 = vlaneseq
    %v386 = vshrl.u32 %v385, 7
    %v387 = vadd.s32 %v386, 24
    %388 = vset.pattern.permute.xlu0 %v387
    %389 = vperm.xlu0 %388, %v366
    %v390 = vpop.permute.xlu0 %389
    %v391 = vperm.slane %v114, 3
    %v392 = vlaneseq
    %v393 = vshrl.u32 %v392, 7
    %395 = vset.pattern.permute.xlu0 %v393
    %396 = vperm.xlu0 %395, %v391
    %v397 = vpop.permute.xlu0 %396
    %v398 = vlaneseq
    %v399 = vshrl.u32 %v398, 7
    %v400 = vadd.s32 %v399, 8
    %401 = vset.pattern.permute.xlu0 %v400
    %402 = vperm.xlu0 %401, %v391
    %v403 = vpop.permute.xlu0 %402
    %v404 = vlaneseq
    %v405 = vshrl.u32 %v404, 7
    %v406 = vadd.s32 %v405, 16
    %407 = vset.pattern.permute.xlu0 %v406
    %408 = vperm.xlu0 %407, %v391
    %v409 = vpop.permute.xlu0 %408
    %v410 = vlaneseq
    %v411 = vshrl.u32 %v410, 7
    %v412 = vadd.s32 %v411, 24
    %413 = vset.pattern.permute.xlu0 %v412
    %414 = vperm.xlu0 %413, %v391
    %v415 = vpop.permute.xlu0 %414
    %v416 = vperm.slane %v114, 4
    %v417 = vlaneseq
    %v418 = vshrl.u32 %v417, 7
    %420 = vset.pattern.permute.xlu0 %v418
    %421 = vperm.xlu0 %420, %v416
    %v422 = vpop.permute.xlu0 %421
    %v423 = vlaneseq
    %v424 = vshrl.u32 %v423, 7
    %v425 = vadd.s32 %v424, 8
    %426 = vset.pattern.permute.xlu0 %v425
    %427 = vperm.xlu0 %426, %v416
    %v428 = vpop.permute.xlu0 %427
    %v429 = vlaneseq
    %v430 = vshrl.u32 %v429, 7
    %v431 = vadd.s32 %v430, 16
    %432 = vset.pattern.permute.xlu0 %v431
    %433 = vperm.xlu0 %432, %v416
    %v434 = vpop.permute.xlu0 %433
    %v435 = vlaneseq
    %v436 = vshrl.u32 %v435, 7
    %v437 = vadd.s32 %v436, 24
    %438 = vset.pattern.permute.xlu0 %v437
    %439 = vperm.xlu0 %438, %v416
    %v440 = vpop.permute.xlu0 %439
    %v441 = vperm.slane %v114, 5
    %v442 = vlaneseq
    %v443 = vshrl.u32 %v442, 7
    %445 = vset.pattern.permute.xlu0 %v443
    %446 = vperm.xlu0 %445, %v441
    %v447 = vpop.permute.xlu0 %446
    %v448 = vlaneseq
    %v449 = vshrl.u32 %v448, 7
    %v450 = vadd.s32 %v449, 8
    %451 = vset.pattern.permute.xlu0 %v450
    %452 = vperm.xlu0 %451, %v441
    %v453 = vpop.permute.xlu0 %452
    %v454 = vlaneseq
    %v455 = vshrl.u32 %v454, 7
    %v456 = vadd.s32 %v455, 16
    %457 = vset.pattern.permute.xlu0 %v456
    %458 = vperm.xlu0 %457, %v441
    %v459 = vpop.permute.xlu0 %458
    %v460 = vlaneseq
    %v461 = vshrl.u32 %v460, 7
    %v462 = vadd.s32 %v461, 24
    %463 = vset.pattern.permute.xlu0 %v462
    %464 = vperm.xlu0 %463, %v441
    %v465 = vpop.permute.xlu0 %464
    %v466 = vperm.slane %v114, 6
    %v467 = vlaneseq
    %v468 = vshrl.u32 %v467, 7
    %470 = vset.pattern.permute.xlu0 %v468
    %471 = vperm.xlu0 %470, %v466
    %v472 = vpop.permute.xlu0 %471
    %v473 = vlaneseq
    %v474 = vshrl.u32 %v473, 7
    %v475 = vadd.s32 %v474, 8
    %476 = vset.pattern.permute.xlu0 %v475
    %477 = vperm.xlu0 %476, %v466
    %v478 = vpop.permute.xlu0 %477
    %v479 = vlaneseq
    %v480 = vshrl.u32 %v479, 7
    %v481 = vadd.s32 %v480, 16
    %482 = vset.pattern.permute.xlu0 %v481
    %483 = vperm.xlu0 %482, %v466
    %v484 = vpop.permute.xlu0 %483
    %v485 = vlaneseq
    %v486 = vshrl.u32 %v485, 7
    %v487 = vadd.s32 %v486, 24
    %488 = vset.pattern.permute.xlu0 %v487
    %489 = vperm.xlu0 %488, %v466
    %v490 = vpop.permute.xlu0 %489
    %v491 = vperm.slane %v114, 7
    %v492 = vlaneseq
    %v493 = vshrl.u32 %v492, 7
    %495 = vset.pattern.permute.xlu0 %v493
    %496 = vperm.xlu0 %495, %v491
    %v497 = vpop.permute.xlu0 %496
    %v498 = vlaneseq
    %v499 = vshrl.u32 %v498, 7
    %v500 = vadd.s32 %v499, 8
    %501 = vset.pattern.permute.xlu0 %v500
    %502 = vperm.xlu0 %501, %v491
    %v503 = vpop.permute.xlu0 %502
    %v504 = vlaneseq
    %v505 = vshrl.u32 %v504, 7
    %v506 = vadd.s32 %v505, 16
    %507 = vset.pattern.permute.xlu0 %v506
    %508 = vperm.xlu0 %507, %v491
    %v509 = vpop.permute.xlu0 %508
    %v510 = vlaneseq
    %v511 = vshrl.u32 %v510, 7
    %v512 = vadd.s32 %v511, 24
    %513 = vset.pattern.permute.xlu0 %v512
    %514 = vperm.xlu0 %513, %v491
    %v515 = vpop.permute.xlu0 %514
    %v516 = vmul.f32 %v122, %v31
    %v517 = vmul.f32 %v128, %v32
    %v518 = vmul.f32 %v134, %v33
    %v519 = vmul.f32 %v140, %v34
    %v520 = vmul.f32 %v147, %v31
    %v521 = vmul.f32 %v153, %v32
    %v522 = vmul.f32 %v159, %v33
    %v523 = vmul.f32 %v165, %v34
    %v524 = vmul.f32 %v172, %v31
    %v525 = vmul.f32 %v178, %v32
    %v526 = vmul.f32 %v184, %v33
    %v527 = vmul.f32 %v190, %v34
    %v528 = vmul.f32 %v197, %v31
    %v529 = vmul.f32 %v203, %v32
    %v530 = vmul.f32 %v209, %v33
    %v531 = vmul.f32 %v215, %v34
    %v532 = vmul.f32 %v222, %v31
    %v533 = vmul.f32 %v228, %v32
    %v534 = vmul.f32 %v234, %v33
    %v535 = vmul.f32 %v240, %v34
    %v536 = vmul.f32 %v247, %v31
    %v537 = vmul.f32 %v253, %v32
    %v538 = vmul.f32 %v259, %v33
    %v539 = vmul.f32 %v265, %v34
    %v540 = vmul.f32 %v272, %v31
    %v541 = vmul.f32 %v278, %v32
    %v542 = vmul.f32 %v284, %v33
    %v543 = vmul.f32 %v290, %v34
    %v544 = vmul.f32 %v297, %v31
    %v545 = vmul.f32 %v303, %v32
    %v546 = vmul.f32 %v309, %v33
    %v547 = vmul.f32 %v315, %v34
    %v548 = vmul.f32 %v322, %v31
    %v549 = vmul.f32 %v328, %v32
    %v550 = vmul.f32 %v334, %v33
    %v551 = vmul.f32 %v340, %v34
    %v552 = vmul.f32 %v347, %v31
    %v553 = vmul.f32 %v353, %v32
    %v554 = vmul.f32 %v359, %v33
    %v555 = vmul.f32 %v365, %v34
    %v556 = vmul.f32 %v372, %v31
    %v557 = vmul.f32 %v378, %v32
    %v558 = vmul.f32 %v384, %v33
    %v559 = vmul.f32 %v390, %v34
    %v560 = vmul.f32 %v397, %v31
    %v561 = vmul.f32 %v403, %v32
    %v562 = vmul.f32 %v409, %v33
    %v563 = vmul.f32 %v415, %v34
    %v564 = vmul.f32 %v422, %v31
    %v565 = vmul.f32 %v428, %v32
    %v566 = vmul.f32 %v434, %v33
    %v567 = vmul.f32 %v440, %v34
    %v568 = vmul.f32 %v447, %v31
    %v569 = vmul.f32 %v453, %v32
    %v570 = vmul.f32 %v459, %v33
    %v571 = vmul.f32 %v465, %v34
    %v572 = vmul.f32 %v472, %v31
    %v573 = vmul.f32 %v478, %v32
    %v574 = vmul.f32 %v484, %v33
    %v575 = vmul.f32 %v490, %v34
    %v576 = vmul.f32 %v497, %v31
    %v577 = vmul.f32 %v503, %v32
    %v578 = vmul.f32 %v509, %v33
    %v579 = vmul.f32 %v515, %v34
    %v580 = vrot.slane %v524, 4
    %vm581 = vcmask 1047556
    %v582 = vsel %vm581, %v580, %v516
    %v583 = vrot.slane %v516, 4
    %v584 = vsel %vm581, %v524, %v583
    %v586 = vunpack.c.l.s4 1983009808
    %v587 = vunpack.c.0.s8 %v586
    %v588 = vperm.slane %v582, %v587
    %v590 = vunpack.c.l.s4 1983009808
    %v591 = vunpack.c.0.s8 %v590
    %v592 = vperm.slane %v584, %v591
    %v593 = vrot.slane %v528, 4
    %v594 = vsel %vm581, %v593, %v520
    %v595 = vrot.slane %v520, 4
    %v596 = vsel %vm581, %v528, %v595
    %v598 = vunpack.c.l.s4 1983009808
    %v599 = vunpack.c.0.s8 %v598
    %v600 = vperm.slane %v594, %v599
    %v602 = vunpack.c.l.s4 1983009808
    %v603 = vunpack.c.0.s8 %v602
    %v604 = vperm.slane %v596, %v603
    %v605 = vrot.slane %v540, 4
    %v606 = vsel %vm581, %v605, %v532
    %v607 = vrot.slane %v532, 4
    %v608 = vsel %vm581, %v540, %v607
    %v610 = vunpack.c.l.s4 1983009808
    %v611 = vunpack.c.0.s8 %v610
    %v612 = vperm.slane %v606, %v611
    %v614 = vunpack.c.l.s4 1983009808
    %v615 = vunpack.c.0.s8 %v614
    %v616 = vperm.slane %v608, %v615
    %v617 = vrot.slane %v544, 4
    %v618 = vsel %vm581, %v617, %v536
    %v619 = vrot.slane %v536, 4
    %v620 = vsel %vm581, %v544, %v619
    %v622 = vunpack.c.l.s4 1983009808
    %v623 = vunpack.c.0.s8 %v622
    %v624 = vperm.slane %v618, %v623
    %v626 = vunpack.c.l.s4 1983009808
    %v627 = vunpack.c.0.s8 %v626
    %v628 = vperm.slane %v620, %v627
    %v629 = vrot.slane %v600, 4
    %v630 = vsel %vm581, %v629, %v588
    %v631 = vrot.slane %v588, 4
    %v632 = vsel %vm581, %v600, %v631
    %v634 = vunpack.c.l.s4 1934713408
    %v635 = vunpack.c.0.s8 %v634
    %v636 = vperm.slane %v630, %v635
    %v638 = vunpack.c.l.s4 1934713408
    %v639 = vunpack.c.0.s8 %v638
    %v640 = vperm.slane %v632, %v639
    %v641 = vrot.slane %v604, 4
    %v642 = vsel %vm581, %v641, %v592
    %v643 = vrot.slane %v592, 4
    %v644 = vsel %vm581, %v604, %v643
    %v646 = vunpack.c.l.s4 1934713408
    %v647 = vunpack.c.0.s8 %v646
    %v648 = vperm.slane %v642, %v647
    %v650 = vunpack.c.l.s4 1934713408
    %v651 = vunpack.c.0.s8 %v650
    %v652 = vperm.slane %v644, %v651
    %v653 = vrot.slane %v624, 4
    %v654 = vsel %vm581, %v653, %v612
    %v655 = vrot.slane %v612, 4
    %v656 = vsel %vm581, %v624, %v655
    %v658 = vunpack.c.l.s4 1934713408
    %v659 = vunpack.c.0.s8 %v658
    %v660 = vperm.slane %v654, %v659
    %v662 = vunpack.c.l.s4 1934713408
    %v663 = vunpack.c.0.s8 %v662
    %v664 = vperm.slane %v656, %v663
    %v665 = vrot.slane %v628, 4
    %v666 = vsel %vm581, %v665, %v616
    %v667 = vrot.slane %v616, 4
    %v668 = vsel %vm581, %v628, %v667
    %v670 = vunpack.c.l.s4 1934713408
    %v671 = vunpack.c.0.s8 %v670
    %v672 = vperm.slane %v666, %v671
    %v674 = vunpack.c.l.s4 1934713408
    %v675 = vunpack.c.0.s8 %v674
    %v676 = vperm.slane %v668, %v675
    %v677 = vrot.slane %v660, 4
    %v678 = vsel %vm581, %v677, %v636
    %v679 = vrot.slane %v636, 4
    %v680 = vsel %vm581, %v660, %v679
    %v681 = vrot.slane %v664, 4
    %v682 = vsel %vm581, %v681, %v640
    %v683 = vrot.slane %v640, 4
    %v684 = vsel %vm581, %v664, %v683
    %v685 = vrot.slane %v672, 4
    %v686 = vsel %vm581, %v685, %v648
    %v687 = vrot.slane %v648, 4
    %v688 = vsel %vm581, %v672, %v687
    %v689 = vrot.slane %v676, 4
    %v690 = vsel %vm581, %v689, %v652
    %v691 = vrot.slane %v652, 4
    %v692 = vsel %vm581, %v676, %v691
    %v693 = vrot.slane %v556, 4
    %v694 = vsel %vm581, %v693, %v548
    %v695 = vrot.slane %v548, 4
    %v696 = vsel %vm581, %v556, %v695
    %v698 = vunpack.c.l.s4 1983009808
    %v699 = vunpack.c.0.s8 %v698
    %v700 = vperm.slane %v694, %v699
    %v702 = vunpack.c.l.s4 1983009808
    %v703 = vunpack.c.0.s8 %v702
    %v704 = vperm.slane %v696, %v703
    %v705 = vrot.slane %v560, 4
    %v706 = vsel %vm581, %v705, %v552
    %v707 = vrot.slane %v552, 4
    %v708 = vsel %vm581, %v560, %v707
    %v710 = vunpack.c.l.s4 1983009808
    %v711 = vunpack.c.0.s8 %v710
    %v712 = vperm.slane %v706, %v711
    %v714 = vunpack.c.l.s4 1983009808
    %v715 = vunpack.c.0.s8 %v714
    %v716 = vperm.slane %v708, %v715
    %v717 = vrot.slane %v572, 4
    %v718 = vsel %vm581, %v717, %v564
    %v719 = vrot.slane %v564, 4
    %v720 = vsel %vm581, %v572, %v719
    %v722 = vunpack.c.l.s4 1983009808
    %v723 = vunpack.c.0.s8 %v722
    %v724 = vperm.slane %v718, %v723
    %v726 = vunpack.c.l.s4 1983009808
    %v727 = vunpack.c.0.s8 %v726
    %v728 = vperm.slane %v720, %v727
    %v729 = vrot.slane %v576, 4
    %v730 = vsel %vm581, %v729, %v568
    %v731 = vrot.slane %v568, 4
    %v732 = vsel %vm581, %v576, %v731
    %v734 = vunpack.c.l.s4 1983009808
    %v735 = vunpack.c.0.s8 %v734
    %v736 = vperm.slane %v730, %v735
    %v738 = vunpack.c.l.s4 1983009808
    %v739 = vunpack.c.0.s8 %v738
    %v740 = vperm.slane %v732, %v739
    %v741 = vrot.slane %v712, 4
    %v742 = vsel %vm581, %v741, %v700
    %v743 = vrot.slane %v700, 4
    %v744 = vsel %vm581, %v712, %v743
    %v746 = vunpack.c.l.s4 1934713408
    %v747 = vunpack.c.0.s8 %v746
    %v748 = vperm.slane %v742, %v747
    %v750 = vunpack.c.l.s4 1934713408
    %v751 = vunpack.c.0.s8 %v750
    %v752 = vperm.slane %v744, %v751
    %v753 = vrot.slane %v716, 4
    %v754 = vsel %vm581, %v753, %v704
    %v755 = vrot.slane %v704, 4
    %v756 = vsel %vm581, %v716, %v755
    %v758 = vunpack.c.l.s4 1934713408
    %v759 = vunpack.c.0.s8 %v758
    %v760 = vperm.slane %v754, %v759
    %v762 = vunpack.c.l.s4 1934713408
    %v763 = vunpack.c.0.s8 %v762
    %v764 = vperm.slane %v756, %v763
    %v765 = vrot.slane %v736, 4
    %v766 = vsel %vm581, %v765, %v724
    %v767 = vrot.slane %v724, 4
    %v768 = vsel %vm581, %v736, %v767
    %v770 = vunpack.c.l.s4 1934713408
    %v771 = vunpack.c.0.s8 %v770
    %v772 = vperm.slane %v766, %v771
    %v774 = vunpack.c.l.s4 1934713408
    %v775 = vunpack.c.0.s8 %v774
    %v776 = vperm.slane %v768, %v775
    %v777 = vrot.slane %v740, 4
    %v778 = vsel %vm581, %v777, %v728
    %v779 = vrot.slane %v728, 4
    %v780 = vsel %vm581, %v740, %v779
    %v782 = vunpack.c.l.s4 1934713408
    %v783 = vunpack.c.0.s8 %v782
    %v784 = vperm.slane %v778, %v783
    %v786 = vunpack.c.l.s4 1934713408
    %v787 = vunpack.c.0.s8 %v786
    %v788 = vperm.slane %v780, %v787
    %v789 = vrot.slane %v772, 4
    %v790 = vsel %vm581, %v789, %v748
    %v791 = vrot.slane %v748, 4
    %v792 = vsel %vm581, %v772, %v791
    %v793 = vrot.slane %v776, 4
    %v794 = vsel %vm581, %v793, %v752
    %v795 = vrot.slane %v752, 4
    %v796 = vsel %vm581, %v776, %v795
    %v797 = vrot.slane %v784, 4
    %v798 = vsel %vm581, %v797, %v760
    %v799 = vrot.slane %v760, 4
    %v800 = vsel %vm581, %v784, %v799
    %v801 = vrot.slane %v788, 4
    %v802 = vsel %vm581, %v801, %v764
    %v803 = vrot.slane %v764, 4
    %v804 = vsel %vm581, %v788, %v803
    %v805 = vrot.slane %v525, 4
    %v806 = vsel %vm581, %v805, %v517
    %v807 = vrot.slane %v517, 4
    %v808 = vsel %vm581, %v525, %v807
    %v810 = vunpack.c.l.s4 1983009808
    %v811 = vunpack.c.0.s8 %v810
    %v812 = vperm.slane %v806, %v811
    %v814 = vunpack.c.l.s4 1983009808
    %v815 = vunpack.c.0.s8 %v814
    %v816 = vperm.slane %v808, %v815
    %v817 = vrot.slane %v529, 4
    %v818 = vsel %vm581, %v817, %v521
    %v819 = vrot.slane %v521, 4
    %v820 = vsel %vm581, %v529, %v819
    %v822 = vunpack.c.l.s4 1983009808
    %v823 = vunpack.c.0.s8 %v822
    %v824 = vperm.slane %v818, %v823
    %v826 = vunpack.c.l.s4 1983009808
    %v827 = vunpack.c.0.s8 %v826
    %v828 = vperm.slane %v820, %v827
    %v829 = vrot.slane %v541, 4
    %v830 = vsel %vm581, %v829, %v533
    %v831 = vrot.slane %v533, 4
    %v832 = vsel %vm581, %v541, %v831
    %v834 = vunpack.c.l.s4 1983009808
    %v835 = vunpack.c.0.s8 %v834
    %v836 = vperm.slane %v830, %v835
    %v838 = vunpack.c.l.s4 1983009808
    %v839 = vunpack.c.0.s8 %v838
    %v840 = vperm.slane %v832, %v839
    %v841 = vrot.slane %v545, 4
    %v842 = vsel %vm581, %v841, %v537
    %v843 = vrot.slane %v537, 4
    %v844 = vsel %vm581, %v545, %v843
    %v846 = vunpack.c.l.s4 1983009808
    %v847 = vunpack.c.0.s8 %v846
    %v848 = vperm.slane %v842, %v847
    %v850 = vunpack.c.l.s4 1983009808
    %v851 = vunpack.c.0.s8 %v850
    %v852 = vperm.slane %v844, %v851
    %v853 = vrot.slane %v824, 4
    %v854 = vsel %vm581, %v853, %v812
    %v855 = vrot.slane %v812, 4
    %v856 = vsel %vm581, %v824, %v855
    %v858 = vunpack.c.l.s4 1934713408
    %v859 = vunpack.c.0.s8 %v858
    %v860 = vperm.slane %v854, %v859
    %v862 = vunpack.c.l.s4 1934713408
    %v863 = vunpack.c.0.s8 %v862
    %v864 = vperm.slane %v856, %v863
    %v865 = vrot.slane %v828, 4
    %v866 = vsel %vm581, %v865, %v816
    %v867 = vrot.slane %v816, 4
    %v868 = vsel %vm581, %v828, %v867
    %v870 = vunpack.c.l.s4 1934713408
    %v871 = vunpack.c.0.s8 %v870
    %v872 = vperm.slane %v866, %v871
    %v874 = vunpack.c.l.s4 1934713408
    %v875 = vunpack.c.0.s8 %v874
    %v876 = vperm.slane %v868, %v875
    %v877 = vrot.slane %v848, 4
    %v878 = vsel %vm581, %v877, %v836
    %v879 = vrot.slane %v836, 4
    %v880 = vsel %vm581, %v848, %v879
    %v882 = vunpack.c.l.s4 1934713408
    %v883 = vunpack.c.0.s8 %v882
    %v884 = vperm.slane %v878, %v883
    %v886 = vunpack.c.l.s4 1934713408
    %v887 = vunpack.c.0.s8 %v886
    %v888 = vperm.slane %v880, %v887
    %v889 = vrot.slane %v852, 4
    %v890 = vsel %vm581, %v889, %v840
    %v891 = vrot.slane %v840, 4
    %v892 = vsel %vm581, %v852, %v891
    %v894 = vunpack.c.l.s4 1934713408
    %v895 = vunpack.c.0.s8 %v894
    %v896 = vperm.slane %v890, %v895
    %v898 = vunpack.c.l.s4 1934713408
    %v899 = vunpack.c.0.s8 %v898
    %v900 = vperm.slane %v892, %v899
    %v901 = vrot.slane %v884, 4
    %v902 = vsel %vm581, %v901, %v860
    %v903 = vrot.slane %v860, 4
    %v904 = vsel %vm581, %v884, %v903
    %v905 = vrot.slane %v888, 4
    %v906 = vsel %vm581, %v905, %v864
    %v907 = vrot.slane %v864, 4
    %v908 = vsel %vm581, %v888, %v907
    %v909 = vrot.slane %v896, 4
    %v910 = vsel %vm581, %v909, %v872
    %v911 = vrot.slane %v872, 4
    %v912 = vsel %vm581, %v896, %v911
    %v913 = vrot.slane %v900, 4
    %v914 = vsel %vm581, %v913, %v876
    %v915 = vrot.slane %v876, 4
    %v916 = vsel %vm581, %v900, %v915
    %v917 = vrot.slane %v557, 4
    %v918 = vsel %vm581, %v917, %v549
    %v919 = vrot.slane %v549, 4
    %v920 = vsel %vm581, %v557, %v919
    %v922 = vunpack.c.l.s4 1983009808
    %v923 = vunpack.c.0.s8 %v922
    %v924 = vperm.slane %v918, %v923
    %v926 = vunpack.c.l.s4 1983009808
    %v927 = vunpack.c.0.s8 %v926
    %v928 = vperm.slane %v920, %v927
    %v929 = vrot.slane %v561, 4
    %v930 = vsel %vm581, %v929, %v553
    %v931 = vrot.slane %v553, 4
    %v932 = vsel %vm581, %v561, %v931
    %v934 = vunpack.c.l.s4 1983009808
    %v935 = vunpack.c.0.s8 %v934
    %v936 = vperm.slane %v930, %v935
    %v938 = vunpack.c.l.s4 1983009808
    %v939 = vunpack.c.0.s8 %v938
    %v940 = vperm.slane %v932, %v939
    %v941 = vrot.slane %v573, 4
    %v942 = vsel %vm581, %v941, %v565
    %v943 = vrot.slane %v565, 4
    %v944 = vsel %vm581, %v573, %v943
    %v946 = vunpack.c.l.s4 1983009808
    %v947 = vunpack.c.0.s8 %v946
    %v948 = vperm.slane %v942, %v947
    %v950 = vunpack.c.l.s4 1983009808
    %v951 = vunpack.c.0.s8 %v950
    %v952 = vperm.slane %v944, %v951
    %v953 = vrot.slane %v577, 4
    %v954 = vsel %vm581, %v953, %v569
    %v955 = vrot.slane %v569, 4
    %v956 = vsel %vm581, %v577, %v955
    %v958 = vunpack.c.l.s4 1983009808
    %v959 = vunpack.c.0.s8 %v958
    %v960 = vperm.slane %v954, %v959
    %v962 = vunpack.c.l.s4 1983009808
    %v963 = vunpack.c.0.s8 %v962
    %v964 = vperm.slane %v956, %v963
    %v965 = vrot.slane %v936, 4
    %v966 = vsel %vm581, %v965, %v924
    %v967 = vrot.slane %v924, 4
    %v968 = vsel %vm581, %v936, %v967
    %v970 = vunpack.c.l.s4 1934713408
    %v971 = vunpack.c.0.s8 %v970
    %v972 = vperm.slane %v966, %v971
    %v974 = vunpack.c.l.s4 1934713408
    %v975 = vunpack.c.0.s8 %v974
    %v976 = vperm.slane %v968, %v975
    %v977 = vrot.slane %v940, 4
    %v978 = vsel %vm581, %v977, %v928
    %v979 = vrot.slane %v928, 4
    %v980 = vsel %vm581, %v940, %v979
    %v982 = vunpack.c.l.s4 1934713408
    %v983 = vunpack.c.0.s8 %v982
    %v984 = vperm.slane %v978, %v983
    %v986 = vunpack.c.l.s4 1934713408
    %v987 = vunpack.c.0.s8 %v986
    %v988 = vperm.slane %v980, %v987
    %v989 = vrot.slane %v960, 4
    %v990 = vsel %vm581, %v989, %v948
    %v991 = vrot.slane %v948, 4
    %v992 = vsel %vm581, %v960, %v991
    %v994 = vunpack.c.l.s4 1934713408
    %v995 = vunpack.c.0.s8 %v994
    %v996 = vperm.slane %v990, %v995
    %v998 = vunpack.c.l.s4 1934713408
    %v999 = vunpack.c.0.s8 %v998
    %v1000 = vperm.slane %v992, %v999
    %v1001 = vrot.slane %v964, 4
    %v1002 = vsel %vm581, %v1001, %v952
    %v1003 = vrot.slane %v952, 4
    %v1004 = vsel %vm581, %v964, %v1003
    %v1006 = vunpack.c.l.s4 1934713408
    %v1007 = vunpack.c.0.s8 %v1006
    %v1008 = vperm.slane %v1002, %v1007
    %v1010 = vunpack.c.l.s4 1934713408
    %v1011 = vunpack.c.0.s8 %v1010
    %v1012 = vperm.slane %v1004, %v1011
    %v1013 = vrot.slane %v996, 4
    %v1014 = vsel %vm581, %v1013, %v972
    %v1015 = vrot.slane %v972, 4
    %v1016 = vsel %vm581, %v996, %v1015
    %v1017 = vrot.slane %v1000, 4
    %v1018 = vsel %vm581, %v1017, %v976
    %v1019 = vrot.slane %v976, 4
    %v1020 = vsel %vm581, %v1000, %v1019
    %v1021 = vrot.slane %v1008, 4
    %v1022 = vsel %vm581, %v1021, %v984
    %v1023 = vrot.slane %v984, 4
    %v1024 = vsel %vm581, %v1008, %v1023
    %v1025 = vrot.slane %v1012, 4
    %v1026 = vsel %vm581, %v1025, %v988
    %v1027 = vrot.slane %v988, 4
    %v1028 = vsel %vm581, %v1012, %v1027
    %v1029 = vrot.slane %v526, 4
    %v1030 = vsel %vm581, %v1029, %v518
    %v1031 = vrot.slane %v518, 4
    %v1032 = vsel %vm581, %v526, %v1031
    %v1034 = vunpack.c.l.s4 1983009808
    %v1035 = vunpack.c.0.s8 %v1034
    %v1036 = vperm.slane %v1030, %v1035
    %v1038 = vunpack.c.l.s4 1983009808
    %v1039 = vunpack.c.0.s8 %v1038
    %v1040 = vperm.slane %v1032, %v1039
    %v1041 = vrot.slane %v530, 4
    %v1042 = vsel %vm581, %v1041, %v522
    %v1043 = vrot.slane %v522, 4
    %v1044 = vsel %vm581, %v530, %v1043
    %v1046 = vunpack.c.l.s4 1983009808
    %v1047 = vunpack.c.0.s8 %v1046
    %v1048 = vperm.slane %v1042, %v1047
    %v1050 = vunpack.c.l.s4 1983009808
    %v1051 = vunpack.c.0.s8 %v1050
    %v1052 = vperm.slane %v1044, %v1051
    %v1053 = vrot.slane %v542, 4
    %v1054 = vsel %vm581, %v1053, %v534
    %v1055 = vrot.slane %v534, 4
    %v1056 = vsel %vm581, %v542, %v1055
    %v1058 = vunpack.c.l.s4 1983009808
    %v1059 = vunpack.c.0.s8 %v1058
    %v1060 = vperm.slane %v1054, %v1059
    %v1062 = vunpack.c.l.s4 1983009808
    %v1063 = vunpack.c.0.s8 %v1062
    %v1064 = vperm.slane %v1056, %v1063
    %v1065 = vrot.slane %v546, 4
    %v1066 = vsel %vm581, %v1065, %v538
    %v1067 = vrot.slane %v538, 4
    %v1068 = vsel %vm581, %v546, %v1067
    %v1070 = vunpack.c.l.s4 1983009808
    %v1071 = vunpack.c.0.s8 %v1070
    %v1072 = vperm.slane %v1066, %v1071
    %v1074 = vunpack.c.l.s4 1983009808
    %v1075 = vunpack.c.0.s8 %v1074
    %v1076 = vperm.slane %v1068, %v1075
    %v1077 = vrot.slane %v1048, 4
    %v1078 = vsel %vm581, %v1077, %v1036
    %v1079 = vrot.slane %v1036, 4
    %v1080 = vsel %vm581, %v1048, %v1079
    %v1082 = vunpack.c.l.s4 1934713408
    %v1083 = vunpack.c.0.s8 %v1082
    %v1084 = vperm.slane %v1078, %v1083
    %v1086 = vunpack.c.l.s4 1934713408
    %v1087 = vunpack.c.0.s8 %v1086
    %v1088 = vperm.slane %v1080, %v1087
    %v1089 = vrot.slane %v1052, 4
    %v1090 = vsel %vm581, %v1089, %v1040
    %v1091 = vrot.slane %v1040, 4
    %v1092 = vsel %vm581, %v1052, %v1091
    %v1094 = vunpack.c.l.s4 1934713408
    %v1095 = vunpack.c.0.s8 %v1094
    %v1096 = vperm.slane %v1090, %v1095
    %v1098 = vunpack.c.l.s4 1934713408
    %v1099 = vunpack.c.0.s8 %v1098
    %v1100 = vperm.slane %v1092, %v1099
    %v1101 = vrot.slane %v1072, 4
    %v1102 = vsel %vm581, %v1101, %v1060
    %v1103 = vrot.slane %v1060, 4
    %v1104 = vsel %vm581, %v1072, %v1103
    %v1106 = vunpack.c.l.s4 1934713408
    %v1107 = vunpack.c.0.s8 %v1106
    %v1108 = vperm.slane %v1102, %v1107
    %v1110 = vunpack.c.l.s4 1934713408
    %v1111 = vunpack.c.0.s8 %v1110
    %v1112 = vperm.slane %v1104, %v1111
    %v1113 = vrot.slane %v1076, 4
    %v1114 = vsel %vm581, %v1113, %v1064
    %v1115 = vrot.slane %v1064, 4
    %v1116 = vsel %vm581, %v1076, %v1115
    %v1118 = vunpack.c.l.s4 1934713408
    %v1119 = vunpack.c.0.s8 %v1118
    %v1120 = vperm.slane %v1114, %v1119
    %v1122 = vunpack.c.l.s4 1934713408
    %v1123 = vunpack.c.0.s8 %v1122
    %v1124 = vperm.slane %v1116, %v1123
    %v1125 = vrot.slane %v1108, 4
    %v1126 = vsel %vm581, %v1125, %v1084
    %v1127 = vrot.slane %v1084, 4
    %v1128 = vsel %vm581, %v1108, %v1127
    %v1129 = vrot.slane %v1112, 4
    %v1130 = vsel %vm581, %v1129, %v1088
    %v1131 = vrot.slane %v1088, 4
    %v1132 = vsel %vm581, %v1112, %v1131
    %v1133 = vrot.slane %v1120, 4
    %v1134 = vsel %vm581, %v1133, %v1096
    %v1135 = vrot.slane %v1096, 4
    %v1136 = vsel %vm581, %v1120, %v1135
    %v1137 = vrot.slane %v1124, 4
    %v1138 = vsel %vm581, %v1137, %v1100
    %v1139 = vrot.slane %v1100, 4
    %v1140 = vsel %vm581, %v1124, %v1139
    %v1141 = vrot.slane %v558, 4
    %v1142 = vsel %vm581, %v1141, %v550
    %v1143 = vrot.slane %v550, 4
    %v1144 = vsel %vm581, %v558, %v1143
    %v1146 = vunpack.c.l.s4 1983009808
    %v1147 = vunpack.c.0.s8 %v1146
    %v1148 = vperm.slane %v1142, %v1147
    %v1150 = vunpack.c.l.s4 1983009808
    %v1151 = vunpack.c.0.s8 %v1150
    %v1152 = vperm.slane %v1144, %v1151
    %v1153 = vrot.slane %v562, 4
    %v1154 = vsel %vm581, %v1153, %v554
    %v1155 = vrot.slane %v554, 4
    %v1156 = vsel %vm581, %v562, %v1155
    %v1158 = vunpack.c.l.s4 1983009808
    %v1159 = vunpack.c.0.s8 %v1158
    %v1160 = vperm.slane %v1154, %v1159
    %v1162 = vunpack.c.l.s4 1983009808
    %v1163 = vunpack.c.0.s8 %v1162
    %v1164 = vperm.slane %v1156, %v1163
    %v1165 = vrot.slane %v574, 4
    %v1166 = vsel %vm581, %v1165, %v566
    %v1167 = vrot.slane %v566, 4
    %v1168 = vsel %vm581, %v574, %v1167
    %v1170 = vunpack.c.l.s4 1983009808
    %v1171 = vunpack.c.0.s8 %v1170
    %v1172 = vperm.slane %v1166, %v1171
    %v1174 = vunpack.c.l.s4 1983009808
    %v1175 = vunpack.c.0.s8 %v1174
    %v1176 = vperm.slane %v1168, %v1175
    %v1177 = vrot.slane %v578, 4
    %v1178 = vsel %vm581, %v1177, %v570
    %v1179 = vrot.slane %v570, 4
    %v1180 = vsel %vm581, %v578, %v1179
    %v1182 = vunpack.c.l.s4 1983009808
    %v1183 = vunpack.c.0.s8 %v1182
    %v1184 = vperm.slane %v1178, %v1183
    %v1186 = vunpack.c.l.s4 1983009808
    %v1187 = vunpack.c.0.s8 %v1186
    %v1188 = vperm.slane %v1180, %v1187
    %v1189 = vrot.slane %v1160, 4
    %v1190 = vsel %vm581, %v1189, %v1148
    %v1191 = vrot.slane %v1148, 4
    %v1192 = vsel %vm581, %v1160, %v1191
    %v1194 = vunpack.c.l.s4 1934713408
    %v1195 = vunpack.c.0.s8 %v1194
    %v1196 = vperm.slane %v1190, %v1195
    %v1198 = vunpack.c.l.s4 1934713408
    %v1199 = vunpack.c.0.s8 %v1198
    %v1200 = vperm.slane %v1192, %v1199
    %v1201 = vrot.slane %v1164, 4
    %v1202 = vsel %vm581, %v1201, %v1152
    %v1203 = vrot.slane %v1152, 4
    %v1204 = vsel %vm581, %v1164, %v1203
    %v1206 = vunpack.c.l.s4 1934713408
    %v1207 = vunpack.c.0.s8 %v1206
    %v1208 = vperm.slane %v1202, %v1207
    %v1210 = vunpack.c.l.s4 1934713408
    %v1211 = vunpack.c.0.s8 %v1210
    %v1212 = vperm.slane %v1204, %v1211
    %v1213 = vrot.slane %v1184, 4
    %v1214 = vsel %vm581, %v1213, %v1172
    %v1215 = vrot.slane %v1172, 4
    %v1216 = vsel %vm581, %v1184, %v1215
    %v1218 = vunpack.c.l.s4 1934713408
    %v1219 = vunpack.c.0.s8 %v1218
    %v1220 = vperm.slane %v1214, %v1219
    %v1222 = vunpack.c.l.s4 1934713408
    %v1223 = vunpack.c.0.s8 %v1222
    %v1224 = vperm.slane %v1216, %v1223
    %v1225 = vrot.slane %v1188, 4
    %v1226 = vsel %vm581, %v1225, %v1176
    %v1227 = vrot.slane %v1176, 4
    %v1228 = vsel %vm581, %v1188, %v1227
    %v1230 = vunpack.c.l.s4 1934713408
    %v1231 = vunpack.c.0.s8 %v1230
    %v1232 = vperm.slane %v1226, %v1231
    %v1234 = vunpack.c.l.s4 1934713408
    %v1235 = vunpack.c.0.s8 %v1234
    %v1236 = vperm.slane %v1228, %v1235
    %v1237 = vrot.slane %v1220, 4
    %v1238 = vsel %vm581, %v1237, %v1196
    %v1239 = vrot.slane %v1196, 4
    %v1240 = vsel %vm581, %v1220, %v1239
    %v1241 = vrot.slane %v1224, 4
    %v1242 = vsel %vm581, %v1241, %v1200
    %v1243 = vrot.slane %v1200, 4
    %v1244 = vsel %vm581, %v1224, %v1243
    %v1245 = vrot.slane %v1232, 4
    %v1246 = vsel %vm581, %v1245, %v1208
    %v1247 = vrot.slane %v1208, 4
    %v1248 = vsel %vm581, %v1232, %v1247
    %v1249 = vrot.slane %v1236, 4
    %v1250 = vsel %vm581, %v1249, %v1212
    %v1251 = vrot.slane %v1212, 4
    %v1252 = vsel %vm581, %v1236, %v1251
    %v1253 = vrot.slane %v527, 4
    %v1254 = vsel %vm581, %v1253, %v519
    %v1255 = vrot.slane %v519, 4
    %v1256 = vsel %vm581, %v527, %v1255
    %v1258 = vunpack.c.l.s4 1983009808
    %v1259 = vunpack.c.0.s8 %v1258
    %v1260 = vperm.slane %v1254, %v1259
    %v1262 = vunpack.c.l.s4 1983009808
    %v1263 = vunpack.c.0.s8 %v1262
    %v1264 = vperm.slane %v1256, %v1263
    %v1265 = vrot.slane %v531, 4
    %v1266 = vsel %vm581, %v1265, %v523
    %v1267 = vrot.slane %v523, 4
    %v1268 = vsel %vm581, %v531, %v1267
    %v1270 = vunpack.c.l.s4 1983009808
    %v1271 = vunpack.c.0.s8 %v1270
    %v1272 = vperm.slane %v1266, %v1271
    %v1274 = vunpack.c.l.s4 1983009808
    %v1275 = vunpack.c.0.s8 %v1274
    %v1276 = vperm.slane %v1268, %v1275
    %v1277 = vrot.slane %v543, 4
    %v1278 = vsel %vm581, %v1277, %v535
    %v1279 = vrot.slane %v535, 4
    %v1280 = vsel %vm581, %v543, %v1279
    %v1282 = vunpack.c.l.s4 1983009808
    %v1283 = vunpack.c.0.s8 %v1282
    %v1284 = vperm.slane %v1278, %v1283
    %v1286 = vunpack.c.l.s4 1983009808
    %v1287 = vunpack.c.0.s8 %v1286
    %v1288 = vperm.slane %v1280, %v1287
    %v1289 = vrot.slane %v547, 4
    %v1290 = vsel %vm581, %v1289, %v539
    %v1291 = vrot.slane %v539, 4
    %v1292 = vsel %vm581, %v547, %v1291
    %v1294 = vunpack.c.l.s4 1983009808
    %v1295 = vunpack.c.0.s8 %v1294
    %v1296 = vperm.slane %v1290, %v1295
    %v1298 = vunpack.c.l.s4 1983009808
    %v1299 = vunpack.c.0.s8 %v1298
    %v1300 = vperm.slane %v1292, %v1299
    %v1301 = vrot.slane %v1272, 4
    %v1302 = vsel %vm581, %v1301, %v1260
    %v1303 = vrot.slane %v1260, 4
    %v1304 = vsel %vm581, %v1272, %v1303
    %v1306 = vunpack.c.l.s4 1934713408
    %v1307 = vunpack.c.0.s8 %v1306
    %v1308 = vperm.slane %v1302, %v1307
    %v1310 = vunpack.c.l.s4 1934713408
    %v1311 = vunpack.c.0.s8 %v1310
    %v1312 = vperm.slane %v1304, %v1311
    %v1313 = vrot.slane %v1276, 4
    %v1314 = vsel %vm581, %v1313, %v1264
    %v1315 = vrot.slane %v1264, 4
    %v1316 = vsel %vm581, %v1276, %v1315
    %v1318 = vunpack.c.l.s4 1934713408
    %v1319 = vunpack.c.0.s8 %v1318
    %v1320 = vperm.slane %v1314, %v1319
    %v1322 = vunpack.c.l.s4 1934713408
    %v1323 = vunpack.c.0.s8 %v1322
    %v1324 = vperm.slane %v1316, %v1323
    %v1325 = vrot.slane %v1296, 4
    %v1326 = vsel %vm581, %v1325, %v1284
    %v1327 = vrot.slane %v1284, 4
    %v1328 = vsel %vm581, %v1296, %v1327
    %v1330 = vunpack.c.l.s4 1934713408
    %v1331 = vunpack.c.0.s8 %v1330
    %v1332 = vperm.slane %v1326, %v1331
    %v1334 = vunpack.c.l.s4 1934713408
    %v1335 = vunpack.c.0.s8 %v1334
    %v1336 = vperm.slane %v1328, %v1335
    %v1337 = vrot.slane %v1300, 4
    %v1338 = vsel %vm581, %v1337, %v1288
    %v1339 = vrot.slane %v1288, 4
    %v1340 = vsel %vm581, %v1300, %v1339
    %v1342 = vunpack.c.l.s4 1934713408
    %v1343 = vunpack.c.0.s8 %v1342
    %v1344 = vperm.slane %v1338, %v1343
    %v1346 = vunpack.c.l.s4 1934713408
    %v1347 = vunpack.c.0.s8 %v1346
    %v1348 = vperm.slane %v1340, %v1347
    %v1349 = vrot.slane %v1332, 4
    %v1350 = vsel %vm581, %v1349, %v1308
    %v1351 = vrot.slane %v1308, 4
    %v1352 = vsel %vm581, %v1332, %v1351
    %v1353 = vrot.slane %v1336, 4
    %v1354 = vsel %vm581, %v1353, %v1312
    %v1355 = vrot.slane %v1312, 4
    %v1356 = vsel %vm581, %v1336, %v1355
    %v1357 = vrot.slane %v1344, 4
    %v1358 = vsel %vm581, %v1357, %v1320
    %v1359 = vrot.slane %v1320, 4
    %v1360 = vsel %vm581, %v1344, %v1359
    %v1361 = vrot.slane %v1348, 4
    %v1362 = vsel %vm581, %v1361, %v1324
    %v1363 = vrot.slane %v1324, 4
    %v1364 = vsel %vm581, %v1348, %v1363
    %v1365 = vrot.slane %v559, 4
    %v1366 = vsel %vm581, %v1365, %v551
    %v1367 = vrot.slane %v551, 4
    %v1368 = vsel %vm581, %v559, %v1367
    %v1370 = vunpack.c.l.s4 1983009808
    %v1371 = vunpack.c.0.s8 %v1370
    %v1372 = vperm.slane %v1366, %v1371
    %v1374 = vunpack.c.l.s4 1983009808
    %v1375 = vunpack.c.0.s8 %v1374
    %v1376 = vperm.slane %v1368, %v1375
    %v1377 = vrot.slane %v563, 4
    %v1378 = vsel %vm581, %v1377, %v555
    %v1379 = vrot.slane %v555, 4
    %v1380 = vsel %vm581, %v563, %v1379
    %v1382 = vunpack.c.l.s4 1983009808
    %v1383 = vunpack.c.0.s8 %v1382
    %v1384 = vperm.slane %v1378, %v1383
    %v1386 = vunpack.c.l.s4 1983009808
    %v1387 = vunpack.c.0.s8 %v1386
    %v1388 = vperm.slane %v1380, %v1387
    %v1389 = vrot.slane %v575, 4
    %v1390 = vsel %vm581, %v1389, %v567
    %v1391 = vrot.slane %v567, 4
    %v1392 = vsel %vm581, %v575, %v1391
    %v1394 = vunpack.c.l.s4 1983009808
    %v1395 = vunpack.c.0.s8 %v1394
    %v1396 = vperm.slane %v1390, %v1395
    %v1398 = vunpack.c.l.s4 1983009808
    %v1399 = vunpack.c.0.s8 %v1398
    %v1400 = vperm.slane %v1392, %v1399
    %v1401 = vrot.slane %v579, 4
    %v1402 = vsel %vm581, %v1401, %v571
    %v1403 = vrot.slane %v571, 4
    %v1404 = vsel %vm581, %v579, %v1403
    %v1406 = vunpack.c.l.s4 1983009808
    %v1407 = vunpack.c.0.s8 %v1406
    %v1408 = vperm.slane %v1402, %v1407
    %v1410 = vunpack.c.l.s4 1983009808
    %v1411 = vunpack.c.0.s8 %v1410
    %v1412 = vperm.slane %v1404, %v1411
    %v1413 = vrot.slane %v1384, 4
    %v1414 = vsel %vm581, %v1413, %v1372
    %v1415 = vrot.slane %v1372, 4
    %v1416 = vsel %vm581, %v1384, %v1415
    %v1418 = vunpack.c.l.s4 1934713408
    %v1419 = vunpack.c.0.s8 %v1418
    %v1420 = vperm.slane %v1414, %v1419
    %v1422 = vunpack.c.l.s4 1934713408
    %v1423 = vunpack.c.0.s8 %v1422
    %v1424 = vperm.slane %v1416, %v1423
    %v1425 = vrot.slane %v1388, 4
    %v1426 = vsel %vm581, %v1425, %v1376
    %v1427 = vrot.slane %v1376, 4
    %v1428 = vsel %vm581, %v1388, %v1427
    %v1430 = vunpack.c.l.s4 1934713408
    %v1431 = vunpack.c.0.s8 %v1430
    %v1432 = vperm.slane %v1426, %v1431
    %v1434 = vunpack.c.l.s4 1934713408
    %v1435 = vunpack.c.0.s8 %v1434
    %v1436 = vperm.slane %v1428, %v1435
    %v1437 = vrot.slane %v1408, 4
    %v1438 = vsel %vm581, %v1437, %v1396
    %v1439 = vrot.slane %v1396, 4
    %v1440 = vsel %vm581, %v1408, %v1439
    %v1442 = vunpack.c.l.s4 1934713408
    %v1443 = vunpack.c.0.s8 %v1442
    %v1444 = vperm.slane %v1438, %v1443
    %v1446 = vunpack.c.l.s4 1934713408
    %v1447 = vunpack.c.0.s8 %v1446
    %v1448 = vperm.slane %v1440, %v1447
    %v1449 = vrot.slane %v1412, 4
    %v1450 = vsel %vm581, %v1449, %v1400
    %v1451 = vrot.slane %v1400, 4
    %v1452 = vsel %vm581, %v1412, %v1451
    %v1454 = vunpack.c.l.s4 1934713408
    %v1455 = vunpack.c.0.s8 %v1454
    %v1456 = vperm.slane %v1450, %v1455
    %v1458 = vunpack.c.l.s4 1934713408
    %v1459 = vunpack.c.0.s8 %v1458
    %v1460 = vperm.slane %v1452, %v1459
    %v1461 = vrot.slane %v1444, 4
    %v1462 = vsel %vm581, %v1461, %v1420
    %v1463 = vrot.slane %v1420, 4
    %v1464 = vsel %vm581, %v1444, %v1463
    %v1465 = vrot.slane %v1448, 4
    %v1466 = vsel %vm581, %v1465, %v1424
    %v1467 = vrot.slane %v1424, 4
    %v1468 = vsel %vm581, %v1448, %v1467
    %v1469 = vrot.slane %v1456, 4
    %v1470 = vsel %vm581, %v1469, %v1432
    %v1471 = vrot.slane %v1432, 4
    %v1472 = vsel %vm581, %v1456, %v1471
    %v1473 = vrot.slane %v1460, 4
    %v1474 = vsel %vm581, %v1473, %v1436
    %v1475 = vrot.slane %v1436, 4
    %v1476 = vsel %vm581, %v1460, %v1475
    %1479 = vrot.lane.b32.xlu0 %v680, 16
    %v1480 = vpop.permute.xlu0 %1479
    %1481 = vrot.lane.b32.xlu0 %v792, 16
    %v1482 = vpop.permute.xlu0 %1481
    %1487 = vrot.lane.b32.xlu0 %v682, 32
    %v1488 = vpop.permute.xlu0 %1487
    %1489 = vrot.lane.b32.xlu0 %v794, 32
    %v1490 = vpop.permute.xlu0 %1489
    %1495 = vrot.lane.b32.xlu0 %v684, 48
    %v1496 = vpop.permute.xlu0 %1495
    %1497 = vrot.lane.b32.xlu0 %v796, 48
    %v1498 = vpop.permute.xlu0 %1497
    %1503 = vrot.lane.b32.xlu0 %v686, 64
    %v1504 = vpop.permute.xlu0 %1503
    %1505 = vrot.lane.b32.xlu0 %v798, 64
    %v1506 = vpop.permute.xlu0 %1505
    %1511 = vrot.lane.b32.xlu0 %v688, 80
    %v1512 = vpop.permute.xlu0 %1511
    %1513 = vrot.lane.b32.xlu0 %v800, 80
    %v1514 = vpop.permute.xlu0 %1513
    %1519 = vrot.lane.b32.xlu0 %v690, 96
    %v1520 = vpop.permute.xlu0 %1519
    %1521 = vrot.lane.b32.xlu0 %v802, 96
    %v1522 = vpop.permute.xlu0 %1521
    %1527 = vrot.lane.b32.xlu0 %v692, 112
    %v1528 = vpop.permute.xlu0 %1527
    %1529 = vrot.lane.b32.xlu0 %v804, 112
    %v1530 = vpop.permute.xlu0 %1529
    %1535 = vrot.lane.b32.xlu0 %v904, 16
    %v1536 = vpop.permute.xlu0 %1535
    %1537 = vrot.lane.b32.xlu0 %v1016, 16
    %v1538 = vpop.permute.xlu0 %1537
    %1543 = vrot.lane.b32.xlu0 %v906, 32
    %v1544 = vpop.permute.xlu0 %1543
    %1545 = vrot.lane.b32.xlu0 %v1018, 32
    %v1546 = vpop.permute.xlu0 %1545
    %1551 = vrot.lane.b32.xlu0 %v908, 48
    %v1552 = vpop.permute.xlu0 %1551
    %1553 = vrot.lane.b32.xlu0 %v1020, 48
    %v1554 = vpop.permute.xlu0 %1553
    %1559 = vrot.lane.b32.xlu0 %v910, 64
    %v1560 = vpop.permute.xlu0 %1559
    %1561 = vrot.lane.b32.xlu0 %v1022, 64
    %v1562 = vpop.permute.xlu0 %1561
    %1567 = vrot.lane.b32.xlu0 %v912, 80
    %v1568 = vpop.permute.xlu0 %1567
    %1569 = vrot.lane.b32.xlu0 %v1024, 80
    %v1570 = vpop.permute.xlu0 %1569
    %1575 = vrot.lane.b32.xlu0 %v914, 96
    %v1576 = vpop.permute.xlu0 %1575
    %1577 = vrot.lane.b32.xlu0 %v1026, 96
    %v1578 = vpop.permute.xlu0 %1577
    %1583 = vrot.lane.b32.xlu0 %v916, 112
    %v1584 = vpop.permute.xlu0 %1583
    %1585 = vrot.lane.b32.xlu0 %v1028, 112
    %v1586 = vpop.permute.xlu0 %1585
    %1591 = vrot.lane.b32.xlu0 %v1128, 16
    %v1592 = vpop.permute.xlu0 %1591
    %1593 = vrot.lane.b32.xlu0 %v1240, 16
    %v1594 = vpop.permute.xlu0 %1593
    %1599 = vrot.lane.b32.xlu0 %v1130, 32
    %v1600 = vpop.permute.xlu0 %1599
    %1601 = vrot.lane.b32.xlu0 %v1242, 32
    %v1602 = vpop.permute.xlu0 %1601
    %1607 = vrot.lane.b32.xlu0 %v1132, 48
    %v1608 = vpop.permute.xlu0 %1607
    %1609 = vrot.lane.b32.xlu0 %v1244, 48
    %v1610 = vpop.permute.xlu0 %1609
    %1615 = vrot.lane.b32.xlu0 %v1134, 64
    %v1616 = vpop.permute.xlu0 %1615
    %1617 = vrot.lane.b32.xlu0 %v1246, 64
    %v1618 = vpop.permute.xlu0 %1617
    %1623 = vrot.lane.b32.xlu0 %v1136, 80
    %v1624 = vpop.permute.xlu0 %1623
    %1625 = vrot.lane.b32.xlu0 %v1248, 80
    %v1626 = vpop.permute.xlu0 %1625
    %1631 = vrot.lane.b32.xlu0 %v1138, 96
    %v1632 = vpop.permute.xlu0 %1631
    %1633 = vrot.lane.b32.xlu0 %v1250, 96
    %v1634 = vpop.permute.xlu0 %1633
    %1639 = vrot.lane.b32.xlu0 %v1140, 112
    %v1640 = vpop.permute.xlu0 %1639
    %1641 = vrot.lane.b32.xlu0 %v1252, 112
    %v1642 = vpop.permute.xlu0 %1641
    %1647 = vrot.lane.b32.xlu0 %v1352, 16
    %v1648 = vpop.permute.xlu0 %1647
    %1649 = vrot.lane.b32.xlu0 %v1464, 16
    %v1650 = vpop.permute.xlu0 %1649
    %1655 = vrot.lane.b32.xlu0 %v1354, 32
    %v1656 = vpop.permute.xlu0 %1655
    %1657 = vrot.lane.b32.xlu0 %v1466, 32
    %v1658 = vpop.permute.xlu0 %1657
    %1663 = vrot.lane.b32.xlu0 %v1356, 48
    %v1664 = vpop.permute.xlu0 %1663
    %1665 = vrot.lane.b32.xlu0 %v1468, 48
    %v1666 = vpop.permute.xlu0 %1665
    %1671 = vrot.lane.b32.xlu0 %v1358, 64
    %v1672 = vpop.permute.xlu0 %1671
    %1673 = vrot.lane.b32.xlu0 %v1470, 64
    %v1674 = vpop.permute.xlu0 %1673
    %1679 = vrot.lane.b32.xlu0 %v1360, 80
    %v1680 = vpop.permute.xlu0 %1679
    %1681 = vrot.lane.b32.xlu0 %v1472, 80
    %v1682 = vpop.permute.xlu0 %1681
    %1687 = vrot.lane.b32.xlu0 %v1362, 96
    %v1688 = vpop.permute.xlu0 %1687
    %1689 = vrot.lane.b32.xlu0 %v1474, 96
    %v1690 = vpop.permute.xlu0 %1689
    %1695 = vrot.lane.b32.xlu0 %v1364, 112
    %v1696 = vpop.permute.xlu0 %1695
    %1697 = vrot.lane.b32.xlu0 %v1476, 112
    %v1698 = vpop.permute.xlu0 %1697
    %vm1701 = vcmask 130048
    %v1702 = vsel %vm1701, %v678, %v1480
    %v1703 = vsel %vm1701, %v790, %v1482
    %v1704 = vsel %vm43, %v1702, %v1488
    %v1705 = vsel %vm43, %v1703, %v1490
    %vm1706 = vcmask 392192
    %v1707 = vsel %vm1706, %v1704, %v1496
    %v1708 = vsel %vm1706, %v1705, %v1498
    %vm1709 = vcmask 523264
    %v1710 = vsel %vm1709, %v1707, %v1504
    %v1711 = vsel %vm1709, %v1708, %v1506
    %vm1712 = vcmask 654336
    %v1713 = vsel %vm1712, %v1710, %v1512
    %v1714 = vsel %vm1712, %v1711, %v1514
    %vm1715 = vcmask 785408
    %v1716 = vsel %vm1715, %v1713, %v1520
    %v1717 = vsel %vm1715, %v1714, %v1522
    %vm1718 = vcmask 916480
    %v1719 = vsel %vm1718, %v1716, %v1528
    %v1720 = vsel %vm1718, %v1717, %v1530
    %v1721 = vsel %vm1701, %v902, %v1536
    %v1722 = vsel %vm1701, %v1014, %v1538
    %v1723 = vsel %vm43, %v1721, %v1544
    %v1724 = vsel %vm43, %v1722, %v1546
    %v1725 = vsel %vm1706, %v1723, %v1552
    %v1726 = vsel %vm1706, %v1724, %v1554
    %v1727 = vsel %vm1709, %v1725, %v1560
    %v1728 = vsel %vm1709, %v1726, %v1562
    %v1729 = vsel %vm1712, %v1727, %v1568
    %v1730 = vsel %vm1712, %v1728, %v1570
    %v1731 = vsel %vm1715, %v1729, %v1576
    %v1732 = vsel %vm1715, %v1730, %v1578
    %v1733 = vsel %vm1718, %v1731, %v1584
    %v1734 = vsel %vm1718, %v1732, %v1586
    %v1735 = vsel %vm1701, %v1126, %v1592
    %v1736 = vsel %vm1701, %v1238, %v1594
    %v1737 = vsel %vm43, %v1735, %v1600
    %v1738 = vsel %vm43, %v1736, %v1602
    %v1739 = vsel %vm1706, %v1737, %v1608
    %v1740 = vsel %vm1706, %v1738, %v1610
    %v1741 = vsel %vm1709, %v1739, %v1616
    %v1742 = vsel %vm1709, %v1740, %v1618
    %v1743 = vsel %vm1712, %v1741, %v1624
    %v1744 = vsel %vm1712, %v1742, %v1626
    %v1745 = vsel %vm1715, %v1743, %v1632
    %v1746 = vsel %vm1715, %v1744, %v1634
    %v1747 = vsel %vm1718, %v1745, %v1640
    %v1748 = vsel %vm1718, %v1746, %v1642
    %v1749 = vsel %vm1701, %v1350, %v1648
    %v1750 = vsel %vm1701, %v1462, %v1650
    %v1751 = vsel %vm43, %v1749, %v1656
    %v1752 = vsel %vm43, %v1750, %v1658
    %v1753 = vsel %vm1706, %v1751, %v1664
    %v1754 = vsel %vm1706, %v1752, %v1666
    %v1755 = vsel %vm1709, %v1753, %v1672
    %v1756 = vsel %vm1709, %v1754, %v1674
    %v1757 = vsel %vm1712, %v1755, %v1680
    %v1758 = vsel %vm1712, %v1756, %v1682
    %v1759 = vsel %vm1715, %v1757, %v1688
    %v1760 = vsel %vm1715, %v1758, %v1690
    %v1761 = vsel %vm1718, %v1759, %v1696
    %v1762 = vsel %vm1718, %v1760, %v1698
    %v1763 = vmul.f32 %v111, %v29
    %v1764 = vmul.f32 %v114, %v30
    %v1765 = vperm.slane %v1763, 0
    %v1766 = vlaneseq
    %v1767 = vshrl.u32 %v1766, 7
    %1769 = vset.pattern.permute.xlu0 %v1767
    %1770 = vperm.xlu0 %1769, %v1765
    %v1771 = vpop.permute.xlu0 %1770
    %v1772 = vlaneseq
    %v1773 = vshrl.u32 %v1772, 7
    %v1774 = vadd.s32 %v1773, 8
    %1775 = vset.pattern.permute.xlu0 %v1774
    %1776 = vperm.xlu0 %1775, %v1765
    %v1777 = vpop.permute.xlu0 %1776
    %v1778 = vlaneseq
    %v1779 = vshrl.u32 %v1778, 7
    %v1780 = vadd.s32 %v1779, 16
    %1781 = vset.pattern.permute.xlu0 %v1780
    %1782 = vperm.xlu0 %1781, %v1765
    %v1783 = vpop.permute.xlu0 %1782
    %v1784 = vlaneseq
    %v1785 = vshrl.u32 %v1784, 7
    %v1786 = vadd.s32 %v1785, 24
    %1787 = vset.pattern.permute.xlu0 %v1786
    %1788 = vperm.xlu0 %1787, %v1765
    %v1789 = vpop.permute.xlu0 %1788
    %v1790 = vperm.slane %v1763, 1
    %v1791 = vlaneseq
    %v1792 = vshrl.u32 %v1791, 7
    %1794 = vset.pattern.permute.xlu0 %v1792
    %1795 = vperm.xlu0 %1794, %v1790
    %v1796 = vpop.permute.xlu0 %1795
    %v1797 = vlaneseq
    %v1798 = vshrl.u32 %v1797, 7
    %v1799 = vadd.s32 %v1798, 8
    %1800 = vset.pattern.permute.xlu0 %v1799
    %1801 = vperm.xlu0 %1800, %v1790
    %v1802 = vpop.permute.xlu0 %1801
    %v1803 = vlaneseq
    %v1804 = vshrl.u32 %v1803, 7
    %v1805 = vadd.s32 %v1804, 16
    %1806 = vset.pattern.permute.xlu0 %v1805
    %1807 = vperm.xlu0 %1806, %v1790
    %v1808 = vpop.permute.xlu0 %1807
    %v1809 = vlaneseq
    %v1810 = vshrl.u32 %v1809, 7
    %v1811 = vadd.s32 %v1810, 24
    %1812 = vset.pattern.permute.xlu0 %v1811
    %1813 = vperm.xlu0 %1812, %v1790
    %v1814 = vpop.permute.xlu0 %1813
    %v1815 = vperm.slane %v1763, 2
    %v1816 = vlaneseq
    %v1817 = vshrl.u32 %v1816, 7
    %1819 = vset.pattern.permute.xlu0 %v1817
    %1820 = vperm.xlu0 %1819, %v1815
    %v1821 = vpop.permute.xlu0 %1820
    %v1822 = vlaneseq
    %v1823 = vshrl.u32 %v1822, 7
    %v1824 = vadd.s32 %v1823, 8
    %1825 = vset.pattern.permute.xlu0 %v1824
    %1826 = vperm.xlu0 %1825, %v1815
    %v1827 = vpop.permute.xlu0 %1826
    %v1828 = vlaneseq
    %v1829 = vshrl.u32 %v1828, 7
    %v1830 = vadd.s32 %v1829, 16
    %1831 = vset.pattern.permute.xlu0 %v1830
    %1832 = vperm.xlu0 %1831, %v1815
    %v1833 = vpop.permute.xlu0 %1832
    %v1834 = vlaneseq
    %v1835 = vshrl.u32 %v1834, 7
    %v1836 = vadd.s32 %v1835, 24
    %1837 = vset.pattern.permute.xlu0 %v1836
    %1838 = vperm.xlu0 %1837, %v1815
    %v1839 = vpop.permute.xlu0 %1838
    %v1840 = vperm.slane %v1763, 3
    %v1841 = vlaneseq
    %v1842 = vshrl.u32 %v1841, 7
    %1844 = vset.pattern.permute.xlu0 %v1842
    %1845 = vperm.xlu0 %1844, %v1840
    %v1846 = vpop.permute.xlu0 %1845
    %v1847 = vlaneseq
    %v1848 = vshrl.u32 %v1847, 7
    %v1849 = vadd.s32 %v1848, 8
    %1850 = vset.pattern.permute.xlu0 %v1849
    %1851 = vperm.xlu0 %1850, %v1840
    %v1852 = vpop.permute.xlu0 %1851
    %v1853 = vlaneseq
    %v1854 = vshrl.u32 %v1853, 7
    %v1855 = vadd.s32 %v1854, 16
    %1856 = vset.pattern.permute.xlu0 %v1855
    %1857 = vperm.xlu0 %1856, %v1840
    %v1858 = vpop.permute.xlu0 %1857
    %v1859 = vlaneseq
    %v1860 = vshrl.u32 %v1859, 7
    %v1861 = vadd.s32 %v1860, 24
    %1862 = vset.pattern.permute.xlu0 %v1861
    %1863 = vperm.xlu0 %1862, %v1840
    %v1864 = vpop.permute.xlu0 %1863
    %v1865 = vperm.slane %v1763, 4
    %v1866 = vlaneseq
    %v1867 = vshrl.u32 %v1866, 7
    %1869 = vset.pattern.permute.xlu0 %v1867
    %1870 = vperm.xlu0 %1869, %v1865
    %v1871 = vpop.permute.xlu0 %1870
    %v1872 = vlaneseq
    %v1873 = vshrl.u32 %v1872, 7
    %v1874 = vadd.s32 %v1873, 8
    %1875 = vset.pattern.permute.xlu0 %v1874
    %1876 = vperm.xlu0 %1875, %v1865
    %v1877 = vpop.permute.xlu0 %1876
    %v1878 = vlaneseq
    %v1879 = vshrl.u32 %v1878, 7
    %v1880 = vadd.s32 %v1879, 16
    %1881 = vset.pattern.permute.xlu0 %v1880
    %1882 = vperm.xlu0 %1881, %v1865
    %v1883 = vpop.permute.xlu0 %1882
    %v1884 = vlaneseq
    %v1885 = vshrl.u32 %v1884, 7
    %v1886 = vadd.s32 %v1885, 24
    %1887 = vset.pattern.permute.xlu0 %v1886
    %1888 = vperm.xlu0 %1887, %v1865
    %v1889 = vpop.permute.xlu0 %1888
    %v1890 = vperm.slane %v1763, 5
    %v1891 = vlaneseq
    %v1892 = vshrl.u32 %v1891, 7
    %1894 = vset.pattern.permute.xlu0 %v1892
    %1895 = vperm.xlu0 %1894, %v1890
    %v1896 = vpop.permute.xlu0 %1895
    %v1897 = vlaneseq
    %v1898 = vshrl.u32 %v1897, 7
    %v1899 = vadd.s32 %v1898, 8
    %1900 = vset.pattern.permute.xlu0 %v1899
    %1901 = vperm.xlu0 %1900, %v1890
    %v1902 = vpop.permute.xlu0 %1901
    %v1903 = vlaneseq
    %v1904 = vshrl.u32 %v1903, 7
    %v1905 = vadd.s32 %v1904, 16
    %1906 = vset.pattern.permute.xlu0 %v1905
    %1907 = vperm.xlu0 %1906, %v1890
    %v1908 = vpop.permute.xlu0 %1907
    %v1909 = vlaneseq
    %v1910 = vshrl.u32 %v1909, 7
    %v1911 = vadd.s32 %v1910, 24
    %1912 = vset.pattern.permute.xlu0 %v1911
    %1913 = vperm.xlu0 %1912, %v1890
    %v1914 = vpop.permute.xlu0 %1913
    %v1915 = vperm.slane %v1763, 6
    %v1916 = vlaneseq
    %v1917 = vshrl.u32 %v1916, 7
    %1919 = vset.pattern.permute.xlu0 %v1917
    %1920 = vperm.xlu0 %1919, %v1915
    %v1921 = vpop.permute.xlu0 %1920
    %v1922 = vlaneseq
    %v1923 = vshrl.u32 %v1922, 7
    %v1924 = vadd.s32 %v1923, 8
    %1925 = vset.pattern.permute.xlu0 %v1924
    %1926 = vperm.xlu0 %1925, %v1915
    %v1927 = vpop.permute.xlu0 %1926
    %v1928 = vlaneseq
    %v1929 = vshrl.u32 %v1928, 7
    %v1930 = vadd.s32 %v1929, 16
    %1931 = vset.pattern.permute.xlu0 %v1930
    %1932 = vperm.xlu0 %1931, %v1915
    %v1933 = vpop.permute.xlu0 %1932
    %v1934 = vlaneseq
    %v1935 = vshrl.u32 %v1934, 7
    %v1936 = vadd.s32 %v1935, 24
    %1937 = vset.pattern.permute.xlu0 %v1936
    %1938 = vperm.xlu0 %1937, %v1915
    %v1939 = vpop.permute.xlu0 %1938
    %v1940 = vperm.slane %v1763, 7
    %v1941 = vlaneseq
    %v1942 = vshrl.u32 %v1941, 7
    %1944 = vset.pattern.permute.xlu0 %v1942
    %1945 = vperm.xlu0 %1944, %v1940
    %v1946 = vpop.permute.xlu0 %1945
    %v1947 = vlaneseq
    %v1948 = vshrl.u32 %v1947, 7
    %v1949 = vadd.s32 %v1948, 8
    %1950 = vset.pattern.permute.xlu0 %v1949
    %1951 = vperm.xlu0 %1950, %v1940
    %v1952 = vpop.permute.xlu0 %1951
    %v1953 = vlaneseq
    %v1954 = vshrl.u32 %v1953, 7
    %v1955 = vadd.s32 %v1954, 16
    %1956 = vset.pattern.permute.xlu0 %v1955
    %1957 = vperm.xlu0 %1956, %v1940
    %v1958 = vpop.permute.xlu0 %1957
    %v1959 = vlaneseq
    %v1960 = vshrl.u32 %v1959, 7
    %v1961 = vadd.s32 %v1960, 24
    %1962 = vset.pattern.permute.xlu0 %v1961
    %1963 = vperm.xlu0 %1962, %v1940
    %v1964 = vpop.permute.xlu0 %1963
    %v1965 = vperm.slane %v1764, 0
    %v1966 = vlaneseq
    %v1967 = vshrl.u32 %v1966, 7
    %1969 = vset.pattern.permute.xlu0 %v1967
    %1970 = vperm.xlu0 %1969, %v1965
    %v1971 = vpop.permute.xlu0 %1970
    %v1972 = vlaneseq
    %v1973 = vshrl.u32 %v1972, 7
    %v1974 = vadd.s32 %v1973, 8
    %1975 = vset.pattern.permute.xlu0 %v1974
    %1976 = vperm.xlu0 %1975, %v1965
    %v1977 = vpop.permute.xlu0 %1976
    %v1978 = vlaneseq
    %v1979 = vshrl.u32 %v1978, 7
    %v1980 = vadd.s32 %v1979, 16
    %1981 = vset.pattern.permute.xlu0 %v1980
    %1982 = vperm.xlu0 %1981, %v1965
    %v1983 = vpop.permute.xlu0 %1982
    %v1984 = vlaneseq
    %v1985 = vshrl.u32 %v1984, 7
    %v1986 = vadd.s32 %v1985, 24
    %1987 = vset.pattern.permute.xlu0 %v1986
    %1988 = vperm.xlu0 %1987, %v1965
    %v1989 = vpop.permute.xlu0 %1988
    %v1990 = vperm.slane %v1764, 1
    %v1991 = vlaneseq
    %v1992 = vshrl.u32 %v1991, 7
    %1994 = vset.pattern.permute.xlu0 %v1992
    %1995 = vperm.xlu0 %1994, %v1990
    %v1996 = vpop.permute.xlu0 %1995
    %v1997 = vlaneseq
    %v1998 = vshrl.u32 %v1997, 7
    %v1999 = vadd.s32 %v1998, 8
    %2000 = vset.pattern.permute.xlu0 %v1999
    %2001 = vperm.xlu0 %2000, %v1990
    %v2002 = vpop.permute.xlu0 %2001
    %v2003 = vlaneseq
    %v2004 = vshrl.u32 %v2003, 7
    %v2005 = vadd.s32 %v2004, 16
    %2006 = vset.pattern.permute.xlu0 %v2005
    %2007 = vperm.xlu0 %2006, %v1990
    %v2008 = vpop.permute.xlu0 %2007
    %v2009 = vlaneseq
    %v2010 = vshrl.u32 %v2009, 7
    %v2011 = vadd.s32 %v2010, 24
    %2012 = vset.pattern.permute.xlu0 %v2011
    %2013 = vperm.xlu0 %2012, %v1990
    %v2014 = vpop.permute.xlu0 %2013
    %v2015 = vperm.slane %v1764, 2
    %v2016 = vlaneseq
    %v2017 = vshrl.u32 %v2016, 7
    %2019 = vset.pattern.permute.xlu0 %v2017
    %2020 = vperm.xlu0 %2019, %v2015
    %v2021 = vpop.permute.xlu0 %2020
    %v2022 = vlaneseq
    %v2023 = vshrl.u32 %v2022, 7
    %v2024 = vadd.s32 %v2023, 8
    %2025 = vset.pattern.permute.xlu0 %v2024
    %2026 = vperm.xlu0 %2025, %v2015
    %v2027 = vpop.permute.xlu0 %2026
    %v2028 = vlaneseq
    %v2029 = vshrl.u32 %v2028, 7
    %v2030 = vadd.s32 %v2029, 16
    %2031 = vset.pattern.permute.xlu0 %v2030
    %2032 = vperm.xlu0 %2031, %v2015
    %v2033 = vpop.permute.xlu0 %2032
    %v2034 = vlaneseq
    %v2035 = vshrl.u32 %v2034, 7
    %v2036 = vadd.s32 %v2035, 24
    %2037 = vset.pattern.permute.xlu0 %v2036
    %2038 = vperm.xlu0 %2037, %v2015
    %v2039 = vpop.permute.xlu0 %2038
    %v2040 = vperm.slane %v1764, 3
    %v2041 = vlaneseq
    %v2042 = vshrl.u32 %v2041, 7
    %2044 = vset.pattern.permute.xlu0 %v2042
    %2045 = vperm.xlu0 %2044, %v2040
    %v2046 = vpop.permute.xlu0 %2045
    %v2047 = vlaneseq
    %v2048 = vshrl.u32 %v2047, 7
    %v2049 = vadd.s32 %v2048, 8
    %2050 = vset.pattern.permute.xlu0 %v2049
    %2051 = vperm.xlu0 %2050, %v2040
    %v2052 = vpop.permute.xlu0 %2051
    %v2053 = vlaneseq
    %v2054 = vshrl.u32 %v2053, 7
    %v2055 = vadd.s32 %v2054, 16
    %2056 = vset.pattern.permute.xlu0 %v2055
    %2057 = vperm.xlu0 %2056, %v2040
    %v2058 = vpop.permute.xlu0 %2057
    %v2059 = vlaneseq
    %v2060 = vshrl.u32 %v2059, 7
    %v2061 = vadd.s32 %v2060, 24
    %2062 = vset.pattern.permute.xlu0 %v2061
    %2063 = vperm.xlu0 %2062, %v2040
    %v2064 = vpop.permute.xlu0 %2063
    %v2065 = vperm.slane %v1764, 4
    %v2066 = vlaneseq
    %v2067 = vshrl.u32 %v2066, 7
    %2069 = vset.pattern.permute.xlu0 %v2067
    %2070 = vperm.xlu0 %2069, %v2065
    %v2071 = vpop.permute.xlu0 %2070
    %v2072 = vlaneseq
    %v2073 = vshrl.u32 %v2072, 7
    %v2074 = vadd.s32 %v2073, 8
    %2075 = vset.pattern.permute.xlu0 %v2074
    %2076 = vperm.xlu0 %2075, %v2065
    %v2077 = vpop.permute.xlu0 %2076
    %v2078 = vlaneseq
    %v2079 = vshrl.u32 %v2078, 7
    %v2080 = vadd.s32 %v2079, 16
    %2081 = vset.pattern.permute.xlu0 %v2080
    %2082 = vperm.xlu0 %2081, %v2065
    %v2083 = vpop.permute.xlu0 %2082
    %v2084 = vlaneseq
    %v2085 = vshrl.u32 %v2084, 7
    %v2086 = vadd.s32 %v2085, 24
    %2087 = vset.pattern.permute.xlu0 %v2086
    %2088 = vperm.xlu0 %2087, %v2065
    %v2089 = vpop.permute.xlu0 %2088
    %v2090 = vperm.slane %v1764, 5
    %v2091 = vlaneseq
    %v2092 = vshrl.u32 %v2091, 7
    %2094 = vset.pattern.permute.xlu0 %v2092
    %2095 = vperm.xlu0 %2094, %v2090
    %v2096 = vpop.permute.xlu0 %2095
    %v2097 = vlaneseq
    %v2098 = vshrl.u32 %v2097, 7
    %v2099 = vadd.s32 %v2098, 8
    %2100 = vset.pattern.permute.xlu0 %v2099
    %2101 = vperm.xlu0 %2100, %v2090
    %v2102 = vpop.permute.xlu0 %2101
    %v2103 = vlaneseq
    %v2104 = vshrl.u32 %v2103, 7
    %v2105 = vadd.s32 %v2104, 16
    %2106 = vset.pattern.permute.xlu0 %v2105
    %2107 = vperm.xlu0 %2106, %v2090
    %v2108 = vpop.permute.xlu0 %2107
    %v2109 = vlaneseq
    %v2110 = vshrl.u32 %v2109, 7
    %v2111 = vadd.s32 %v2110, 24
    %2112 = vset.pattern.permute.xlu0 %v2111
    %2113 = vperm.xlu0 %2112, %v2090
    %v2114 = vpop.permute.xlu0 %2113
    %v2115 = vperm.slane %v1764, 6
    %v2116 = vlaneseq
    %v2117 = vshrl.u32 %v2116, 7
    %2119 = vset.pattern.permute.xlu0 %v2117
    %2120 = vperm.xlu0 %2119, %v2115
    %v2121 = vpop.permute.xlu0 %2120
    %v2122 = vlaneseq
    %v2123 = vshrl.u32 %v2122, 7
    %v2124 = vadd.s32 %v2123, 8
    %2125 = vset.pattern.permute.xlu0 %v2124
    %2126 = vperm.xlu0 %2125, %v2115
    %v2127 = vpop.permute.xlu0 %2126
    %v2128 = vlaneseq
    %v2129 = vshrl.u32 %v2128, 7
    %v2130 = vadd.s32 %v2129, 16
    %2131 = vset.pattern.permute.xlu0 %v2130
    %2132 = vperm.xlu0 %2131, %v2115
    %v2133 = vpop.permute.xlu0 %2132
    %v2134 = vlaneseq
    %v2135 = vshrl.u32 %v2134, 7
    %v2136 = vadd.s32 %v2135, 24
    %2137 = vset.pattern.permute.xlu0 %v2136
    %2138 = vperm.xlu0 %2137, %v2115
    %v2139 = vpop.permute.xlu0 %2138
    %v2140 = vperm.slane %v1764, 7
    %v2141 = vlaneseq
    %v2142 = vshrl.u32 %v2141, 7
    %2144 = vset.pattern.permute.xlu0 %v2142
    %2145 = vperm.xlu0 %2144, %v2140
    %v2146 = vpop.permute.xlu0 %2145
    %v2147 = vlaneseq
    %v2148 = vshrl.u32 %v2147, 7
    %v2149 = vadd.s32 %v2148, 8
    %2150 = vset.pattern.permute.xlu0 %v2149
    %2151 = vperm.xlu0 %2150, %v2140
    %v2152 = vpop.permute.xlu0 %2151
    %v2153 = vlaneseq
    %v2154 = vshrl.u32 %v2153, 7
    %v2155 = vadd.s32 %v2154, 16
    %2156 = vset.pattern.permute.xlu0 %v2155
    %2157 = vperm.xlu0 %2156, %v2140
    %v2158 = vpop.permute.xlu0 %2157
    %v2159 = vlaneseq
    %v2160 = vshrl.u32 %v2159, 7
    %v2161 = vadd.s32 %v2160, 24
    %2162 = vset.pattern.permute.xlu0 %v2161
    %2163 = vperm.xlu0 %2162, %v2140
    %v2164 = vpop.permute.xlu0 %2163
    %v2165 = vrot.slane %v68, 1
    %v2166 = vrot.slane %v68, 2
    %v2167 = vrot.slane %v68, 3
    %v2168 = vrot.slane %v68, 4
    %v2169 = vrot.slane %v68, 5
    %v2170 = vrot.slane %v68, 6
    %v2171 = vrot.slane %v68, 7
    %v2172 = vrot.slane %v71, 1
    %v2173 = vrot.slane %v71, 2
    %v2174 = vrot.slane %v71, 3
    %v2175 = vrot.slane %v71, 4
    %v2176 = vrot.slane %v71, 5
    %v2177 = vrot.slane %v71, 6
    %v2178 = vrot.slane %v71, 7
    %v2179 = vperm.slane %v68, 0
    %v2180 = vperm.slane %v2165, 0
    %v2181 = vperm.slane %v2166, 0
    %v2182 = vperm.slane %v2167, 0
    %v2183 = vperm.slane %v2168, 0
    %v2184 = vperm.slane %v2169, 0
    %v2185 = vperm.slane %v2170, 0
    %v2186 = vperm.slane %v2171, 0
    %v2187 = vperm.slane %v71, 0
    %v2188 = vperm.slane %v2172, 0
    %v2189 = vperm.slane %v2173, 0
    %v2190 = vperm.slane %v2174, 0
    %v2191 = vperm.slane %v2175, 0
    %v2192 = vperm.slane %v2176, 0
    %v2193 = vperm.slane %v2177, 0
    %v2194 = vperm.slane %v2178, 0
    %v2211 = vmul.f32 %v1771, %v2179
    %v2212 = vmul.f32 %v1777, %v2179
    %v2213 = vmul.f32 %v1783, %v2179
    %v2214 = vmul.f32 %v1789, %v2179
    %v2215 = vmul.f32 %v1796, %v2180
    %v2216 = vmul.f32 %v1802, %v2180
    %v2217 = vmul.f32 %v1808, %v2180
    %v2218 = vmul.f32 %v1814, %v2180
    %v2219 = vmul.f32 %v1821, %v2181
    %v2220 = vmul.f32 %v1827, %v2181
    %v2221 = vmul.f32 %v1833, %v2181
    %v2222 = vmul.f32 %v1839, %v2181
    %v2223 = vmul.f32 %v1846, %v2182
    %v2224 = vmul.f32 %v1852, %v2182
    %v2225 = vmul.f32 %v1858, %v2182
    %v2226 = vmul.f32 %v1864, %v2182
    %v2227 = vmul.f32 %v1871, %v2183
    %v2228 = vmul.f32 %v1877, %v2183
    %v2229 = vmul.f32 %v1883, %v2183
    %v2230 = vmul.f32 %v1889, %v2183
    %v2231 = vmul.f32 %v1896, %v2184
    %v2232 = vmul.f32 %v1902, %v2184
    %v2233 = vmul.f32 %v1908, %v2184
    %v2234 = vmul.f32 %v1914, %v2184
    %v2235 = vmul.f32 %v1921, %v2185
    %v2236 = vmul.f32 %v1927, %v2185
    %v2237 = vmul.f32 %v1933, %v2185
    %v2238 = vmul.f32 %v1939, %v2185
    %v2239 = vmul.f32 %v1946, %v2186
    %v2240 = vmul.f32 %v1952, %v2186
    %v2241 = vmul.f32 %v1958, %v2186
    %v2242 = vmul.f32 %v1964, %v2186
    %v2243 = vmul.f32 %v1971, %v2187
    %v2244 = vmul.f32 %v1977, %v2187
    %v2245 = vmul.f32 %v1983, %v2187
    %v2246 = vmul.f32 %v1989, %v2187
    %v2247 = vmul.f32 %v1996, %v2188
    %v2248 = vmul.f32 %v2002, %v2188
    %v2249 = vmul.f32 %v2008, %v2188
    %v2250 = vmul.f32 %v2014, %v2188
    %v2251 = vmul.f32 %v2021, %v2189
    %v2252 = vmul.f32 %v2027, %v2189
    %v2253 = vmul.f32 %v2033, %v2189
    %v2254 = vmul.f32 %v2039, %v2189
    %v2255 = vmul.f32 %v2046, %v2190
    %v2256 = vmul.f32 %v2052, %v2190
    %v2257 = vmul.f32 %v2058, %v2190
    %v2258 = vmul.f32 %v2064, %v2190
    %v2259 = vmul.f32 %v2071, %v2191
    %v2260 = vmul.f32 %v2077, %v2191
    %v2261 = vmul.f32 %v2083, %v2191
    %v2262 = vmul.f32 %v2089, %v2191
    %v2263 = vmul.f32 %v2096, %v2192
    %v2264 = vmul.f32 %v2102, %v2192
    %v2265 = vmul.f32 %v2108, %v2192
    %v2266 = vmul.f32 %v2114, %v2192
    %v2267 = vmul.f32 %v2121, %v2193
    %v2268 = vmul.f32 %v2127, %v2193
    %v2269 = vmul.f32 %v2133, %v2193
    %v2270 = vmul.f32 %v2139, %v2193
    %v2271 = vmul.f32 %v2146, %v2194
    %v2272 = vmul.f32 %v2152, %v2194
    %v2273 = vmul.f32 %v2158, %v2194
    %v2274 = vmul.f32 %v2164, %v2194
    %v2275 = vrot.slane %v2219, 4
    %v2276 = vsel %vm581, %v2275, %v2211
    %v2277 = vrot.slane %v2211, 4
    %v2278 = vsel %vm581, %v2219, %v2277
    %v2280 = vunpack.c.l.s4 1983009808
    %v2281 = vunpack.c.0.s8 %v2280
    %v2282 = vperm.slane %v2276, %v2281
    %v2284 = vunpack.c.l.s4 1983009808
    %v2285 = vunpack.c.0.s8 %v2284
    %v2286 = vperm.slane %v2278, %v2285
    %v2287 = vrot.slane %v2223, 4
    %v2288 = vsel %vm581, %v2287, %v2215
    %v2289 = vrot.slane %v2215, 4
    %v2290 = vsel %vm581, %v2223, %v2289
    %v2292 = vunpack.c.l.s4 1983009808
    %v2293 = vunpack.c.0.s8 %v2292
    %v2294 = vperm.slane %v2288, %v2293
    %v2296 = vunpack.c.l.s4 1983009808
    %v2297 = vunpack.c.0.s8 %v2296
    %v2298 = vperm.slane %v2290, %v2297
    %v2299 = vrot.slane %v2235, 4
    %v2300 = vsel %vm581, %v2299, %v2227
    %v2301 = vrot.slane %v2227, 4
    %v2302 = vsel %vm581, %v2235, %v2301
    %v2304 = vunpack.c.l.s4 1983009808
    %v2305 = vunpack.c.0.s8 %v2304
    %v2306 = vperm.slane %v2300, %v2305
    %v2308 = vunpack.c.l.s4 1983009808
    %v2309 = vunpack.c.0.s8 %v2308
    %v2310 = vperm.slane %v2302, %v2309
    %v2311 = vrot.slane %v2239, 4
    %v2312 = vsel %vm581, %v2311, %v2231
    %v2313 = vrot.slane %v2231, 4
    %v2314 = vsel %vm581, %v2239, %v2313
    %v2316 = vunpack.c.l.s4 1983009808
    %v2317 = vunpack.c.0.s8 %v2316
    %v2318 = vperm.slane %v2312, %v2317
    %v2320 = vunpack.c.l.s4 1983009808
    %v2321 = vunpack.c.0.s8 %v2320
    %v2322 = vperm.slane %v2314, %v2321
    %v2323 = vrot.slane %v2294, 4
    %v2324 = vsel %vm581, %v2323, %v2282
    %v2325 = vrot.slane %v2282, 4
    %v2326 = vsel %vm581, %v2294, %v2325
    %v2328 = vunpack.c.l.s4 1934713408
    %v2329 = vunpack.c.0.s8 %v2328
    %v2330 = vperm.slane %v2324, %v2329
    %v2332 = vunpack.c.l.s4 1934713408
    %v2333 = vunpack.c.0.s8 %v2332
    %v2334 = vperm.slane %v2326, %v2333
    %v2335 = vrot.slane %v2298, 4
    %v2336 = vsel %vm581, %v2335, %v2286
    %v2337 = vrot.slane %v2286, 4
    %v2338 = vsel %vm581, %v2298, %v2337
    %v2340 = vunpack.c.l.s4 1934713408
    %v2341 = vunpack.c.0.s8 %v2340
    %v2342 = vperm.slane %v2336, %v2341
    %v2344 = vunpack.c.l.s4 1934713408
    %v2345 = vunpack.c.0.s8 %v2344
    %v2346 = vperm.slane %v2338, %v2345
    %v2347 = vrot.slane %v2318, 4
    %v2348 = vsel %vm581, %v2347, %v2306
    %v2349 = vrot.slane %v2306, 4
    %v2350 = vsel %vm581, %v2318, %v2349
    %v2352 = vunpack.c.l.s4 1934713408
    %v2353 = vunpack.c.0.s8 %v2352
    %v2354 = vperm.slane %v2348, %v2353
    %v2356 = vunpack.c.l.s4 1934713408
    %v2357 = vunpack.c.0.s8 %v2356
    %v2358 = vperm.slane %v2350, %v2357
    %v2359 = vrot.slane %v2322, 4
    %v2360 = vsel %vm581, %v2359, %v2310
    %v2361 = vrot.slane %v2310, 4
    %v2362 = vsel %vm581, %v2322, %v2361
    %v2364 = vunpack.c.l.s4 1934713408
    %v2365 = vunpack.c.0.s8 %v2364
    %v2366 = vperm.slane %v2360, %v2365
    %v2368 = vunpack.c.l.s4 1934713408
    %v2369 = vunpack.c.0.s8 %v2368
    %v2370 = vperm.slane %v2362, %v2369
    %v2371 = vrot.slane %v2354, 4
    %v2372 = vsel %vm581, %v2371, %v2330
    %v2373 = vrot.slane %v2330, 4
    %v2374 = vsel %vm581, %v2354, %v2373
    %v2375 = vrot.slane %v2358, 4
    %v2376 = vsel %vm581, %v2375, %v2334
    %v2377 = vrot.slane %v2334, 4
    %v2378 = vsel %vm581, %v2358, %v2377
    %v2379 = vrot.slane %v2366, 4
    %v2380 = vsel %vm581, %v2379, %v2342
    %v2381 = vrot.slane %v2342, 4
    %v2382 = vsel %vm581, %v2366, %v2381
    %v2383 = vrot.slane %v2370, 4
    %v2384 = vsel %vm581, %v2383, %v2346
    %v2385 = vrot.slane %v2346, 4
    %v2386 = vsel %vm581, %v2370, %v2385
    %v2387 = vrot.slane %v2251, 4
    %v2388 = vsel %vm581, %v2387, %v2243
    %v2389 = vrot.slane %v2243, 4
    %v2390 = vsel %vm581, %v2251, %v2389
    %v2392 = vunpack.c.l.s4 1983009808
    %v2393 = vunpack.c.0.s8 %v2392
    %v2394 = vperm.slane %v2388, %v2393
    %v2396 = vunpack.c.l.s4 1983009808
    %v2397 = vunpack.c.0.s8 %v2396
    %v2398 = vperm.slane %v2390, %v2397
    %v2399 = vrot.slane %v2255, 4
    %v2400 = vsel %vm581, %v2399, %v2247
    %v2401 = vrot.slane %v2247, 4
    %v2402 = vsel %vm581, %v2255, %v2401
    %v2404 = vunpack.c.l.s4 1983009808
    %v2405 = vunpack.c.0.s8 %v2404
    %v2406 = vperm.slane %v2400, %v2405
    %v2408 = vunpack.c.l.s4 1983009808
    %v2409 = vunpack.c.0.s8 %v2408
    %v2410 = vperm.slane %v2402, %v2409
    %v2411 = vrot.slane %v2267, 4
    %v2412 = vsel %vm581, %v2411, %v2259
    %v2413 = vrot.slane %v2259, 4
    %v2414 = vsel %vm581, %v2267, %v2413
    %v2416 = vunpack.c.l.s4 1983009808
    %v2417 = vunpack.c.0.s8 %v2416
    %v2418 = vperm.slane %v2412, %v2417
    %v2420 = vunpack.c.l.s4 1983009808
    %v2421 = vunpack.c.0.s8 %v2420
    %v2422 = vperm.slane %v2414, %v2421
    %v2423 = vrot.slane %v2271, 4
    %v2424 = vsel %vm581, %v2423, %v2263
    %v2425 = vrot.slane %v2263, 4
    %v2426 = vsel %vm581, %v2271, %v2425
    %v2428 = vunpack.c.l.s4 1983009808
    %v2429 = vunpack.c.0.s8 %v2428
    %v2430 = vperm.slane %v2424, %v2429
    %v2432 = vunpack.c.l.s4 1983009808
    %v2433 = vunpack.c.0.s8 %v2432
    %v2434 = vperm.slane %v2426, %v2433
    %v2435 = vrot.slane %v2406, 4
    %v2436 = vsel %vm581, %v2435, %v2394
    %v2437 = vrot.slane %v2394, 4
    %v2438 = vsel %vm581, %v2406, %v2437
    %v2440 = vunpack.c.l.s4 1934713408
    %v2441 = vunpack.c.0.s8 %v2440
    %v2442 = vperm.slane %v2436, %v2441
    %v2444 = vunpack.c.l.s4 1934713408
    %v2445 = vunpack.c.0.s8 %v2444
    %v2446 = vperm.slane %v2438, %v2445
    %v2447 = vrot.slane %v2410, 4
    %v2448 = vsel %vm581, %v2447, %v2398
    %v2449 = vrot.slane %v2398, 4
    %v2450 = vsel %vm581, %v2410, %v2449
    %v2452 = vunpack.c.l.s4 1934713408
    %v2453 = vunpack.c.0.s8 %v2452
    %v2454 = vperm.slane %v2448, %v2453
    %v2456 = vunpack.c.l.s4 1934713408
    %v2457 = vunpack.c.0.s8 %v2456
    %v2458 = vperm.slane %v2450, %v2457
    %v2459 = vrot.slane %v2430, 4
    %v2460 = vsel %vm581, %v2459, %v2418
    %v2461 = vrot.slane %v2418, 4
    %v2462 = vsel %vm581, %v2430, %v2461
    %v2464 = vunpack.c.l.s4 1934713408
    %v2465 = vunpack.c.0.s8 %v2464
    %v2466 = vperm.slane %v2460, %v2465
    %v2468 = vunpack.c.l.s4 1934713408
    %v2469 = vunpack.c.0.s8 %v2468
    %v2470 = vperm.slane %v2462, %v2469
    %v2471 = vrot.slane %v2434, 4
    %v2472 = vsel %vm581, %v2471, %v2422
    %v2473 = vrot.slane %v2422, 4
    %v2474 = vsel %vm581, %v2434, %v2473
    %v2476 = vunpack.c.l.s4 1934713408
    %v2477 = vunpack.c.0.s8 %v2476
    %v2478 = vperm.slane %v2472, %v2477
    %v2480 = vunpack.c.l.s4 1934713408
    %v2481 = vunpack.c.0.s8 %v2480
    %v2482 = vperm.slane %v2474, %v2481
    %v2483 = vrot.slane %v2466, 4
    %v2484 = vsel %vm581, %v2483, %v2442
    %v2485 = vrot.slane %v2442, 4
    %v2486 = vsel %vm581, %v2466, %v2485
    %v2487 = vrot.slane %v2470, 4
    %v2488 = vsel %vm581, %v2487, %v2446
    %v2489 = vrot.slane %v2446, 4
    %v2490 = vsel %vm581, %v2470, %v2489
    %v2491 = vrot.slane %v2478, 4
    %v2492 = vsel %vm581, %v2491, %v2454
    %v2493 = vrot.slane %v2454, 4
    %v2494 = vsel %vm581, %v2478, %v2493
    %v2495 = vrot.slane %v2482, 4
    %v2496 = vsel %vm581, %v2495, %v2458
    %v2497 = vrot.slane %v2458, 4
    %v2498 = vsel %vm581, %v2482, %v2497
    %v2499 = vrot.slane %v2220, 4
    %v2500 = vsel %vm581, %v2499, %v2212
    %v2501 = vrot.slane %v2212, 4
    %v2502 = vsel %vm581, %v2220, %v2501
    %v2504 = vunpack.c.l.s4 1983009808
    %v2505 = vunpack.c.0.s8 %v2504
    %v2506 = vperm.slane %v2500, %v2505
    %v2508 = vunpack.c.l.s4 1983009808
    %v2509 = vunpack.c.0.s8 %v2508
    %v2510 = vperm.slane %v2502, %v2509
    %v2511 = vrot.slane %v2224, 4
    %v2512 = vsel %vm581, %v2511, %v2216
    %v2513 = vrot.slane %v2216, 4
    %v2514 = vsel %vm581, %v2224, %v2513
    %v2516 = vunpack.c.l.s4 1983009808
    %v2517 = vunpack.c.0.s8 %v2516
    %v2518 = vperm.slane %v2512, %v2517
    %v2520 = vunpack.c.l.s4 1983009808
    %v2521 = vunpack.c.0.s8 %v2520
    %v2522 = vperm.slane %v2514, %v2521
    %v2523 = vrot.slane %v2236, 4
    %v2524 = vsel %vm581, %v2523, %v2228
    %v2525 = vrot.slane %v2228, 4
    %v2526 = vsel %vm581, %v2236, %v2525
    %v2528 = vunpack.c.l.s4 1983009808
    %v2529 = vunpack.c.0.s8 %v2528
    %v2530 = vperm.slane %v2524, %v2529
    %v2532 = vunpack.c.l.s4 1983009808
    %v2533 = vunpack.c.0.s8 %v2532
    %v2534 = vperm.slane %v2526, %v2533
    %v2535 = vrot.slane %v2240, 4
    %v2536 = vsel %vm581, %v2535, %v2232
    %v2537 = vrot.slane %v2232, 4
    %v2538 = vsel %vm581, %v2240, %v2537
    %v2540 = vunpack.c.l.s4 1983009808
    %v2541 = vunpack.c.0.s8 %v2540
    %v2542 = vperm.slane %v2536, %v2541
    %v2544 = vunpack.c.l.s4 1983009808
    %v2545 = vunpack.c.0.s8 %v2544
    %v2546 = vperm.slane %v2538, %v2545
    %v2547 = vrot.slane %v2518, 4
    %v2548 = vsel %vm581, %v2547, %v2506
    %v2549 = vrot.slane %v2506, 4
    %v2550 = vsel %vm581, %v2518, %v2549
    %v2552 = vunpack.c.l.s4 1934713408
    %v2553 = vunpack.c.0.s8 %v2552
    %v2554 = vperm.slane %v2548, %v2553
    %v2556 = vunpack.c.l.s4 1934713408
    %v2557 = vunpack.c.0.s8 %v2556
    %v2558 = vperm.slane %v2550, %v2557
    %v2559 = vrot.slane %v2522, 4
    %v2560 = vsel %vm581, %v2559, %v2510
    %v2561 = vrot.slane %v2510, 4
    %v2562 = vsel %vm581, %v2522, %v2561
    %v2564 = vunpack.c.l.s4 1934713408
    %v2565 = vunpack.c.0.s8 %v2564
    %v2566 = vperm.slane %v2560, %v2565
    %v2568 = vunpack.c.l.s4 1934713408
    %v2569 = vunpack.c.0.s8 %v2568
    %v2570 = vperm.slane %v2562, %v2569
    %v2571 = vrot.slane %v2542, 4
    %v2572 = vsel %vm581, %v2571, %v2530
    %v2573 = vrot.slane %v2530, 4
    %v2574 = vsel %vm581, %v2542, %v2573
    %v2576 = vunpack.c.l.s4 1934713408
    %v2577 = vunpack.c.0.s8 %v2576
    %v2578 = vperm.slane %v2572, %v2577
    %v2580 = vunpack.c.l.s4 1934713408
    %v2581 = vunpack.c.0.s8 %v2580
    %v2582 = vperm.slane %v2574, %v2581
    %v2583 = vrot.slane %v2546, 4
    %v2584 = vsel %vm581, %v2583, %v2534
    %v2585 = vrot.slane %v2534, 4
    %v2586 = vsel %vm581, %v2546, %v2585
    %v2588 = vunpack.c.l.s4 1934713408
    %v2589 = vunpack.c.0.s8 %v2588
    %v2590 = vperm.slane %v2584, %v2589
    %v2592 = vunpack.c.l.s4 1934713408
    %v2593 = vunpack.c.0.s8 %v2592
    %v2594 = vperm.slane %v2586, %v2593
    %v2595 = vrot.slane %v2578, 4
    %v2596 = vsel %vm581, %v2595, %v2554
    %v2597 = vrot.slane %v2554, 4
    %v2598 = vsel %vm581, %v2578, %v2597
    %v2599 = vrot.slane %v2582, 4
    %v2600 = vsel %vm581, %v2599, %v2558
    %v2601 = vrot.slane %v2558, 4
    %v2602 = vsel %vm581, %v2582, %v2601
    %v2603 = vrot.slane %v2590, 4
    %v2604 = vsel %vm581, %v2603, %v2566
    %v2605 = vrot.slane %v2566, 4
    %v2606 = vsel %vm581, %v2590, %v2605
    %v2607 = vrot.slane %v2594, 4
    %v2608 = vsel %vm581, %v2607, %v2570
    %v2609 = vrot.slane %v2570, 4
    %v2610 = vsel %vm581, %v2594, %v2609
    %v2611 = vrot.slane %v2252, 4
    %v2612 = vsel %vm581, %v2611, %v2244
    %v2613 = vrot.slane %v2244, 4
    %v2614 = vsel %vm581, %v2252, %v2613
    %v2616 = vunpack.c.l.s4 1983009808
    %v2617 = vunpack.c.0.s8 %v2616
    %v2618 = vperm.slane %v2612, %v2617
    %v2620 = vunpack.c.l.s4 1983009808
    %v2621 = vunpack.c.0.s8 %v2620
    %v2622 = vperm.slane %v2614, %v2621
    %v2623 = vrot.slane %v2256, 4
    %v2624 = vsel %vm581, %v2623, %v2248
    %v2625 = vrot.slane %v2248, 4
    %v2626 = vsel %vm581, %v2256, %v2625
    %v2628 = vunpack.c.l.s4 1983009808
    %v2629 = vunpack.c.0.s8 %v2628
    %v2630 = vperm.slane %v2624, %v2629
    %v2632 = vunpack.c.l.s4 1983009808
    %v2633 = vunpack.c.0.s8 %v2632
    %v2634 = vperm.slane %v2626, %v2633
    %v2635 = vrot.slane %v2268, 4
    %v2636 = vsel %vm581, %v2635, %v2260
    %v2637 = vrot.slane %v2260, 4
    %v2638 = vsel %vm581, %v2268, %v2637
    %v2640 = vunpack.c.l.s4 1983009808
    %v2641 = vunpack.c.0.s8 %v2640
    %v2642 = vperm.slane %v2636, %v2641
    %v2644 = vunpack.c.l.s4 1983009808
    %v2645 = vunpack.c.0.s8 %v2644
    %v2646 = vperm.slane %v2638, %v2645
    %v2647 = vrot.slane %v2272, 4
    %v2648 = vsel %vm581, %v2647, %v2264
    %v2649 = vrot.slane %v2264, 4
    %v2650 = vsel %vm581, %v2272, %v2649
    %v2652 = vunpack.c.l.s4 1983009808
    %v2653 = vunpack.c.0.s8 %v2652
    %v2654 = vperm.slane %v2648, %v2653
    %v2656 = vunpack.c.l.s4 1983009808
    %v2657 = vunpack.c.0.s8 %v2656
    %v2658 = vperm.slane %v2650, %v2657
    %v2659 = vrot.slane %v2630, 4
    %v2660 = vsel %vm581, %v2659, %v2618
    %v2661 = vrot.slane %v2618, 4
    %v2662 = vsel %vm581, %v2630, %v2661
    %v2664 = vunpack.c.l.s4 1934713408
    %v2665 = vunpack.c.0.s8 %v2664
    %v2666 = vperm.slane %v2660, %v2665
    %v2668 = vunpack.c.l.s4 1934713408
    %v2669 = vunpack.c.0.s8 %v2668
    %v2670 = vperm.slane %v2662, %v2669
    %v2671 = vrot.slane %v2634, 4
    %v2672 = vsel %vm581, %v2671, %v2622
    %v2673 = vrot.slane %v2622, 4
    %v2674 = vsel %vm581, %v2634, %v2673
    %v2676 = vunpack.c.l.s4 1934713408
    %v2677 = vunpack.c.0.s8 %v2676
    %v2678 = vperm.slane %v2672, %v2677
    %v2680 = vunpack.c.l.s4 1934713408
    %v2681 = vunpack.c.0.s8 %v2680
    %v2682 = vperm.slane %v2674, %v2681
    %v2683 = vrot.slane %v2654, 4
    %v2684 = vsel %vm581, %v2683, %v2642
    %v2685 = vrot.slane %v2642, 4
    %v2686 = vsel %vm581, %v2654, %v2685
    %v2688 = vunpack.c.l.s4 1934713408
    %v2689 = vunpack.c.0.s8 %v2688
    %v2690 = vperm.slane %v2684, %v2689
    %v2692 = vunpack.c.l.s4 1934713408
    %v2693 = vunpack.c.0.s8 %v2692
    %v2694 = vperm.slane %v2686, %v2693
    %v2695 = vrot.slane %v2658, 4
    %v2696 = vsel %vm581, %v2695, %v2646
    %v2697 = vrot.slane %v2646, 4
    %v2698 = vsel %vm581, %v2658, %v2697
    %v2700 = vunpack.c.l.s4 1934713408
    %v2701 = vunpack.c.0.s8 %v2700
    %v2702 = vperm.slane %v2696, %v2701
    %v2704 = vunpack.c.l.s4 1934713408
    %v2705 = vunpack.c.0.s8 %v2704
    %v2706 = vperm.slane %v2698, %v2705
    %v2707 = vrot.slane %v2690, 4
    %v2708 = vsel %vm581, %v2707, %v2666
    %v2709 = vrot.slane %v2666, 4
    %v2710 = vsel %vm581, %v2690, %v2709
    %v2711 = vrot.slane %v2694, 4
    %v2712 = vsel %vm581, %v2711, %v2670
    %v2713 = vrot.slane %v2670, 4
    %v2714 = vsel %vm581, %v2694, %v2713
    %v2715 = vrot.slane %v2702, 4
    %v2716 = vsel %vm581, %v2715, %v2678
    %v2717 = vrot.slane %v2678, 4
    %v2718 = vsel %vm581, %v2702, %v2717
    %v2719 = vrot.slane %v2706, 4
    %v2720 = vsel %vm581, %v2719, %v2682
    %v2721 = vrot.slane %v2682, 4
    %v2722 = vsel %vm581, %v2706, %v2721
    %v2723 = vrot.slane %v2221, 4
    %v2724 = vsel %vm581, %v2723, %v2213
    %v2725 = vrot.slane %v2213, 4
    %v2726 = vsel %vm581, %v2221, %v2725
    %v2728 = vunpack.c.l.s4 1983009808
    %v2729 = vunpack.c.0.s8 %v2728
    %v2730 = vperm.slane %v2724, %v2729
    %v2732 = vunpack.c.l.s4 1983009808
    %v2733 = vunpack.c.0.s8 %v2732
    %v2734 = vperm.slane %v2726, %v2733
    %v2735 = vrot.slane %v2225, 4
    %v2736 = vsel %vm581, %v2735, %v2217
    %v2737 = vrot.slane %v2217, 4
    %v2738 = vsel %vm581, %v2225, %v2737
    %v2740 = vunpack.c.l.s4 1983009808
    %v2741 = vunpack.c.0.s8 %v2740
    %v2742 = vperm.slane %v2736, %v2741
    %v2744 = vunpack.c.l.s4 1983009808
    %v2745 = vunpack.c.0.s8 %v2744
    %v2746 = vperm.slane %v2738, %v2745
    %v2747 = vrot.slane %v2237, 4
    %v2748 = vsel %vm581, %v2747, %v2229
    %v2749 = vrot.slane %v2229, 4
    %v2750 = vsel %vm581, %v2237, %v2749
    %v2752 = vunpack.c.l.s4 1983009808
    %v2753 = vunpack.c.0.s8 %v2752
    %v2754 = vperm.slane %v2748, %v2753
    %v2756 = vunpack.c.l.s4 1983009808
    %v2757 = vunpack.c.0.s8 %v2756
    %v2758 = vperm.slane %v2750, %v2757
    %v2759 = vrot.slane %v2241, 4
    %v2760 = vsel %vm581, %v2759, %v2233
    %v2761 = vrot.slane %v2233, 4
    %v2762 = vsel %vm581, %v2241, %v2761
    %v2764 = vunpack.c.l.s4 1983009808
    %v2765 = vunpack.c.0.s8 %v2764
    %v2766 = vperm.slane %v2760, %v2765
    %v2768 = vunpack.c.l.s4 1983009808
    %v2769 = vunpack.c.0.s8 %v2768
    %v2770 = vperm.slane %v2762, %v2769
    %v2771 = vrot.slane %v2742, 4
    %v2772 = vsel %vm581, %v2771, %v2730
    %v2773 = vrot.slane %v2730, 4
    %v2774 = vsel %vm581, %v2742, %v2773
    %v2776 = vunpack.c.l.s4 1934713408
    %v2777 = vunpack.c.0.s8 %v2776
    %v2778 = vperm.slane %v2772, %v2777
    %v2780 = vunpack.c.l.s4 1934713408
    %v2781 = vunpack.c.0.s8 %v2780
    %v2782 = vperm.slane %v2774, %v2781
    %v2783 = vrot.slane %v2746, 4
    %v2784 = vsel %vm581, %v2783, %v2734
    %v2785 = vrot.slane %v2734, 4
    %v2786 = vsel %vm581, %v2746, %v2785
    %v2788 = vunpack.c.l.s4 1934713408
    %v2789 = vunpack.c.0.s8 %v2788
    %v2790 = vperm.slane %v2784, %v2789
    %v2792 = vunpack.c.l.s4 1934713408
    %v2793 = vunpack.c.0.s8 %v2792
    %v2794 = vperm.slane %v2786, %v2793
    %v2795 = vrot.slane %v2766, 4
    %v2796 = vsel %vm581, %v2795, %v2754
    %v2797 = vrot.slane %v2754, 4
    %v2798 = vsel %vm581, %v2766, %v2797
    %v2800 = vunpack.c.l.s4 1934713408
    %v2801 = vunpack.c.0.s8 %v2800
    %v2802 = vperm.slane %v2796, %v2801
    %v2804 = vunpack.c.l.s4 1934713408
    %v2805 = vunpack.c.0.s8 %v2804
    %v2806 = vperm.slane %v2798, %v2805
    %v2807 = vrot.slane %v2770, 4
    %v2808 = vsel %vm581, %v2807, %v2758
    %v2809 = vrot.slane %v2758, 4
    %v2810 = vsel %vm581, %v2770, %v2809
    %v2812 = vunpack.c.l.s4 1934713408
    %v2813 = vunpack.c.0.s8 %v2812
    %v2814 = vperm.slane %v2808, %v2813
    %v2816 = vunpack.c.l.s4 1934713408
    %v2817 = vunpack.c.0.s8 %v2816
    %v2818 = vperm.slane %v2810, %v2817
    %v2819 = vrot.slane %v2802, 4
    %v2820 = vsel %vm581, %v2819, %v2778
    %v2821 = vrot.slane %v2778, 4
    %v2822 = vsel %vm581, %v2802, %v2821
    %v2823 = vrot.slane %v2806, 4
    %v2824 = vsel %vm581, %v2823, %v2782
    %v2825 = vrot.slane %v2782, 4
    %v2826 = vsel %vm581, %v2806, %v2825
    %v2827 = vrot.slane %v2814, 4
    %v2828 = vsel %vm581, %v2827, %v2790
    %v2829 = vrot.slane %v2790, 4
    %v2830 = vsel %vm581, %v2814, %v2829
    %v2831 = vrot.slane %v2818, 4
    %v2832 = vsel %vm581, %v2831, %v2794
    %v2833 = vrot.slane %v2794, 4
    %v2834 = vsel %vm581, %v2818, %v2833
    %v2835 = vrot.slane %v2253, 4
    %v2836 = vsel %vm581, %v2835, %v2245
    %v2837 = vrot.slane %v2245, 4
    %v2838 = vsel %vm581, %v2253, %v2837
    %v2840 = vunpack.c.l.s4 1983009808
    %v2841 = vunpack.c.0.s8 %v2840
    %v2842 = vperm.slane %v2836, %v2841
    %v2844 = vunpack.c.l.s4 1983009808
    %v2845 = vunpack.c.0.s8 %v2844
    %v2846 = vperm.slane %v2838, %v2845
    %v2847 = vrot.slane %v2257, 4
    %v2848 = vsel %vm581, %v2847, %v2249
    %v2849 = vrot.slane %v2249, 4
    %v2850 = vsel %vm581, %v2257, %v2849
    %v2852 = vunpack.c.l.s4 1983009808
    %v2853 = vunpack.c.0.s8 %v2852
    %v2854 = vperm.slane %v2848, %v2853
    %v2856 = vunpack.c.l.s4 1983009808
    %v2857 = vunpack.c.0.s8 %v2856
    %v2858 = vperm.slane %v2850, %v2857
    %v2859 = vrot.slane %v2269, 4
    %v2860 = vsel %vm581, %v2859, %v2261
    %v2861 = vrot.slane %v2261, 4
    %v2862 = vsel %vm581, %v2269, %v2861
    %v2864 = vunpack.c.l.s4 1983009808
    %v2865 = vunpack.c.0.s8 %v2864
    %v2866 = vperm.slane %v2860, %v2865
    %v2868 = vunpack.c.l.s4 1983009808
    %v2869 = vunpack.c.0.s8 %v2868
    %v2870 = vperm.slane %v2862, %v2869
    %v2871 = vrot.slane %v2273, 4
    %v2872 = vsel %vm581, %v2871, %v2265
    %v2873 = vrot.slane %v2265, 4
    %v2874 = vsel %vm581, %v2273, %v2873
    %v2876 = vunpack.c.l.s4 1983009808
    %v2877 = vunpack.c.0.s8 %v2876
    %v2878 = vperm.slane %v2872, %v2877
    %v2880 = vunpack.c.l.s4 1983009808
    %v2881 = vunpack.c.0.s8 %v2880
    %v2882 = vperm.slane %v2874, %v2881
    %v2883 = vrot.slane %v2854, 4
    %v2884 = vsel %vm581, %v2883, %v2842
    %v2885 = vrot.slane %v2842, 4
    %v2886 = vsel %vm581, %v2854, %v2885
    %v2888 = vunpack.c.l.s4 1934713408
    %v2889 = vunpack.c.0.s8 %v2888
    %v2890 = vperm.slane %v2884, %v2889
    %v2892 = vunpack.c.l.s4 1934713408
    %v2893 = vunpack.c.0.s8 %v2892
    %v2894 = vperm.slane %v2886, %v2893
    %v2895 = vrot.slane %v2858, 4
    %v2896 = vsel %vm581, %v2895, %v2846
    %v2897 = vrot.slane %v2846, 4
    %v2898 = vsel %vm581, %v2858, %v2897
    %v2900 = vunpack.c.l.s4 1934713408
    %v2901 = vunpack.c.0.s8 %v2900
    %v2902 = vperm.slane %v2896, %v2901
    %v2904 = vunpack.c.l.s4 1934713408
    %v2905 = vunpack.c.0.s8 %v2904
    %v2906 = vperm.slane %v2898, %v2905
    %v2907 = vrot.slane %v2878, 4
    %v2908 = vsel %vm581, %v2907, %v2866
    %v2909 = vrot.slane %v2866, 4
    %v2910 = vsel %vm581, %v2878, %v2909
    %v2912 = vunpack.c.l.s4 1934713408
    %v2913 = vunpack.c.0.s8 %v2912
    %v2914 = vperm.slane %v2908, %v2913
    %v2916 = vunpack.c.l.s4 1934713408
    %v2917 = vunpack.c.0.s8 %v2916
    %v2918 = vperm.slane %v2910, %v2917
    %v2919 = vrot.slane %v2882, 4
    %v2920 = vsel %vm581, %v2919, %v2870
    %v2921 = vrot.slane %v2870, 4
    %v2922 = vsel %vm581, %v2882, %v2921
    %v2924 = vunpack.c.l.s4 1934713408
    %v2925 = vunpack.c.0.s8 %v2924
    %v2926 = vperm.slane %v2920, %v2925
    %v2928 = vunpack.c.l.s4 1934713408
    %v2929 = vunpack.c.0.s8 %v2928
    %v2930 = vperm.slane %v2922, %v2929
    %v2931 = vrot.slane %v2914, 4
    %v2932 = vsel %vm581, %v2931, %v2890
    %v2933 = vrot.slane %v2890, 4
    %v2934 = vsel %vm581, %v2914, %v2933
    %v2935 = vrot.slane %v2918, 4
    %v2936 = vsel %vm581, %v2935, %v2894
    %v2937 = vrot.slane %v2894, 4
    %v2938 = vsel %vm581, %v2918, %v2937
    %v2939 = vrot.slane %v2926, 4
    %v2940 = vsel %vm581, %v2939, %v2902
    %v2941 = vrot.slane %v2902, 4
    %v2942 = vsel %vm581, %v2926, %v2941
    %v2943 = vrot.slane %v2930, 4
    %v2944 = vsel %vm581, %v2943, %v2906
    %v2945 = vrot.slane %v2906, 4
    %v2946 = vsel %vm581, %v2930, %v2945
    %v2947 = vrot.slane %v2222, 4
    %v2948 = vsel %vm581, %v2947, %v2214
    %v2949 = vrot.slane %v2214, 4
    %v2950 = vsel %vm581, %v2222, %v2949
    %v2952 = vunpack.c.l.s4 1983009808
    %v2953 = vunpack.c.0.s8 %v2952
    %v2954 = vperm.slane %v2948, %v2953
    %v2956 = vunpack.c.l.s4 1983009808
    %v2957 = vunpack.c.0.s8 %v2956
    %v2958 = vperm.slane %v2950, %v2957
    %v2959 = vrot.slane %v2226, 4
    %v2960 = vsel %vm581, %v2959, %v2218
    %v2961 = vrot.slane %v2218, 4
    %v2962 = vsel %vm581, %v2226, %v2961
    %v2964 = vunpack.c.l.s4 1983009808
    %v2965 = vunpack.c.0.s8 %v2964
    %v2966 = vperm.slane %v2960, %v2965
    %v2968 = vunpack.c.l.s4 1983009808
    %v2969 = vunpack.c.0.s8 %v2968
    %v2970 = vperm.slane %v2962, %v2969
    %v2971 = vrot.slane %v2238, 4
    %v2972 = vsel %vm581, %v2971, %v2230
    %v2973 = vrot.slane %v2230, 4
    %v2974 = vsel %vm581, %v2238, %v2973
    %v2976 = vunpack.c.l.s4 1983009808
    %v2977 = vunpack.c.0.s8 %v2976
    %v2978 = vperm.slane %v2972, %v2977
    %v2980 = vunpack.c.l.s4 1983009808
    %v2981 = vunpack.c.0.s8 %v2980
    %v2982 = vperm.slane %v2974, %v2981
    %v2983 = vrot.slane %v2242, 4
    %v2984 = vsel %vm581, %v2983, %v2234
    %v2985 = vrot.slane %v2234, 4
    %v2986 = vsel %vm581, %v2242, %v2985
    %v2988 = vunpack.c.l.s4 1983009808
    %v2989 = vunpack.c.0.s8 %v2988
    %v2990 = vperm.slane %v2984, %v2989
    %v2992 = vunpack.c.l.s4 1983009808
    %v2993 = vunpack.c.0.s8 %v2992
    %v2994 = vperm.slane %v2986, %v2993
    %v2995 = vrot.slane %v2966, 4
    %v2996 = vsel %vm581, %v2995, %v2954
    %v2997 = vrot.slane %v2954, 4
    %v2998 = vsel %vm581, %v2966, %v2997
    %v3000 = vunpack.c.l.s4 1934713408
    %v3001 = vunpack.c.0.s8 %v3000
    %v3002 = vperm.slane %v2996, %v3001
    %v3004 = vunpack.c.l.s4 1934713408
    %v3005 = vunpack.c.0.s8 %v3004
    %v3006 = vperm.slane %v2998, %v3005
    %v3007 = vrot.slane %v2970, 4
    %v3008 = vsel %vm581, %v3007, %v2958
    %v3009 = vrot.slane %v2958, 4
    %v3010 = vsel %vm581, %v2970, %v3009
    %v3012 = vunpack.c.l.s4 1934713408
    %v3013 = vunpack.c.0.s8 %v3012
    %v3014 = vperm.slane %v3008, %v3013
    %v3016 = vunpack.c.l.s4 1934713408
    %v3017 = vunpack.c.0.s8 %v3016
    %v3018 = vperm.slane %v3010, %v3017
    %v3019 = vrot.slane %v2990, 4
    %v3020 = vsel %vm581, %v3019, %v2978
    %v3021 = vrot.slane %v2978, 4
    %v3022 = vsel %vm581, %v2990, %v3021
    %v3024 = vunpack.c.l.s4 1934713408
    %v3025 = vunpack.c.0.s8 %v3024
    %v3026 = vperm.slane %v3020, %v3025
    %v3028 = vunpack.c.l.s4 1934713408
    %v3029 = vunpack.c.0.s8 %v3028
    %v3030 = vperm.slane %v3022, %v3029
    %v3031 = vrot.slane %v2994, 4
    %v3032 = vsel %vm581, %v3031, %v2982
    %v3033 = vrot.slane %v2982, 4
    %v3034 = vsel %vm581, %v2994, %v3033
    %v3036 = vunpack.c.l.s4 1934713408
    %v3037 = vunpack.c.0.s8 %v3036
    %v3038 = vperm.slane %v3032, %v3037
    %v3040 = vunpack.c.l.s4 1934713408
    %v3041 = vunpack.c.0.s8 %v3040
    %v3042 = vperm.slane %v3034, %v3041
    %v3043 = vrot.slane %v3026, 4
    %v3044 = vsel %vm581, %v3043, %v3002
    %v3045 = vrot.slane %v3002, 4
    %v3046 = vsel %vm581, %v3026, %v3045
    %v3047 = vrot.slane %v3030, 4
    %v3048 = vsel %vm581, %v3047, %v3006
    %v3049 = vrot.slane %v3006, 4
    %v3050 = vsel %vm581, %v3030, %v3049
    %v3051 = vrot.slane %v3038, 4
    %v3052 = vsel %vm581, %v3051, %v3014
    %v3053 = vrot.slane %v3014, 4
    %v3054 = vsel %vm581, %v3038, %v3053
    %v3055 = vrot.slane %v3042, 4
    %v3056 = vsel %vm581, %v3055, %v3018
    %v3057 = vrot.slane %v3018, 4
    %v3058 = vsel %vm581, %v3042, %v3057
    %v3059 = vrot.slane %v2254, 4
    %v3060 = vsel %vm581, %v3059, %v2246
    %v3061 = vrot.slane %v2246, 4
    %v3062 = vsel %vm581, %v2254, %v3061
    %v3064 = vunpack.c.l.s4 1983009808
    %v3065 = vunpack.c.0.s8 %v3064
    %v3066 = vperm.slane %v3060, %v3065
    %v3068 = vunpack.c.l.s4 1983009808
    %v3069 = vunpack.c.0.s8 %v3068
    %v3070 = vperm.slane %v3062, %v3069
    %v3071 = vrot.slane %v2258, 4
    %v3072 = vsel %vm581, %v3071, %v2250
    %v3073 = vrot.slane %v2250, 4
    %v3074 = vsel %vm581, %v2258, %v3073
    %v3076 = vunpack.c.l.s4 1983009808
    %v3077 = vunpack.c.0.s8 %v3076
    %v3078 = vperm.slane %v3072, %v3077
    %v3080 = vunpack.c.l.s4 1983009808
    %v3081 = vunpack.c.0.s8 %v3080
    %v3082 = vperm.slane %v3074, %v3081
    %v3083 = vrot.slane %v2270, 4
    %v3084 = vsel %vm581, %v3083, %v2262
    %v3085 = vrot.slane %v2262, 4
    %v3086 = vsel %vm581, %v2270, %v3085
    %v3088 = vunpack.c.l.s4 1983009808
    %v3089 = vunpack.c.0.s8 %v3088
    %v3090 = vperm.slane %v3084, %v3089
    %v3092 = vunpack.c.l.s4 1983009808
    %v3093 = vunpack.c.0.s8 %v3092
    %v3094 = vperm.slane %v3086, %v3093
    %v3095 = vrot.slane %v2274, 4
    %v3096 = vsel %vm581, %v3095, %v2266
    %v3097 = vrot.slane %v2266, 4
    %v3098 = vsel %vm581, %v2274, %v3097
    %v3100 = vunpack.c.l.s4 1983009808
    %v3101 = vunpack.c.0.s8 %v3100
    %v3102 = vperm.slane %v3096, %v3101
    %v3104 = vunpack.c.l.s4 1983009808
    %v3105 = vunpack.c.0.s8 %v3104
    %v3106 = vperm.slane %v3098, %v3105
    %v3107 = vrot.slane %v3078, 4
    %v3108 = vsel %vm581, %v3107, %v3066
    %v3109 = vrot.slane %v3066, 4
    %v3110 = vsel %vm581, %v3078, %v3109
    %v3112 = vunpack.c.l.s4 1934713408
    %v3113 = vunpack.c.0.s8 %v3112
    %v3114 = vperm.slane %v3108, %v3113
    %v3116 = vunpack.c.l.s4 1934713408
    %v3117 = vunpack.c.0.s8 %v3116
    %v3118 = vperm.slane %v3110, %v3117
    %v3119 = vrot.slane %v3082, 4
    %v3120 = vsel %vm581, %v3119, %v3070
    %v3121 = vrot.slane %v3070, 4
    %v3122 = vsel %vm581, %v3082, %v3121
    %v3124 = vunpack.c.l.s4 1934713408
    %v3125 = vunpack.c.0.s8 %v3124
    %v3126 = vperm.slane %v3120, %v3125
    %v3128 = vunpack.c.l.s4 1934713408
    %v3129 = vunpack.c.0.s8 %v3128
    %v3130 = vperm.slane %v3122, %v3129
    %v3131 = vrot.slane %v3102, 4
    %v3132 = vsel %vm581, %v3131, %v3090
    %v3133 = vrot.slane %v3090, 4
    %v3134 = vsel %vm581, %v3102, %v3133
    %v3136 = vunpack.c.l.s4 1934713408
    %v3137 = vunpack.c.0.s8 %v3136
    %v3138 = vperm.slane %v3132, %v3137
    %v3140 = vunpack.c.l.s4 1934713408
    %v3141 = vunpack.c.0.s8 %v3140
    %v3142 = vperm.slane %v3134, %v3141
    %v3143 = vrot.slane %v3106, 4
    %v3144 = vsel %vm581, %v3143, %v3094
    %v3145 = vrot.slane %v3094, 4
    %v3146 = vsel %vm581, %v3106, %v3145
    %v3148 = vunpack.c.l.s4 1934713408
    %v3149 = vunpack.c.0.s8 %v3148
    %v3150 = vperm.slane %v3144, %v3149
    %v3152 = vunpack.c.l.s4 1934713408
    %v3153 = vunpack.c.0.s8 %v3152
    %v3154 = vperm.slane %v3146, %v3153
    %v3155 = vrot.slane %v3138, 4
    %v3156 = vsel %vm581, %v3155, %v3114
    %v3157 = vrot.slane %v3114, 4
    %v3158 = vsel %vm581, %v3138, %v3157
    %v3159 = vrot.slane %v3142, 4
    %v3160 = vsel %vm581, %v3159, %v3118
    %v3161 = vrot.slane %v3118, 4
    %v3162 = vsel %vm581, %v3142, %v3161
    %v3163 = vrot.slane %v3150, 4
    %v3164 = vsel %vm581, %v3163, %v3126
    %v3165 = vrot.slane %v3126, 4
    %v3166 = vsel %vm581, %v3150, %v3165
    %v3167 = vrot.slane %v3154, 4
    %v3168 = vsel %vm581, %v3167, %v3130
    %v3169 = vrot.slane %v3130, 4
    %v3170 = vsel %vm581, %v3154, %v3169
    %3173 = vrot.lane.b32.xlu0 %v2374, 16
    %v3174 = vpop.permute.xlu0 %3173
    %3175 = vrot.lane.b32.xlu0 %v2486, 16
    %v3176 = vpop.permute.xlu0 %3175
    %3181 = vrot.lane.b32.xlu0 %v2376, 32
    %v3182 = vpop.permute.xlu0 %3181
    %3183 = vrot.lane.b32.xlu0 %v2488, 32
    %v3184 = vpop.permute.xlu0 %3183
    %3189 = vrot.lane.b32.xlu0 %v2378, 48
    %v3190 = vpop.permute.xlu0 %3189
    %3191 = vrot.lane.b32.xlu0 %v2490, 48
    %v3192 = vpop.permute.xlu0 %3191
    %3197 = vrot.lane.b32.xlu0 %v2380, 64
    %v3198 = vpop.permute.xlu0 %3197
    %3199 = vrot.lane.b32.xlu0 %v2492, 64
    %v3200 = vpop.permute.xlu0 %3199
    %3205 = vrot.lane.b32.xlu0 %v2382, 80
    %v3206 = vpop.permute.xlu0 %3205
    %3207 = vrot.lane.b32.xlu0 %v2494, 80
    %v3208 = vpop.permute.xlu0 %3207
    %3213 = vrot.lane.b32.xlu0 %v2384, 96
    %v3214 = vpop.permute.xlu0 %3213
    %3215 = vrot.lane.b32.xlu0 %v2496, 96
    %v3216 = vpop.permute.xlu0 %3215
    %3221 = vrot.lane.b32.xlu0 %v2386, 112
    %v3222 = vpop.permute.xlu0 %3221
    %3223 = vrot.lane.b32.xlu0 %v2498, 112
    %v3224 = vpop.permute.xlu0 %3223
    %3229 = vrot.lane.b32.xlu0 %v2598, 16
    %v3230 = vpop.permute.xlu0 %3229
    %3231 = vrot.lane.b32.xlu0 %v2710, 16
    %v3232 = vpop.permute.xlu0 %3231
    %3237 = vrot.lane.b32.xlu0 %v2600, 32
    %v3238 = vpop.permute.xlu0 %3237
    %3239 = vrot.lane.b32.xlu0 %v2712, 32
    %v3240 = vpop.permute.xlu0 %3239
    %3245 = vrot.lane.b32.xlu0 %v2602, 48
    %v3246 = vpop.permute.xlu0 %3245
    %3247 = vrot.lane.b32.xlu0 %v2714, 48
    %v3248 = vpop.permute.xlu0 %3247
    %3253 = vrot.lane.b32.xlu0 %v2604, 64
    %v3254 = vpop.permute.xlu0 %3253
    %3255 = vrot.lane.b32.xlu0 %v2716, 64
    %v3256 = vpop.permute.xlu0 %3255
    %3261 = vrot.lane.b32.xlu0 %v2606, 80
    %v3262 = vpop.permute.xlu0 %3261
    %3263 = vrot.lane.b32.xlu0 %v2718, 80
    %v3264 = vpop.permute.xlu0 %3263
    %3269 = vrot.lane.b32.xlu0 %v2608, 96
    %v3270 = vpop.permute.xlu0 %3269
    %3271 = vrot.lane.b32.xlu0 %v2720, 96
    %v3272 = vpop.permute.xlu0 %3271
    %3277 = vrot.lane.b32.xlu0 %v2610, 112
    %v3278 = vpop.permute.xlu0 %3277
    %3279 = vrot.lane.b32.xlu0 %v2722, 112
    %v3280 = vpop.permute.xlu0 %3279
    %3285 = vrot.lane.b32.xlu0 %v2822, 16
    %v3286 = vpop.permute.xlu0 %3285
    %3287 = vrot.lane.b32.xlu0 %v2934, 16
    %v3288 = vpop.permute.xlu0 %3287
    %3293 = vrot.lane.b32.xlu0 %v2824, 32
    %v3294 = vpop.permute.xlu0 %3293
    %3295 = vrot.lane.b32.xlu0 %v2936, 32
    %v3296 = vpop.permute.xlu0 %3295
    %3301 = vrot.lane.b32.xlu0 %v2826, 48
    %v3302 = vpop.permute.xlu0 %3301
    %3303 = vrot.lane.b32.xlu0 %v2938, 48
    %v3304 = vpop.permute.xlu0 %3303
    %3309 = vrot.lane.b32.xlu0 %v2828, 64
    %v3310 = vpop.permute.xlu0 %3309
    %3311 = vrot.lane.b32.xlu0 %v2940, 64
    %v3312 = vpop.permute.xlu0 %3311
    %3317 = vrot.lane.b32.xlu0 %v2830, 80
    %v3318 = vpop.permute.xlu0 %3317
    %3319 = vrot.lane.b32.xlu0 %v2942, 80
    %v3320 = vpop.permute.xlu0 %3319
    %3325 = vrot.lane.b32.xlu0 %v2832, 96
    %v3326 = vpop.permute.xlu0 %3325
    %3327 = vrot.lane.b32.xlu0 %v2944, 96
    %v3328 = vpop.permute.xlu0 %3327
    %3333 = vrot.lane.b32.xlu0 %v2834, 112
    %v3334 = vpop.permute.xlu0 %3333
    %3335 = vrot.lane.b32.xlu0 %v2946, 112
    %v3336 = vpop.permute.xlu0 %3335
    %3341 = vrot.lane.b32.xlu0 %v3046, 16
    %v3342 = vpop.permute.xlu0 %3341
    %3343 = vrot.lane.b32.xlu0 %v3158, 16
    %v3344 = vpop.permute.xlu0 %3343
    %3349 = vrot.lane.b32.xlu0 %v3048, 32
    %v3350 = vpop.permute.xlu0 %3349
    %3351 = vrot.lane.b32.xlu0 %v3160, 32
    %v3352 = vpop.permute.xlu0 %3351
    %3357 = vrot.lane.b32.xlu0 %v3050, 48
    %v3358 = vpop.permute.xlu0 %3357
    %3359 = vrot.lane.b32.xlu0 %v3162, 48
    %v3360 = vpop.permute.xlu0 %3359
    %3365 = vrot.lane.b32.xlu0 %v3052, 64
    %v3366 = vpop.permute.xlu0 %3365
    %3367 = vrot.lane.b32.xlu0 %v3164, 64
    %v3368 = vpop.permute.xlu0 %3367
    %3373 = vrot.lane.b32.xlu0 %v3054, 80
    %v3374 = vpop.permute.xlu0 %3373
    %3375 = vrot.lane.b32.xlu0 %v3166, 80
    %v3376 = vpop.permute.xlu0 %3375
    %3381 = vrot.lane.b32.xlu0 %v3056, 96
    %v3382 = vpop.permute.xlu0 %3381
    %3383 = vrot.lane.b32.xlu0 %v3168, 96
    %v3384 = vpop.permute.xlu0 %3383
    %3389 = vrot.lane.b32.xlu0 %v3058, 112
    %v3390 = vpop.permute.xlu0 %3389
    %3391 = vrot.lane.b32.xlu0 %v3170, 112
    %v3392 = vpop.permute.xlu0 %3391
    %v3395 = vsel %vm1701, %v2372, %v3174
    %v3396 = vsel %vm1701, %v2484, %v3176
    %v3397 = vsel %vm43, %v3395, %v3182
    %v3398 = vsel %vm43, %v3396, %v3184
    %v3399 = vsel %vm1706, %v3397, %v3190
    %v3400 = vsel %vm1706, %v3398, %v3192
    %v3401 = vsel %vm1709, %v3399, %v3198
    %v3402 = vsel %vm1709, %v3400, %v3200
    %v3403 = vsel %vm1712, %v3401, %v3206
    %v3404 = vsel %vm1712, %v3402, %v3208
    %v3405 = vsel %vm1715, %v3403, %v3214
    %v3406 = vsel %vm1715, %v3404, %v3216
    %v3407 = vsel %vm1718, %v3405, %v3222
    %v3408 = vsel %vm1718, %v3406, %v3224
    %v3409 = vsel %vm1701, %v2596, %v3230
    %v3410 = vsel %vm1701, %v2708, %v3232
    %v3411 = vsel %vm43, %v3409, %v3238
    %v3412 = vsel %vm43, %v3410, %v3240
    %v3413 = vsel %vm1706, %v3411, %v3246
    %v3414 = vsel %vm1706, %v3412, %v3248
    %v3415 = vsel %vm1709, %v3413, %v3254
    %v3416 = vsel %vm1709, %v3414, %v3256
    %v3417 = vsel %vm1712, %v3415, %v3262
    %v3418 = vsel %vm1712, %v3416, %v3264
    %v3419 = vsel %vm1715, %v3417, %v3270
    %v3420 = vsel %vm1715, %v3418, %v3272
    %v3421 = vsel %vm1718, %v3419, %v3278
    %v3422 = vsel %vm1718, %v3420, %v3280
    %v3423 = vsel %vm1701, %v2820, %v3286
    %v3424 = vsel %vm1701, %v2932, %v3288
    %v3425 = vsel %vm43, %v3423, %v3294
    %v3426 = vsel %vm43, %v3424, %v3296
    %v3427 = vsel %vm1706, %v3425, %v3302
    %v3428 = vsel %vm1706, %v3426, %v3304
    %v3429 = vsel %vm1709, %v3427, %v3310
    %v3430 = vsel %vm1709, %v3428, %v3312
    %v3431 = vsel %vm1712, %v3429, %v3318
    %v3432 = vsel %vm1712, %v3430, %v3320
    %v3433 = vsel %vm1715, %v3431, %v3326
    %v3434 = vsel %vm1715, %v3432, %v3328
    %v3435 = vsel %vm1718, %v3433, %v3334
    %v3436 = vsel %vm1718, %v3434, %v3336
    %v3437 = vsel %vm1701, %v3044, %v3342
    %v3438 = vsel %vm1701, %v3156, %v3344
    %v3439 = vsel %vm43, %v3437, %v3350
    %v3440 = vsel %vm43, %v3438, %v3352
    %v3441 = vsel %vm1706, %v3439, %v3358
    %v3442 = vsel %vm1706, %v3440, %v3360
    %v3443 = vsel %vm1709, %v3441, %v3366
    %v3444 = vsel %vm1709, %v3442, %v3368
    %v3445 = vsel %vm1712, %v3443, %v3374
    %v3446 = vsel %vm1712, %v3444, %v3376
    %v3447 = vsel %vm1715, %v3445, %v3382
    %v3448 = vsel %vm1715, %v3446, %v3384
    %v3449 = vsel %vm1718, %v3447, %v3390
    %v3450 = vsel %vm1718, %v3448, %v3392
    %v3451 = vmul.f32 %v1719, 0.0
    %v3452 = vmul.f32 %v1733, 0.0
    %v3453 = vmul.f32 %v1747, 0.0
    %v3454 = vmul.f32 %v1761, 0.0
    %v3455 = vadd.f32 %v3451, %v3407
    %v3456 = vadd.f32 %v3452, %v3421
    %v3457 = vadd.f32 %v3453, %v3435
    %v3458 = vadd.f32 %v3454, %v3449
    %v3459 = vmax.f32 %v3455, -1000000.0
    %v3460 = vmax.f32 %v3456, -1000000.0
    %v3461 = vmax.f32 %v3457, -1000000.0
    %v3462 = vmax.f32 %v3458, -1000000.0
    %v3463 = vmin.f32 %v3459, 1000000.0
    %v3464 = vmin.f32 %v3460, 1000000.0
    %v3465 = vmin.f32 %v3461, 1000000.0
    %v3466 = vmin.f32 %v3462, 1000000.0
    %v3471 = vrot.slane %v3464, 6
    %v3472 = vrot.slane %v3465, 4
    %v3473 = vrot.slane %v3466, 2
    %v3474 = vsel %vm89, %v3463, %v3471
    %vm3475 = vcmask 1045508
    %v3476 = vsel %vm3475, %v3472, %v3473
    %vm3477 = vcmask 1043456
    %v3478 = vsel %vm3477, %v3474, %v3476
    %3480 = vst [vmem:[%s8] sm:$0xff] %v3478
    %v3485 = vrot.slane %v1719, 2
    %v3486 = vrot.slane %v1733, 2
    %v3487 = vrot.slane %v1747, 2
    %v3488 = vrot.slane %v1761, 2
    %v3493 = vmul.f32 %v3463, %v3485
    %v3494 = vmul.f32 %v3464, %v3486
    %v3495 = vmul.f32 %v3465, %v3487
    %v3496 = vmul.f32 %v3466, %v3488
    %v3501 = vrot.slane %v3407, 2
    %v3502 = vrot.slane %v3421, 2
    %v3503 = vrot.slane %v3435, 2
    %v3504 = vrot.slane %v3449, 2
    %v3509 = vadd.f32 %v3493, %v3501
    %v3510 = vadd.f32 %v3494, %v3502
    %v3511 = vadd.f32 %v3495, %v3503
    %v3512 = vadd.f32 %v3496, %v3504
    %v3513 = vmax.f32 %v3509, -1000000.0
    %v3514 = vmax.f32 %v3510, -1000000.0
    %v3515 = vmax.f32 %v3511, -1000000.0
    %v3516 = vmax.f32 %v3512, -1000000.0
    %v3517 = vmin.f32 %v3513, 1000000.0
    %v3518 = vmin.f32 %v3514, 1000000.0
    %v3519 = vmin.f32 %v3515, 1000000.0
    %v3520 = vmin.f32 %v3516, 1000000.0
    %v3525 = vrot.slane %v3518, 6
    %v3526 = vrot.slane %v3519, 4
    %v3527 = vrot.slane %v3520, 2
    %v3528 = vsel %vm89, %v3517, %v3525
    %v3529 = vsel %vm3475, %v3526, %v3527
    %v3530 = vsel %vm3477, %v3528, %v3529
    %s3532 = scalar_lea.vmem %s8, 8
    %3533 = vst [vmem:[%s3532] sm:$0xff] %v3530
    %v3534 = vrot.slane %v1719, 4
    %v3535 = vrot.slane %v1733, 4
    %v3536 = vrot.slane %v1747, 4
    %v3537 = vrot.slane %v1761, 4
    %v3542 = vmul.f32 %v3517, %v3534
    %v3543 = vmul.f32 %v3518, %v3535
    %v3544 = vmul.f32 %v3519, %v3536
    %v3545 = vmul.f32 %v3520, %v3537
    %v3546 = vrot.slane %v3407, 4
    %v3547 = vrot.slane %v3421, 4
    %v3548 = vrot.slane %v3435, 4
    %v3549 = vrot.slane %v3449, 4
    %v3554 = vadd.f32 %v3542, %v3546
    %v3555 = vadd.f32 %v3543, %v3547
    %v3556 = vadd.f32 %v3544, %v3548
    %v3557 = vadd.f32 %v3545, %v3549
    %v3558 = vmax.f32 %v3554, -1000000.0
    %v3559 = vmax.f32 %v3555, -1000000.0
    %v3560 = vmax.f32 %v3556, -1000000.0
    %v3561 = vmax.f32 %v3557, -1000000.0
    %v3562 = vmin.f32 %v3558, 1000000.0
    %v3563 = vmin.f32 %v3559, 1000000.0
    %v3564 = vmin.f32 %v3560, 1000000.0
    %v3565 = vmin.f32 %v3561, 1000000.0
    %v3570 = vrot.slane %v3563, 6
    %v3571 = vrot.slane %v3564, 4
    %v3572 = vrot.slane %v3565, 2
    %v3573 = vsel %vm89, %v3562, %v3570
    %v3574 = vsel %vm3475, %v3571, %v3572
    %v3575 = vsel %vm3477, %v3573, %v3574
    %s3577 = scalar_lea.vmem %s8, 16
    %3578 = vst [vmem:[%s3577] sm:$0xff] %v3575
    %v3579 = vrot.slane %v1719, 6
    %v3580 = vrot.slane %v1733, 6
    %v3581 = vrot.slane %v1747, 6
    %v3582 = vrot.slane %v1761, 6
    %v3587 = vmul.f32 %v3562, %v3579
    %v3588 = vmul.f32 %v3563, %v3580
    %v3589 = vmul.f32 %v3564, %v3581
    %v3590 = vmul.f32 %v3565, %v3582
    %v3591 = vrot.slane %v3407, 6
    %v3592 = vrot.slane %v3421, 6
    %v3593 = vrot.slane %v3435, 6
    %v3594 = vrot.slane %v3449, 6
    %v3599 = vadd.f32 %v3587, %v3591
    %v3600 = vadd.f32 %v3588, %v3592
    %v3601 = vadd.f32 %v3589, %v3593
    %v3602 = vadd.f32 %v3590, %v3594
    %v3603 = vmax.f32 %v3599, -1000000.0
    %v3604 = vmax.f32 %v3600, -1000000.0
    %v3605 = vmax.f32 %v3601, -1000000.0
    %v3606 = vmax.f32 %v3602, -1000000.0
    %v3607 = vmin.f32 %v3603, 1000000.0
    %v3608 = vmin.f32 %v3604, 1000000.0
    %v3609 = vmin.f32 %v3605, 1000000.0
    %v3610 = vmin.f32 %v3606, 1000000.0
    %v3615 = vrot.slane %v3608, 6
    %v3616 = vrot.slane %v3609, 4
    %v3617 = vrot.slane %v3610, 2
    %v3618 = vsel %vm89, %v3607, %v3615
    %v3619 = vsel %vm3475, %v3616, %v3617
    %v3620 = vsel %vm3477, %v3618, %v3619
    %s3622 = scalar_lea.vmem %s8, 24
    %3623 = vst [vmem:[%s3622] sm:$0xff] %v3620
    %v3624 = vmul.f32 %v3607, %v1720
    %v3625 = vmul.f32 %v3608, %v1734
    %v3626 = vmul.f32 %v3609, %v1748
    %v3627 = vmul.f32 %v3610, %v1762
    %v3628 = vadd.f32 %v3624, %v3408
    %v3629 = vadd.f32 %v3625, %v3422
    %v3630 = vadd.f32 %v3626, %v3436
    %v3631 = vadd.f32 %v3627, %v3450
    %v3632 = vmax.f32 %v3628, -1000000.0
    %v3633 = vmax.f32 %v3629, -1000000.0
    %v3634 = vmax.f32 %v3630, -1000000.0
    %v3635 = vmax.f32 %v3631, -1000000.0
    %v3636 = vmin.f32 %v3632, 1000000.0
    %v3637 = vmin.f32 %v3633, 1000000.0
    %v3638 = vmin.f32 %v3634, 1000000.0
    %v3639 = vmin.f32 %v3635, 1000000.0
    %v3644 = vrot.slane %v3637, 6
    %v3645 = vrot.slane %v3638, 4
    %v3646 = vrot.slane %v3639, 2
    %v3647 = vsel %vm89, %v3636, %v3644
    %v3648 = vsel %vm3475, %v3645, %v3646
    %v3649 = vsel %vm3477, %v3647, %v3648
    %s3651 = scalar_lea.vmem %s8, 32
    %3652 = vst [vmem:[%s3651] sm:$0xff] %v3649
    %v3657 = vrot.slane %v1720, 2
    %v3658 = vrot.slane %v1734, 2
    %v3659 = vrot.slane %v1748, 2
    %v3660 = vrot.slane %v1762, 2
    %v3665 = vmul.f32 %v3636, %v3657
    %v3666 = vmul.f32 %v3637, %v3658
    %v3667 = vmul.f32 %v3638, %v3659
    %v3668 = vmul.f32 %v3639, %v3660
    %v3673 = vrot.slane %v3408, 2
    %v3674 = vrot.slane %v3422, 2
    %v3675 = vrot.slane %v3436, 2
    %v3676 = vrot.slane %v3450, 2
    %v3681 = vadd.f32 %v3665, %v3673
    %v3682 = vadd.f32 %v3666, %v3674
    %v3683 = vadd.f32 %v3667, %v3675
    %v3684 = vadd.f32 %v3668, %v3676
    %v3685 = vmax.f32 %v3681, -1000000.0
    %v3686 = vmax.f32 %v3682, -1000000.0
    %v3687 = vmax.f32 %v3683, -1000000.0
    %v3688 = vmax.f32 %v3684, -1000000.0
    %v3689 = vmin.f32 %v3685, 1000000.0
    %v3690 = vmin.f32 %v3686, 1000000.0
    %v3691 = vmin.f32 %v3687, 1000000.0
    %v3692 = vmin.f32 %v3688, 1000000.0
    %v3697 = vrot.slane %v3690, 6
    %v3698 = vrot.slane %v3691, 4
    %v3699 = vrot.slane %v3692, 2
    %v3700 = vsel %vm89, %v3689, %v3697
    %v3701 = vsel %vm3475, %v3698, %v3699
    %v3702 = vsel %vm3477, %v3700, %v3701
    %s3704 = scalar_lea.vmem %s8, 40
    %3705 = vst [vmem:[%s3704] sm:$0xff] %v3702
    %v3706 = vrot.slane %v1720, 4
    %v3707 = vrot.slane %v1734, 4
    %v3708 = vrot.slane %v1748, 4
    %v3709 = vrot.slane %v1762, 4
    %v3714 = vmul.f32 %v3689, %v3706
    %v3715 = vmul.f32 %v3690, %v3707
    %v3716 = vmul.f32 %v3691, %v3708
    %v3717 = vmul.f32 %v3692, %v3709
    %v3718 = vrot.slane %v3408, 4
    %v3719 = vrot.slane %v3422, 4
    %v3720 = vrot.slane %v3436, 4
    %v3721 = vrot.slane %v3450, 4
    %v3726 = vadd.f32 %v3714, %v3718
    %v3727 = vadd.f32 %v3715, %v3719
    %v3728 = vadd.f32 %v3716, %v3720
    %v3729 = vadd.f32 %v3717, %v3721
    %v3730 = vmax.f32 %v3726, -1000000.0
    %v3731 = vmax.f32 %v3727, -1000000.0
    %v3732 = vmax.f32 %v3728, -1000000.0
    %v3733 = vmax.f32 %v3729, -1000000.0
    %v3734 = vmin.f32 %v3730, 1000000.0
    %v3735 = vmin.f32 %v3731, 1000000.0
    %v3736 = vmin.f32 %v3732, 1000000.0
    %v3737 = vmin.f32 %v3733, 1000000.0
    %v3742 = vrot.slane %v3735, 6
    %v3743 = vrot.slane %v3736, 4
    %v3744 = vrot.slane %v3737, 2
    %v3745 = vsel %vm89, %v3734, %v3742
    %v3746 = vsel %vm3475, %v3743, %v3744
    %v3747 = vsel %vm3477, %v3745, %v3746
    %s3749 = scalar_lea.vmem %s8, 48
    %3750 = vst [vmem:[%s3749] sm:$0xff] %v3747
    %v3751 = vrot.slane %v1720, 6
    %v3752 = vrot.slane %v1734, 6
    %v3753 = vrot.slane %v1748, 6
    %v3754 = vrot.slane %v1762, 6
    %v3759 = vmul.f32 %v3734, %v3751
    %v3760 = vmul.f32 %v3735, %v3752
    %v3761 = vmul.f32 %v3736, %v3753
    %v3762 = vmul.f32 %v3737, %v3754
    %v3763 = vrot.slane %v3408, 6
    %v3764 = vrot.slane %v3422, 6
    %v3765 = vrot.slane %v3436, 6
    %v3766 = vrot.slane %v3450, 6
    %v3771 = vadd.f32 %v3759, %v3763
    %v3772 = vadd.f32 %v3760, %v3764
    %v3773 = vadd.f32 %v3761, %v3765
    %v3774 = vadd.f32 %v3762, %v3766
    %v3775 = vmax.f32 %v3771, -1000000.0
    %v3776 = vmax.f32 %v3772, -1000000.0
    %v3777 = vmax.f32 %v3773, -1000000.0
    %v3778 = vmax.f32 %v3774, -1000000.0
    %v3779 = vmin.f32 %v3775, 1000000.0
    %v3780 = vmin.f32 %v3776, 1000000.0
    %v3781 = vmin.f32 %v3777, 1000000.0
    %v3782 = vmin.f32 %v3778, 1000000.0
    %v3787 = vrot.slane %v3780, 6
    %v3788 = vrot.slane %v3781, 4
    %v3789 = vrot.slane %v3782, 2
    %v3790 = vsel %vm89, %v3779, %v3787
    %v3791 = vsel %vm3475, %v3788, %v3789
    %v3792 = vsel %vm3477, %v3790, %v3791
    %s3794 = scalar_lea.vmem %s8, 56
    %3795 = vst [vmem:[%s3794] sm:$0xff] %v3792
    %3796 = vrot.lane.b32.xlu0 %v3779, 112
    %v3797 = vpop.permute.xlu0 %3796
    %3799 = vrot.lane.b32.xlu0 %v3779, 96
    %v3800 = vpop.permute.xlu0 %3799
    %3802 = vrot.lane.b32.xlu0 %v3779, 80
    %v3803 = vpop.permute.xlu0 %3802
    %3805 = vrot.lane.b32.xlu0 %v3779, 64
    %v3806 = vpop.permute.xlu0 %3805
    %3808 = vrot.lane.b32.xlu0 %v3779, 48
    %v3809 = vpop.permute.xlu0 %3808
    %3811 = vrot.lane.b32.xlu0 %v3779, 32
    %v3812 = vpop.permute.xlu0 %3811
    %3814 = vrot.lane.b32.xlu0 %v3779, 16
    %v3815 = vpop.permute.xlu0 %3814
    %3817 = vrot.lane.b32.xlu0 %v3780, 112
    %v3818 = vpop.permute.xlu0 %3817
    %3820 = vrot.lane.b32.xlu0 %v3780, 96
    %v3821 = vpop.permute.xlu0 %3820
    %3823 = vrot.lane.b32.xlu0 %v3780, 80
    %v3824 = vpop.permute.xlu0 %3823
    %3826 = vrot.lane.b32.xlu0 %v3780, 64
    %v3827 = vpop.permute.xlu0 %3826
    %3829 = vrot.lane.b32.xlu0 %v3780, 48
    %v3830 = vpop.permute.xlu0 %3829
    %3832 = vrot.lane.b32.xlu0 %v3780, 32
    %v3833 = vpop.permute.xlu0 %3832
    %3835 = vrot.lane.b32.xlu0 %v3780, 16
    %v3836 = vpop.permute.xlu0 %3835
    %3838 = vrot.lane.b32.xlu0 %v3781, 112
    %v3839 = vpop.permute.xlu0 %3838
    %3841 = vrot.lane.b32.xlu0 %v3781, 96
    %v3842 = vpop.permute.xlu0 %3841
    %3844 = vrot.lane.b32.xlu0 %v3781, 80
    %v3845 = vpop.permute.xlu0 %3844
    %3847 = vrot.lane.b32.xlu0 %v3781, 64
    %v3848 = vpop.permute.xlu0 %3847
    %3850 = vrot.lane.b32.xlu0 %v3781, 48
    %v3851 = vpop.permute.xlu0 %3850
    %3853 = vrot.lane.b32.xlu0 %v3781, 32
    %v3854 = vpop.permute.xlu0 %3853
    %3856 = vrot.lane.b32.xlu0 %v3781, 16
    %v3857 = vpop.permute.xlu0 %3856
    %3859 = vrot.lane.b32.xlu0 %v3782, 112
    %v3860 = vpop.permute.xlu0 %3859
    %3862 = vrot.lane.b32.xlu0 %v3782, 96
    %v3863 = vpop.permute.xlu0 %3862
    %3865 = vrot.lane.b32.xlu0 %v3782, 80
    %v3866 = vpop.permute.xlu0 %3865
    %3868 = vrot.lane.b32.xlu0 %v3782, 64
    %v3869 = vpop.permute.xlu0 %3868
    %3871 = vrot.lane.b32.xlu0 %v3782, 48
    %v3872 = vpop.permute.xlu0 %3871
    %3874 = vrot.lane.b32.xlu0 %v3782, 32
    %v3875 = vpop.permute.xlu0 %3874
    %3877 = vrot.lane.b32.xlu0 %v3782, 16
    %v3878 = vpop.permute.xlu0 %3877
    %v3880 = vrot.slane %v3800, 4
    %v3881 = vsel %vm581, %v3880, %v3779
    %v3883 = vunpack.c.l.s4 1983009808
    %v3884 = vunpack.c.0.s8 %v3883
    %v3885 = vperm.slane %v3881, %v3884
    %v3886 = vrot.slane %v3803, 4
    %v3887 = vsel %vm581, %v3886, %v3797
    %v3889 = vunpack.c.l.s4 1983009808
    %v3890 = vunpack.c.0.s8 %v3889
    %v3891 = vperm.slane %v3887, %v3890
    %v3892 = vrot.slane %v3812, 4
    %v3893 = vsel %vm581, %v3892, %v3806
    %v3895 = vunpack.c.l.s4 1983009808
    %v3896 = vunpack.c.0.s8 %v3895
    %v3897 = vperm.slane %v3893, %v3896
    %v3898 = vrot.slane %v3815, 4
    %v3899 = vsel %vm581, %v3898, %v3809
    %v3901 = vunpack.c.l.s4 1983009808
    %v3902 = vunpack.c.0.s8 %v3901
    %v3903 = vperm.slane %v3899, %v3902
    %v3904 = vrot.slane %v3891, 4
    %v3905 = vsel %vm581, %v3904, %v3885
    %v3907 = vunpack.c.l.s4 1934713408
    %v3908 = vunpack.c.0.s8 %v3907
    %v3909 = vperm.slane %v3905, %v3908
    %v3910 = vrot.slane %v3903, 4
    %v3911 = vsel %vm581, %v3910, %v3897
    %v3913 = vunpack.c.l.s4 1934713408
    %v3914 = vunpack.c.0.s8 %v3913
    %v3915 = vperm.slane %v3911, %v3914
    %v3916 = vrot.slane %v3915, 4
    %v3917 = vsel %vm581, %v3916, %v3909
    %v3918 = vrot.slane %v3909, 4
    %v3919 = vsel %vm581, %v3915, %v3918
    %v3920 = vrot.slane %v3821, 4
    %v3921 = vsel %vm581, %v3920, %v3780
    %v3923 = vunpack.c.l.s4 1983009808
    %v3924 = vunpack.c.0.s8 %v3923
    %v3925 = vperm.slane %v3921, %v3924
    %v3926 = vrot.slane %v3824, 4
    %v3927 = vsel %vm581, %v3926, %v3818
    %v3929 = vunpack.c.l.s4 1983009808
    %v3930 = vunpack.c.0.s8 %v3929
    %v3931 = vperm.slane %v3927, %v3930
    %v3932 = vrot.slane %v3833, 4
    %v3933 = vsel %vm581, %v3932, %v3827
    %v3935 = vunpack.c.l.s4 1983009808
    %v3936 = vunpack.c.0.s8 %v3935
    %v3937 = vperm.slane %v3933, %v3936
    %v3938 = vrot.slane %v3836, 4
    %v3939 = vsel %vm581, %v3938, %v3830
    %v3941 = vunpack.c.l.s4 1983009808
    %v3942 = vunpack.c.0.s8 %v3941
    %v3943 = vperm.slane %v3939, %v3942
    %v3944 = vrot.slane %v3931, 4
    %v3945 = vsel %vm581, %v3944, %v3925
    %v3947 = vunpack.c.l.s4 1934713408
    %v3948 = vunpack.c.0.s8 %v3947
    %v3949 = vperm.slane %v3945, %v3948
    %v3950 = vrot.slane %v3943, 4
    %v3951 = vsel %vm581, %v3950, %v3937
    %v3953 = vunpack.c.l.s4 1934713408
    %v3954 = vunpack.c.0.s8 %v3953
    %v3955 = vperm.slane %v3951, %v3954
    %v3956 = vrot.slane %v3955, 4
    %v3957 = vsel %vm581, %v3956, %v3949
    %v3958 = vrot.slane %v3949, 4
    %v3959 = vsel %vm581, %v3955, %v3958
    %v3960 = vrot.slane %v3842, 4
    %v3961 = vsel %vm581, %v3960, %v3781
    %v3963 = vunpack.c.l.s4 1983009808
    %v3964 = vunpack.c.0.s8 %v3963
    %v3965 = vperm.slane %v3961, %v3964
    %v3966 = vrot.slane %v3845, 4
    %v3967 = vsel %vm581, %v3966, %v3839
    %v3969 = vunpack.c.l.s4 1983009808
    %v3970 = vunpack.c.0.s8 %v3969
    %v3971 = vperm.slane %v3967, %v3970
    %v3972 = vrot.slane %v3854, 4
    %v3973 = vsel %vm581, %v3972, %v3848
    %v3975 = vunpack.c.l.s4 1983009808
    %v3976 = vunpack.c.0.s8 %v3975
    %v3977 = vperm.slane %v3973, %v3976
    %v3978 = vrot.slane %v3857, 4
    %v3979 = vsel %vm581, %v3978, %v3851
    %v3981 = vunpack.c.l.s4 1983009808
    %v3982 = vunpack.c.0.s8 %v3981
    %v3983 = vperm.slane %v3979, %v3982
    %v3984 = vrot.slane %v3971, 4
    %v3985 = vsel %vm581, %v3984, %v3965
    %v3987 = vunpack.c.l.s4 1934713408
    %v3988 = vunpack.c.0.s8 %v3987
    %v3989 = vperm.slane %v3985, %v3988
    %v3990 = vrot.slane %v3983, 4
    %v3991 = vsel %vm581, %v3990, %v3977
    %v3993 = vunpack.c.l.s4 1934713408
    %v3994 = vunpack.c.0.s8 %v3993
    %v3995 = vperm.slane %v3991, %v3994
    %v3996 = vrot.slane %v3995, 4
    %v3997 = vsel %vm581, %v3996, %v3989
    %v3998 = vrot.slane %v3989, 4
    %v3999 = vsel %vm581, %v3995, %v3998
    %v4000 = vrot.slane %v3863, 4
    %v4001 = vsel %vm581, %v4000, %v3782
    %v4003 = vunpack.c.l.s4 1983009808
    %v4004 = vunpack.c.0.s8 %v4003
    %v4005 = vperm.slane %v4001, %v4004
    %v4006 = vrot.slane %v3866, 4
    %v4007 = vsel %vm581, %v4006, %v3860
    %v4009 = vunpack.c.l.s4 1983009808
    %v4010 = vunpack.c.0.s8 %v4009
    %v4011 = vperm.slane %v4007, %v4010
    %v4012 = vrot.slane %v3875, 4
    %v4013 = vsel %vm581, %v4012, %v3869
    %v4015 = vunpack.c.l.s4 1983009808
    %v4016 = vunpack.c.0.s8 %v4015
    %v4017 = vperm.slane %v4013, %v4016
    %v4018 = vrot.slane %v3878, 4
    %v4019 = vsel %vm581, %v4018, %v3872
    %v4021 = vunpack.c.l.s4 1983009808
    %v4022 = vunpack.c.0.s8 %v4021
    %v4023 = vperm.slane %v4019, %v4022
    %v4024 = vrot.slane %v4011, 4
    %v4025 = vsel %vm581, %v4024, %v4005
    %v4027 = vunpack.c.l.s4 1934713408
    %v4028 = vunpack.c.0.s8 %v4027
    %v4029 = vperm.slane %v4025, %v4028
    %v4030 = vrot.slane %v4023, 4
    %v4031 = vsel %vm581, %v4030, %v4017
    %v4033 = vunpack.c.l.s4 1934713408
    %v4034 = vunpack.c.0.s8 %v4033
    %v4035 = vperm.slane %v4031, %v4034
    %v4036 = vrot.slane %v4035, 4
    %v4037 = vsel %vm581, %v4036, %v4029
    %v4038 = vrot.slane %v4029, 4
    %v4039 = vsel %vm581, %v4035, %v4038
    %4040 = vst [vmem:[#allocation1] sm:$0xff] %v71
    %s4041 = scalar_lea.vmem [#allocation1], 6
    %v4042 = vld [vmem:[%s4041] ss:$9 sm:$0xff]
    %s4043 = scalar_lea.vmem [#allocation1], 7
    %v4044 = vld [vmem:[%s4043] ss:$9 sm:$0xff]
    %v4045 = vperm.slane %v4042, 0
    %v4046 = vperm.slane %v4044, 0
    %4047 = vrot.lane.b32.xlu0 %v4045, 110
    %v4048 = vpop.permute.xlu0 %4047
    %4049 = vrot.lane.b32.xlu0 %v4046, 110
    %v4050 = vpop.permute.xlu0 %4049
    %v4053 = vmul.f32 %v3917, %v4048
    %v4054 = vmul.f32 %v3957, %v4048
    %v4055 = vmul.f32 %v3997, %v4048
    %v4056 = vmul.f32 %v4037, %v4048
    %v4057 = vmul.f32 %v3919, %v4050
    %v4058 = vmul.f32 %v3959, %v4050
    %v4059 = vmul.f32 %v3999, %v4050
    %v4060 = vmul.f32 %v4039, %v4050
    %v4061 = vsel %vm1701, %v4053, 0.0
    %4062 = vadd.xlane.f32.xlu0 %v4061
    %v4063 = vpop.xlane.xlu0 %4062
    %v4064 = vsel %vm1701, %v4054, 0.0
    %4065 = vadd.xlane.f32.xlu0 %v4064
    %v4066 = vpop.xlane.xlu0 %4065
    %v4067 = vsel %vm1701, %v4055, 0.0
    %4068 = vadd.xlane.f32.xlu0 %v4067
    %v4069 = vpop.xlane.xlu0 %4068
    %v4070 = vsel %vm1701, %v4056, 0.0
    %4071 = vadd.xlane.f32.xlu0 %v4070
    %v4072 = vpop.xlane.xlu0 %4071
    %v4073 = vsel %vm1701, %v4057, 0.0
    %4074 = vadd.xlane.f32.xlu0 %v4073
    %v4075 = vpop.xlane.xlu0 %4074
    %v4076 = vsel %vm1701, %v4058, 0.0
    %4077 = vadd.xlane.f32.xlu0 %v4076
    %v4078 = vpop.xlane.xlu0 %4077
    %v4079 = vsel %vm1701, %v4059, 0.0
    %4080 = vadd.xlane.f32.xlu0 %v4079
    %v4081 = vpop.xlane.xlu0 %4080
    %v4082 = vsel %vm1701, %v4060, 0.0
    %4083 = vadd.xlane.f32.xlu0 %v4082
    %v4084 = vpop.xlane.xlu0 %4083
    %v4085 = vld [vmem:[%s6] sm:$0x1]
    %v4087 = vperm.slane %v4085, 0
    %v4089 = vmul.f32 %v4087, %v30
    %v4091 = vperm.slane %v4089, 6
    %v4092 = vlaneseq
    %v4093 = vshrl.u32 %v4092, 7
    %4095 = vset.pattern.permute.xlu0 %v4093
    %4096 = vperm.xlu0 %4095, %v4091
    %v4097 = vpop.permute.xlu0 %4096
    %v4098 = vlaneseq
    %v4099 = vshrl.u32 %v4098, 7
    %v4100 = vadd.s32 %v4099, 8
    %4101 = vset.pattern.permute.xlu0 %v4100
    %4102 = vperm.xlu0 %4101, %v4091
    %v4103 = vpop.permute.xlu0 %4102
    %v4104 = vlaneseq
    %v4105 = vshrl.u32 %v4104, 7
    %v4106 = vadd.s32 %v4105, 16
    %4107 = vset.pattern.permute.xlu0 %v4106
    %4108 = vperm.xlu0 %4107, %v4091
    %v4109 = vpop.permute.xlu0 %4108
    %v4110 = vlaneseq
    %v4111 = vshrl.u32 %v4110, 7
    %v4112 = vadd.s32 %v4111, 24
    %4113 = vset.pattern.permute.xlu0 %v4112
    %4114 = vperm.xlu0 %4113, %v4091
    %v4115 = vpop.permute.xlu0 %4114
    %v4116 = vperm.slane %v4089, 7
    %v4117 = vlaneseq
    %v4118 = vshrl.u32 %v4117, 7
    %4120 = vset.pattern.permute.xlu0 %v4118
    %4121 = vperm.xlu0 %4120, %v4116
    %v4122 = vpop.permute.xlu0 %4121
    %v4123 = vlaneseq
    %v4124 = vshrl.u32 %v4123, 7
    %v4125 = vadd.s32 %v4124, 8
    %4126 = vset.pattern.permute.xlu0 %v4125
    %4127 = vperm.xlu0 %4126, %v4116
    %v4128 = vpop.permute.xlu0 %4127
    %v4129 = vlaneseq
    %v4130 = vshrl.u32 %v4129, 7
    %v4131 = vadd.s32 %v4130, 16
    %4132 = vset.pattern.permute.xlu0 %v4131
    %4133 = vperm.xlu0 %4132, %v4116
    %v4134 = vpop.permute.xlu0 %4133
    %v4135 = vlaneseq
    %v4136 = vshrl.u32 %v4135, 7
    %v4137 = vadd.s32 %v4136, 24
    %4138 = vset.pattern.permute.xlu0 %v4137
    %4139 = vperm.xlu0 %4138, %v4116
    %v4140 = vpop.permute.xlu0 %4139
    %v4149 = vadd.f32 %v4063, %v4097
    %v4150 = vadd.f32 %v4066, %v4103
    %v4151 = vadd.f32 %v4069, %v4109
    %v4152 = vadd.f32 %v4072, %v4115
    %v4153 = vadd.f32 %v4075, %v4122
    %v4154 = vadd.f32 %v4078, %v4128
    %v4155 = vadd.f32 %v4081, %v4134
    %v4156 = vadd.f32 %v4084, %v4140
    %4165 = vset.pattern.permute.xlu0 0
    %4166 = vperm.xlu0 %4165, %v4149
    %v4167 = vpop.permute.xlu0 %4166
    %4168 = vset.pattern.permute.xlu0 0
    %4169 = vperm.xlu0 %4168, %v4150
    %v4170 = vpop.permute.xlu0 %4169
    %4171 = vset.pattern.permute.xlu0 0
    %4172 = vperm.xlu0 %4171, %v4151
    %v4173 = vpop.permute.xlu0 %4172
    %4174 = vset.pattern.permute.xlu0 0
    %4175 = vperm.xlu0 %4174, %v4152
    %v4176 = vpop.permute.xlu0 %4175
    %4177 = vset.pattern.permute.xlu0 0
    %4178 = vperm.xlu0 %4177, %v4153
    %v4179 = vpop.permute.xlu0 %4178
    %4180 = vset.pattern.permute.xlu0 0
    %4181 = vperm.xlu0 %4180, %v4154
    %v4182 = vpop.permute.xlu0 %4181
    %4183 = vset.pattern.permute.xlu0 0
    %4184 = vperm.xlu0 %4183, %v4155
    %v4185 = vpop.permute.xlu0 %4184
    %4186 = vset.pattern.permute.xlu0 0
    %4187 = vperm.xlu0 %4186, %v4156
    %v4188 = vpop.permute.xlu0 %4187
    %v4189 = vlaneseq
    %v4190 = vand.u32 %v4189, 127
    %v4191 = vperm.slane %v4167, %v4190
    %v4192 = vadd.s32 %v4190, 4294967288
    %v4193 = vperm.slane %v4170, %v4192
    %vm4194 = vcmask 130112
    %v4195 = vsel %vm4194, %v4193, %v4191
    %v4196 = vadd.s32 %v4190, 4294967280
    %v4197 = vperm.slane %v4173, %v4196
    %vm4198 = vcmask 195712
    %v4199 = vsel %vm4198, %v4197, %v4195
    %v4200 = vadd.s32 %v4190, 4294967272
    %v4201 = vperm.slane %v4176, %v4200
    %vm4202 = vcmask 261312
    %v4203 = vsel %vm4202, %v4201, %v4199
    %v4204 = vperm.slane %v4179, %v4190
    %v4205 = vperm.slane %v4182, %v4192
    %v4206 = vsel %vm4194, %v4205, %v4204
    %v4207 = vperm.slane %v4185, %v4196
    %v4208 = vsel %vm4198, %v4207, %v4206
    %v4209 = vperm.slane %v4188, %v4200
    %v4210 = vsel %vm4202, %v4209, %v4208
    %vm4211 = vcmask 1041409
    %v4212 = vsel %vm4211, %v4210, %v4203
    %vm4214 = vcmask 254976
    %4215 = vst.msk [vmem:[#allocation2] sm:$0x3] %vm4214, %v4212
    // Predicated region
    $region30: #{ssm_forward.1} parent=1 // pred_check
      _
    $region31: #{ssm_forward.1} parent=1 // pred_check_branch
      %4217 = sbr.rel (0) target = $region33
    $region32: #{ssm_forward.1} parent=1 // pred_region
      %4219 = vsyncadd [#allocation3], 0
      %s4221 = sshll.u32 [#allocation2], 4
      %s4222 = int_to_ptr.vmem [resolvable:$true] %s4221
      %s4223 = sshll.u32 %s7, 4
      %s4224 = int_to_ptr.hbm [resolvable:$true] %s4223
      %4226 = dma.vmem_to_hbm [thread:$0]  %s4222, 32, %s4224, [#allocation3]
    $region33: #{ssm_forward.1} parent=1 // pred_fallthru
      _
    // Predicated region
    $region34: #{ssm_forward.1} parent=1 // pred_check
      _
    $region35: #{ssm_forward.1} parent=1 // pred_check_branch
      %4228 = sbr.rel (0) target = $region37
    $region36: #{ssm_forward.1} parent=1 // pred_region
      _
    $region37: #{ssm_forward.1} parent=1 // pred_fallthru
      _
    // Predicated region
    $region38: #{ssm_forward.1} parent=1 // pred_check
      _
    $region39: #{ssm_forward.1} parent=1 // pred_check_branch
      %4230 = sbr.rel (0) target = $region41
    $region40: #{ssm_forward.1} parent=1 // pred_region
      %4232 = dma.done [#allocation3], 32
    $region41: #{ssm_forward.1} parent=1 // pred_fallthru
      _
    // Predicated region
    $region42: #{ssm_forward.1} parent=1 // pred_check
      _
    $region43: #{ssm_forward.1} parent=1 // pred_check_branch
      %4234 = sbr.rel (0) target = $region45
    $region44: #{ssm_forward.1} parent=1 // pred_region
      _
    $region45: #{ssm_forward.1} parent=1 // pred_fallthru
      _
    %4235 = vsyncpa [#allocation3], 1

</llo_original>
